<compile_context>
chip_gen: v7x
topology: tpu7x:2x2x1
jax: 0.10.0
libtpu: 0.0.40
codegen_flags: <defaults>
</compile_context>

<pallas_src>
import jax
import jax.numpy as jnp
from jax.experimental import pallas as pl
from jax.experimental.pallas import tpu as pltpu

# concat dim 104 = n_sentences * 8 + 64  =>  n_sentences == 5
N_SENT = 5
D_BERT = 768
D_SENT_FLAT = N_SENT * D_BERT          # 3840
D_SENT_A = 4 * D_BERT                  # 3072 (sentences 0..3, lane-aligned split)
D_H1A = 4 * 32                         # 128
D_H1B = 32
D_S_A = 4 * 8                          # 32
D_S_B = 8
OUT_PAD = 128                          # lane-dense padded output width
VMEM_LIMIT_BYTES = 48 * 1024 * 1024    # <= v7x 64 MiB VMEM; ample on v5e/v6e


def colbert_head_kernel(
    sent_ref, full_ref,
    w1a_ref, b1a_ref, w1b_ref, b1b_ref,            # sentence layer 1 (split 0..3 | 4)
    w2a_ref, b2a_ref, w2b_ref, b2b_ref,            # sentence layer 2 (split 0..3 | 4)
    wf1_ref, bf1_ref, wf2_ref, bf2_ref,            # full-text head
    wc1a_ref, wc1b_ref, wc1f_ref, bc1_ref,         # classifier layer 1 (3-way fused concat)
    wc2_ref, bc2_ref, wc3_ref, bc3_ref,            # classifier layers 2, 3 (3 is lane-padded)
    out_ref,
):
    f32 = jnp.float32
    bf16 = jnp.bfloat16

    # Activations arrive in f32 and are cast to bf16 per tile here (no separate
    # host-side cast pass over the dominant HBM stream).  Slices are ref-level
    # and land on 128-lane boundaries.
    sent_a = sent_ref[:, pl.ds(0, D_SENT_A)].astype(bf16)        # (B, 3072) sent 0..3
    sent_b = sent_ref[:, pl.ds(D_SENT_A, D_BERT)].astype(bf16)   # (B, 768)  sent 4
    full = full_ref[...].astype(bf16)                            # (B, 768)

    # ---- per-sentence MLPs, block-diagonal and split so every matmul has
    #      N <= 128 (matters on v5e's 128-wide MXU; neutral on v6e/v7x):
    #      0..3: (B,3072)@(3072,128) -> ReLU -> (B,128)@(128,32) -> ReLU
    #      4   : (B, 768)@( 768, 32) -> ReLU -> (B, 32)@( 32, 8) -> ReLU
    h_a = jnp.maximum(
        jnp.dot(sent_a, w1a_ref[...], preferred_element_type=f32) + b1a_ref[...], 0.0)
    h_b = jnp.maximum(
        jnp.dot(sent_b, w1b_ref[...], preferred_element_type=f32) + b1b_ref[...], 0.0)
    s_a = jnp.maximum(
        jnp.dot(h_a.astype(bf16), w2a_ref[...], preferred_element_type=f32) + b2a_ref[...], 0.0)   # (B, 32)
    s_b = jnp.maximum(
        jnp.dot(h_b.astype(bf16), w2b_ref[...], preferred_element_type=f32) + b2b_ref[...], 0.0)   # (B, 8)

    # ---- full-text MLP: 768 -> 256 -> 64 (Dropout = identity)
    hf = jnp.maximum(
        jnp.dot(full, wf1_ref[...], preferred_element_type=f32) + bf1_ref[...], 0.0)
    ff = jnp.maximum(
        jnp.dot(hf.astype(bf16), wf2_ref[...], preferred_element_type=f32) + bf2_ref[...], 0.0)    # (B, 64)

    # ---- classifier; concat([s0..s4, ff]) @ wc1 is fused as a 3-way split:
    #      concat@wc1 == s_a@wc1[:32] + s_b@wc1[32:40] + ff@wc1[40:]
    h1 = (jnp.dot(s_a.astype(bf16), wc1a_ref[...], preferred_element_type=f32)
          + jnp.dot(s_b.astype(bf16), wc1b_ref[...], preferred_element_type=f32)
          + jnp.dot(ff.astype(bf16), wc1f_ref[...], preferred_element_type=f32)
          + bc1_ref[...])
    h1 = jnp.maximum(h1, 0.0)                                     # (B, 512)
    h2 = jnp.maximum(
        jnp.dot(h1.astype(bf16), wc2_ref[...], preferred_element_type=f32) + bc2_ref[...], 0.0)    # (B, 256)
    logits = jnp.dot(h2.astype(bf16), wc3_ref[...], preferred_element_type=f32) + bc3_ref[...]
    # lane-dense bf16 (B, 128) store; real logits live in [:, :2]
    out_ref[...] = logits.astype(out_ref.dtype)


def _round_up(x, m):
    return ((x + m - 1) // m) * m


def _block_diag(blocks, dtype):
    K = sum(b.shape[0] for b in blocks)
    N = sum(b.shape[1] for b in blocks)
    out = jnp.zeros((K, N), dtype)
    ko = no = 0
    for b in blocks:
        out = out.at[ko:ko + b.shape[0], no:no + b.shape[1]].set(b.astype(dtype))
        ko += b.shape[0]
        no += b.shape[1]
    return out


def pack_params(params):
    """Repack PyTorch-layout params into the kernel layout.

    Call ONCE (inference-constant); pass the result to colbert_head.
    """
    (ws1, bs1, ws2, bs2, wf1, bf1, wf2, bf2,
     wc1, bc1, wc2, bc2, wc3, bc3) = params
    bf16, f32 = jnp.bfloat16, jnp.float32

    # Sentence layer 1, split at the 128-lane boundary (sentences 0..3 | 4).
    w1a = _block_diag([ws1[i] for i in range(4)], bf16)                      # (3072, 128)
    b1a = jnp.concatenate([bs1[i] for i in range(4)], axis=-1).astype(f32)   # (1, 128)
    w1b = ws1[4].astype(bf16)                                                # (768, 32)
    b1b = bs1[4].astype(f32)                                                 # (1, 32)

    # Sentence layer 2, same split.
    w2a = _block_diag([ws2[i] for i in range(4)], bf16)                      # (128, 32)
    b2a = jnp.concatenate([bs2[i] for i in range(4)], axis=-1).astype(f32)   # (1, 32)
    w2b = ws2[4].astype(bf16)                                                # (32, 8)
    b2b = bs2[4].astype(f32)                                                 # (1, 8)

    # Classifier layer 1 split: rows 0..31 <- s0..s3, 32..39 <- s4, 40..103 <- full-text.
    wc1a = wc1[:D_S_A].astype(bf16)                                          # (32, 512)
    wc1b = wc1[D_S_A:D_S_A + D_S_B].astype(bf16)                             # (8, 512)
    wc1f = wc1[D_S_A + D_S_B:].astype(bf16)                                  # (64, 512)

    # Final layer lane-padded to 128 outputs for a dense vst.
    wc3p = jnp.zeros((256, OUT_PAD), bf16).at[:, :2].set(wc3.astype(bf16))
    bc3p = jnp.zeros((1, OUT_PAD), f32).at[:, :2].set(bc3.astype(f32))

    return (w1a, b1a, w1b, b1b, w2a, b2a, w2b, b2b,
            wf1.astype(bf16), bf1.astype(f32), wf2.astype(bf16), bf2.astype(f32),
            wc1a, wc1b, wc1f, bc1.astype(f32),
            wc2.astype(bf16), bc2.astype(f32), wc3p, bc3p)


def colbert_head(sent_pooled, full_pooled, packed, *, tm=512,
                 vmem_limit_bytes=VMEM_LIMIT_BYTES):
    """sent_pooled: (B, 5, 768) f32, full_pooled: (B, 768) f32, packed = pack_params(...).

    Returns (B, 2) f32 logits.  tm may be raised to 1024 (v7x) / 2048 (v5e, v6e
    with a larger vmem_limit_bytes) for very large batches.
    """
    B = sent_pooled.shape[0]

    # Free contiguous view to a lane-aligned (B, 3840) layout; no dtype cast
    # and no padding copy here (both would add an extra HBM pass).
    sent_flat = sent_pooled.reshape(B, D_SENT_FLAT)
    full = full_pooled

    # Batch tile: multiple of 8 sublanes, capped so moderate batches produce
    # >= 4 grid steps (megacore sharding on v7x + DMA/compute overlap).
    tm_eff = max(8, min(tm, _round_up(pl.cdiv(B, 4), 8)))
    grid = (pl.cdiv(B, tm_eff),)   # ragged last block handled by Pallas masking

    in_specs = [
        pl.BlockSpec((tm_eff, D_SENT_FLAT), lambda i: (i, 0)),
        pl.BlockSpec((tm_eff, D_BERT), lambda i: (i, 0)),
    ] + [pl.BlockSpec(p.shape, lambda i: (0, 0)) for p in packed]   # VMEM-resident weights

    out = pl.pallas_call(
        colbert_head_kernel,
        out_shape=jax.ShapeDtypeStruct((B, OUT_PAD), jnp.bfloat16),
        grid=grid,
        in_specs=in_specs,
        out_specs=pl.BlockSpec((tm_eff, OUT_PAD), lambda i: (i, 0)),
        compiler_params=pltpu.CompilerParams(
            dimension_semantics=("parallel",),
            vmem_limit_bytes=vmem_limit_bytes,
        ),
    )(sent_flat, full, *packed)

    return out[:B, :2].astype(jnp.float32)


def init_params(key):
    """Deterministic synthetic parameters matching the PyTorch layer shapes."""
    ks = list(jax.random.split(key, 16))

    def w(k, shape, fan_in):
        return (jax.random.normal(k, shape, jnp.float32) / jnp.sqrt(fan_in)).astype(jnp.float32)

    ws1 = w(ks[0], (N_SENT, D_BERT, 32), D_BERT)        # 5 x Linear(768, 32)
    bs1 = w(ks[1], (N_SENT, 1, 32), D_BERT)
    ws2 = w(ks[2], (N_SENT, 32, 8), 32)                 # 5 x Linear(32, 8)
    bs2 = w(ks[3], (N_SENT, 1, 8), 32)
    wf1 = w(ks[4], (D_BERT, 256), D_BERT)               # Linear(768, 256)
    bf1 = w(ks[5], (1, 256), D_BERT)
    wf2 = w(ks[6], (256, 64), 256)                      # Linear(256, 64)
    bf2 = w(ks[7], (1, 64), 256)
    wc1 = w(ks[8], (104, 512), 104)                     # Linear(104, 512)
    bc1 = w(ks[9], (1, 512), 104)
    wc2 = w(ks[10], (512, 256), 512)                    # Linear(512, 256)
    bc2 = w(ks[11], (1, 256), 512)
    wc3 = w(ks[12], (256, 2), 256)                      # Linear(256, 2)
    bc3 = w(ks[13], (1, 2), 256)
    return (ws1, bs1, ws2, bs2, wf1, bf1, wf2, bf2,
            wc1, bc1, wc2, bc2, wc3, bc3)


def reference(sent_pooled, full_pooled, params):
    """Pure-JAX reference of the same head (bf16 matmul operands, f32 accumulate)."""
    (ws1, bs1, ws2, bs2, wf1, bf1, wf2, bf2,
     wc1, bc1, wc2, bc2, wc3, bc3) = params

    def dot(a, b):
        return jnp.dot(a.astype(jnp.bfloat16), b.astype(jnp.bfloat16),
                       preferred_element_type=jnp.float32)

    feats = []
    for i in range(N_SENT):
        h = jnp.maximum(dot(sent_pooled[:, i, :], ws1[i]) + bs1[i], 0.0)
        feats.append(jnp.maximum(dot(h, ws2[i]) + bs2[i], 0.0))
    hf = jnp.maximum(dot(full_pooled, wf1) + bf1, 0.0)
    ff = jnp.maximum(dot(hf, wf2) + bf2, 0.0)
    concat = jnp.concatenate(feats + [ff], axis=-1)
    h1 = jnp.maximum(dot(concat, wc1) + bc1, 0.0)
    h2 = jnp.maximum(dot(h1, wc2) + bc2, 0.0)
    return dot(h2, wc3) + bc3


if __name__ == "__main__":
    key = jax.random.PRNGKey(0)
    k_sent, k_full, k_params = jax.random.split(key, 3)

    B = 2
    # Synthetic BERT pooler outputs (stand-in for frozen pretrained encoder).
    sent_pooled = jax.random.normal(k_sent, (B, N_SENT, D_BERT), jnp.float32)
    full_pooled = jax.random.normal(k_full, (B, D_BERT), jnp.float32)
    params = init_params(k_params)

    # Pack weights once (inference-constant), then run the jitted forward.
    packed = jax.tree_util.tree_map(jax.block_until_ready, pack_params(params))
    fwd = jax.jit(colbert_head)

    out = fwd(sent_pooled, full_pooled, packed)
    out = jax.block_until_ready(out)

    ref = reference(sent_pooled, full_pooled, params)
    assert out.shape == (B, 2), out.shape
    assert jnp.allclose(out, ref, atol=2e-2, rtol=2e-2), (out, ref)

    print("KERNEL_OK")
</pallas_src>

<mosaic_0001>
module attributes {stable_mosaic.version = 11 : i64} {
  func.func @colbert_head_kernel(%arg0: i32, %arg1: memref<8x3840xf32, #tpu.memory_space<vmem>>, %arg2: memref<8x768xf32, #tpu.memory_space<vmem>>, %arg3: memref<3072x128xbf16, #tpu.memory_space<vmem>>, %arg4: memref<1x128xf32, #tpu.memory_space<vmem>>, %arg5: memref<768x32xbf16, #tpu.memory_space<vmem>>, %arg6: memref<1x32xf32, #tpu.memory_space<vmem>>, %arg7: memref<128x32xbf16, #tpu.memory_space<vmem>>, %arg8: memref<1x32xf32, #tpu.memory_space<vmem>>, %arg9: memref<32x8xbf16, #tpu.memory_space<vmem>>, %arg10: memref<1x8xf32, #tpu.memory_space<vmem>>, %arg11: memref<768x256xbf16, #tpu.memory_space<vmem>>, %arg12: memref<1x256xf32, #tpu.memory_space<vmem>>, %arg13: memref<256x64xbf16, #tpu.memory_space<vmem>>, %arg14: memref<1x64xf32, #tpu.memory_space<vmem>>, %arg15: memref<32x512xbf16, #tpu.memory_space<vmem>>, %arg16: memref<8x512xbf16, #tpu.memory_space<vmem>>, %arg17: memref<64x512xbf16, #tpu.memory_space<vmem>>, %arg18: memref<1x512xf32, #tpu.memory_space<vmem>>, %arg19: memref<512x256xbf16, #tpu.memory_space<vmem>>, %arg20: memref<1x256xf32, #tpu.memory_space<vmem>>, %arg21: memref<256x128xbf16, #tpu.memory_space<vmem>>, %arg22: memref<1x128xf32, #tpu.memory_space<vmem>>, %arg23: memref<8x128xbf16, #tpu.memory_space<vmem>>) attributes {dimension_semantics = [#tpu.dimension_semantics<parallel>], iteration_bounds = array<i64: 1>, scalar_prefetch = 0 : i64, scratch_operands = 0 : i64, tpu.core_type = #tpu.core_type<tc>, window_params = [{transform_indices = @transform_0, window_bounds = array<i64: 8, 3840>}, {transform_indices = @transform_1, window_bounds = array<i64: 8, 768>}, {pipeline_mode = #tpu.pipeline_mode<synchronous>, transform_indices = @transform_2, window_bounds = array<i64: 3072, 128>}, {pipeline_mode = #tpu.pipeline_mode<synchronous>, transform_indices = @transform_3, window_bounds = array<i64: 1, 128>}, {pipeline_mode = #tpu.pipeline_mode<synchronous>, transform_indices = @transform_4, window_bounds = array<i64: 768, 32>}, {pipeline_mode = #tpu.pipeline_mode<synchronous>, transform_indices = @transform_5, window_bounds = array<i64: 1, 32>}, {pipeline_mode = #tpu.pipeline_mode<synchronous>, transform_indices = @transform_6, window_bounds = array<i64: 128, 32>}, {pipeline_mode = #tpu.pipeline_mode<synchronous>, transform_indices = @transform_7, window_bounds = array<i64: 1, 32>}, {pipeline_mode = #tpu.pipeline_mode<synchronous>, transform_indices = @transform_8, window_bounds = array<i64: 32, 8>}, {pipeline_mode = #tpu.pipeline_mode<synchronous>, transform_indices = @transform_9, window_bounds = array<i64: 1, 8>}, {pipeline_mode = #tpu.pipeline_mode<synchronous>, transform_indices = @transform_10, window_bounds = array<i64: 768, 256>}, {pipeline_mode = #tpu.pipeline_mode<synchronous>, transform_indices = @transform_11, window_bounds = array<i64: 1, 256>}, {pipeline_mode = #tpu.pipeline_mode<synchronous>, transform_indices = @transform_12, window_bounds = array<i64: 256, 64>}, {pipeline_mode = #tpu.pipeline_mode<synchronous>, transform_indices = @transform_13, window_bounds = array<i64: 1, 64>}, {pipeline_mode = #tpu.pipeline_mode<synchronous>, transform_indices = @transform_14, window_bounds = array<i64: 32, 512>}, {pipeline_mode = #tpu.pipeline_mode<synchronous>, transform_indices = @transform_15, window_bounds = array<i64: 8, 512>}, {pipeline_mode = #tpu.pipeline_mode<synchronous>, transform_indices = @transform_16, window_bounds = array<i64: 64, 512>}, {pipeline_mode = #tpu.pipeline_mode<synchronous>, transform_indices = @transform_17, window_bounds = array<i64: 1, 512>}, {pipeline_mode = #tpu.pipeline_mode<synchronous>, transform_indices = @transform_18, window_bounds = array<i64: 512, 256>}, {pipeline_mode = #tpu.pipeline_mode<synchronous>, transform_indices = @transform_19, window_bounds = array<i64: 1, 256>}, {pipeline_mode = #tpu.pipeline_mode<synchronous>, transform_indices = @transform_20, window_bounds = array<i64: 256, 128>}, {pipeline_mode = #tpu.pipeline_mode<synchronous>, transform_indices = @transform_21, window_bounds = array<i64: 1, 128>}, {transform_indices = @transform_22, window_bounds = array<i64: 8, 128>}]} {
    %c0 = arith.constant 0 : index
    %c0_0 = arith.constant 0 : index
    %0 = vector.load %arg1[%c0, %c0_0] : memref<8x3840xf32, #tpu.memory_space<vmem>>, vector<8x3072xf32>
    %1 = arith.truncf %0 : vector<8x3072xf32> to vector<8x3072xbf16>
    %c0_1 = arith.constant 0 : index
    %c3072 = arith.constant 3072 : index
    %2 = vector.load %arg1[%c0_1, %c3072] : memref<8x3840xf32, #tpu.memory_space<vmem>>, vector<8x768xf32>
    %3 = arith.truncf %2 : vector<8x768xf32> to vector<8x768xbf16>
    %c0_2 = arith.constant 0 : index
    %c0_3 = arith.constant 0 : index
    %4 = vector.load %arg2[%c0_2, %c0_3] : memref<8x768xf32, #tpu.memory_space<vmem>>, vector<8x768xf32>
    %5 = arith.truncf %4 : vector<8x768xf32> to vector<8x768xbf16>
    %c0_4 = arith.constant 0 : index
    %c0_5 = arith.constant 0 : index
    %6 = vector.load %arg3[%c0_4, %c0_5] : memref<3072x128xbf16, #tpu.memory_space<vmem>>, vector<3072x128xbf16>
    %cst = arith.constant dense<0.000000e+00> : vector<8x128xf32>
    %7 = tpu.matmul %1, %6, %cst {dimension_numbers = #tpu.dot_dimension_numbers<[1], [0], [0], [1], [0, 0, 1, 1], [], []>} : vector<8x3072xbf16>, vector<3072x128xbf16>, vector<8x128xf32> -> vector<8x128xf32>
    %c0_6 = arith.constant 0 : index
    %c0_7 = arith.constant 0 : index
    %8 = vector.load %arg4[%c0_6, %c0_7] : memref<1x128xf32, #tpu.memory_space<vmem>>, vector<1x128xf32>
    %9 = vector.broadcast %8 : vector<1x128xf32> to vector<8x128xf32>
    %10 = arith.addf %7, %9 : vector<8x128xf32>
    %cst_8 = arith.constant 0.000000e+00 : f32
    %11 = vector.broadcast %cst_8 : f32 to vector<8x128xf32>
    %12 = arith.maximumf %10, %11 : vector<8x128xf32>
    %c0_9 = arith.constant 0 : index
    %c0_10 = arith.constant 0 : index
    %13 = vector.load %arg5[%c0_9, %c0_10] : memref<768x32xbf16, #tpu.memory_space<vmem>>, vector<768x32xbf16>
    %cst_11 = arith.constant dense<0.000000e+00> : vector<8x32xf32>
    %14 = tpu.matmul %3, %13, %cst_11 {dimension_numbers = #tpu.dot_dimension_numbers<[1], [0], [0], [1], [0, 0, 1, 1], [], []>} : vector<8x768xbf16>, vector<768x32xbf16>, vector<8x32xf32> -> vector<8x32xf32>
    %c0_12 = arith.constant 0 : index
    %c0_13 = arith.constant 0 : index
    %15 = vector.load %arg6[%c0_12, %c0_13] : memref<1x32xf32, #tpu.memory_space<vmem>>, vector<1x32xf32>
    %16 = vector.broadcast %15 : vector<1x32xf32> to vector<8x32xf32>
    %17 = arith.addf %14, %16 : vector<8x32xf32>
    %cst_14 = arith.constant 0.000000e+00 : f32
    %18 = vector.broadcast %cst_14 : f32 to vector<8x32xf32>
    %19 = arith.maximumf %17, %18 : vector<8x32xf32>
    %20 = arith.truncf %12 : vector<8x128xf32> to vector<8x128xbf16>
    %c0_15 = arith.constant 0 : index
    %c0_16 = arith.constant 0 : index
    %21 = vector.load %arg7[%c0_15, %c0_16] : memref<128x32xbf16, #tpu.memory_space<vmem>>, vector<128x32xbf16>
    %cst_17 = arith.constant dense<0.000000e+00> : vector<8x32xf32>
    %22 = tpu.matmul %20, %21, %cst_17 {dimension_numbers = #tpu.dot_dimension_numbers<[1], [0], [0], [1], [0, 0, 1, 1], [], []>} : vector<8x128xbf16>, vector<128x32xbf16>, vector<8x32xf32> -> vector<8x32xf32>
    %c0_18 = arith.constant 0 : index
    %c0_19 = arith.constant 0 : index
    %23 = vector.load %arg8[%c0_18, %c0_19] : memref<1x32xf32, #tpu.memory_space<vmem>>, vector<1x32xf32>
    %24 = vector.broadcast %23 : vector<1x32xf32> to vector<8x32xf32>
    %25 = arith.addf %22, %24 : vector<8x32xf32>
    %cst_20 = arith.constant 0.000000e+00 : f32
    %26 = vector.broadcast %cst_20 : f32 to vector<8x32xf32>
    %27 = arith.maximumf %25, %26 : vector<8x32xf32>
    %28 = arith.truncf %19 : vector<8x32xf32> to vector<8x32xbf16>
    %c0_21 = arith.constant 0 : index
    %c0_22 = arith.constant 0 : index
    %29 = vector.load %arg9[%c0_21, %c0_22] : memref<32x8xbf16, #tpu.memory_space<vmem>>, vector<32x8xbf16>
    %cst_23 = arith.constant dense<0.000000e+00> : vector<8x8xf32>
    %30 = tpu.matmul %28, %29, %cst_23 {dimension_numbers = #tpu.dot_dimension_numbers<[1], [0], [0], [1], [0, 0, 1, 1], [], []>} : vector<8x32xbf16>, vector<32x8xbf16>, vector<8x8xf32> -> vector<8x8xf32>
    %c0_24 = arith.constant 0 : index
    %c0_25 = arith.constant 0 : index
    %31 = vector.load %arg10[%c0_24, %c0_25] : memref<1x8xf32, #tpu.memory_space<vmem>>, vector<1x8xf32>
    %32 = vector.broadcast %31 : vector<1x8xf32> to vector<8x8xf32>
    %33 = arith.addf %30, %32 : vector<8x8xf32>
    %cst_26 = arith.constant 0.000000e+00 : f32
    %34 = vector.broadcast %cst_26 : f32 to vector<8x8xf32>
    %35 = arith.maximumf %33, %34 : vector<8x8xf32>
    %c0_27 = arith.constant 0 : index
    %c0_28 = arith.constant 0 : index
    %36 = vector.load %arg11[%c0_27, %c0_28] : memref<768x256xbf16, #tpu.memory_space<vmem>>, vector<768x256xbf16>
    %cst_29 = arith.constant dense<0.000000e+00> : vector<8x256xf32>
    %37 = tpu.matmul %5, %36, %cst_29 {dimension_numbers = #tpu.dot_dimension_numbers<[1], [0], [0], [1], [0, 0, 1, 1], [], []>} : vector<8x768xbf16>, vector<768x256xbf16>, vector<8x256xf32> -> vector<8x256xf32>
    %c0_30 = arith.constant 0 : index
    %c0_31 = arith.constant 0 : index
    %38 = vector.load %arg12[%c0_30, %c0_31] : memref<1x256xf32, #tpu.memory_space<vmem>>, vector<1x256xf32>
    %39 = vector.broadcast %38 : vector<1x256xf32> to vector<8x256xf32>
    %40 = arith.addf %37, %39 : vector<8x256xf32>
    %cst_32 = arith.constant 0.000000e+00 : f32
    %41 = vector.broadcast %cst_32 : f32 to vector<8x256xf32>
    %42 = arith.maximumf %40, %41 : vector<8x256xf32>
    %43 = arith.truncf %42 : vector<8x256xf32> to vector<8x256xbf16>
    %c0_33 = arith.constant 0 : index
    %c0_34 = arith.constant 0 : index
    %44 = vector.load %arg13[%c0_33, %c0_34] : memref<256x64xbf16, #tpu.memory_space<vmem>>, vector<256x64xbf16>
    %cst_35 = arith.constant dense<0.000000e+00> : vector<8x64xf32>
    %45 = tpu.matmul %43, %44, %cst_35 {dimension_numbers = #tpu.dot_dimension_numbers<[1], [0], [0], [1], [0, 0, 1, 1], [], []>} : vector<8x256xbf16>, vector<256x64xbf16>, vector<8x64xf32> -> vector<8x64xf32>
    %c0_36 = arith.constant 0 : index
    %c0_37 = arith.constant 0 : index
    %46 = vector.load %arg14[%c0_36, %c0_37] : memref<1x64xf32, #tpu.memory_space<vmem>>, vector<1x64xf32>
    %47 = vector.broadcast %46 : vector<1x64xf32> to vector<8x64xf32>
    %48 = arith.addf %45, %47 : vector<8x64xf32>
    %cst_38 = arith.constant 0.000000e+00 : f32
    %49 = vector.broadcast %cst_38 : f32 to vector<8x64xf32>
    %50 = arith.maximumf %48, %49 : vector<8x64xf32>
    %51 = arith.truncf %27 : vector<8x32xf32> to vector<8x32xbf16>
    %c0_39 = arith.constant 0 : index
    %c0_40 = arith.constant 0 : index
    %52 = vector.load %arg15[%c0_39, %c0_40] : memref<32x512xbf16, #tpu.memory_space<vmem>>, vector<32x512xbf16>
    %cst_41 = arith.constant dense<0.000000e+00> : vector<8x512xf32>
    %53 = tpu.matmul %51, %52, %cst_41 {dimension_numbers = #tpu.dot_dimension_numbers<[1], [0], [0], [1], [0, 0, 1, 1], [], []>} : vector<8x32xbf16>, vector<32x512xbf16>, vector<8x512xf32> -> vector<8x512xf32>
    %54 = arith.truncf %35 : vector<8x8xf32> to vector<8x8xbf16>
    %c0_42 = arith.constant 0 : index
    %c0_43 = arith.constant 0 : index
    %55 = vector.load %arg16[%c0_42, %c0_43] : memref<8x512xbf16, #tpu.memory_space<vmem>>, vector<8x512xbf16>
    %cst_44 = arith.constant dense<0.000000e+00> : vector<8x512xf32>
    %56 = tpu.matmul %54, %55, %cst_44 {dimension_numbers = #tpu.dot_dimension_numbers<[1], [0], [0], [1], [0, 0, 1, 1], [], []>} : vector<8x8xbf16>, vector<8x512xbf16>, vector<8x512xf32> -> vector<8x512xf32>
    %57 = arith.addf %53, %56 : vector<8x512xf32>
    %58 = arith.truncf %50 : vector<8x64xf32> to vector<8x64xbf16>
    %c0_45 = arith.constant 0 : index
    %c0_46 = arith.constant 0 : index
    %59 = vector.load %arg17[%c0_45, %c0_46] : memref<64x512xbf16, #tpu.memory_space<vmem>>, vector<64x512xbf16>
    %cst_47 = arith.constant dense<0.000000e+00> : vector<8x512xf32>
    %60 = tpu.matmul %58, %59, %cst_47 {dimension_numbers = #tpu.dot_dimension_numbers<[1], [0], [0], [1], [0, 0, 1, 1], [], []>} : vector<8x64xbf16>, vector<64x512xbf16>, vector<8x512xf32> -> vector<8x512xf32>
    %61 = arith.addf %57, %60 : vector<8x512xf32>
    %c0_48 = arith.constant 0 : index
    %c0_49 = arith.constant 0 : index
    %62 = vector.load %arg18[%c0_48, %c0_49] : memref<1x512xf32, #tpu.memory_space<vmem>>, vector<1x512xf32>
    %63 = vector.broadcast %62 : vector<1x512xf32> to vector<8x512xf32>
    %64 = arith.addf %61, %63 : vector<8x512xf32>
    %cst_50 = arith.constant 0.000000e+00 : f32
    %65 = vector.broadcast %cst_50 : f32 to vector<8x512xf32>
    %66 = arith.maximumf %64, %65 : vector<8x512xf32>
    %67 = arith.truncf %66 : vector<8x512xf32> to vector<8x512xbf16>
    %c0_51 = arith.constant 0 : index
    %c0_52 = arith.constant 0 : index
    %68 = vector.load %arg19[%c0_51, %c0_52] : memref<512x256xbf16, #tpu.memory_space<vmem>>, vector<512x256xbf16>
    %cst_53 = arith.constant dense<0.000000e+00> : vector<8x256xf32>
    %69 = tpu.matmul %67, %68, %cst_53 {dimension_numbers = #tpu.dot_dimension_numbers<[1], [0], [0], [1], [0, 0, 1, 1], [], []>} : vector<8x512xbf16>, vector<512x256xbf16>, vector<8x256xf32> -> vector<8x256xf32>
    %c0_54 = arith.constant 0 : index
    %c0_55 = arith.constant 0 : index
    %70 = vector.load %arg20[%c0_54, %c0_55] : memref<1x256xf32, #tpu.memory_space<vmem>>, vector<1x256xf32>
    %71 = vector.broadcast %70 : vector<1x256xf32> to vector<8x256xf32>
    %72 = arith.addf %69, %71 : vector<8x256xf32>
    %cst_56 = arith.constant 0.000000e+00 : f32
    %73 = vector.broadcast %cst_56 : f32 to vector<8x256xf32>
    %74 = arith.maximumf %72, %73 : vector<8x256xf32>
    %75 = arith.truncf %74 : vector<8x256xf32> to vector<8x256xbf16>
    %c0_57 = arith.constant 0 : index
    %c0_58 = arith.constant 0 : index
    %76 = vector.load %arg21[%c0_57, %c0_58] : memref<256x128xbf16, #tpu.memory_space<vmem>>, vector<256x128xbf16>
    %cst_59 = arith.constant dense<0.000000e+00> : vector<8x128xf32>
    %77 = tpu.matmul %75, %76, %cst_59 {dimension_numbers = #tpu.dot_dimension_numbers<[1], [0], [0], [1], [0, 0, 1, 1], [], []>} : vector<8x256xbf16>, vector<256x128xbf16>, vector<8x128xf32> -> vector<8x128xf32>
    %c0_60 = arith.constant 0 : index
    %c0_61 = arith.constant 0 : index
    %78 = vector.load %arg22[%c0_60, %c0_61] : memref<1x128xf32, #tpu.memory_space<vmem>>, vector<1x128xf32>
    %79 = vector.broadcast %78 : vector<1x128xf32> to vector<8x128xf32>
    %80 = arith.addf %77, %79 : vector<8x128xf32>
    %81 = arith.truncf %80 : vector<8x128xf32> to vector<8x128xbf16>
    %c0_62 = arith.constant 0 : index
    %c0_63 = arith.constant 0 : index
    %82 = vector.load %arg23[%c0_62, %c0_63] : memref<8x128xbf16, #tpu.memory_space<vmem>>, vector<8x128xbf16>
    tpu.vector_store %arg23[%c0_62, %c0_63], %81 {strides = array<i32>} : memref<8x128xbf16, #tpu.memory_space<vmem>>, vector<8x128xbf16>,
    return
  }
  func.func @transform_0(%arg0: i32) -> (i32, i32) {
    %c0_i32 = arith.constant 0 : i32
    %c0_i32_0 = arith.constant 0 : i32
    return %arg0, %c0_i32 : i32, i32
  }
  func.func @transform_1(%arg0: i32) -> (i32, i32) {
    %c0_i32 = arith.constant 0 : i32
    %c0_i32_0 = arith.constant 0 : i32
    return %arg0, %c0_i32 : i32, i32
  }
  func.func @transform_2(%arg0: i32) -> (i32, i32) {
    %c0_i32 = arith.constant 0 : i32
    %c0_i32_0 = arith.constant 0 : i32
    %c0_i32_1 = arith.constant 0 : i32
    return %c0_i32, %c0_i32_0 : i32, i32
  }
  func.func @transform_3(%arg0: i32) -> (i32, i32) {
    %c0_i32 = arith.constant 0 : i32
    %c0_i32_0 = arith.constant 0 : i32
    %c0_i32_1 = arith.constant 0 : i32
    return %c0_i32, %c0_i32_0 : i32, i32
  }
  func.func @transform_4(%arg0: i32) -> (i32, i32) {
    %c0_i32 = arith.constant 0 : i32
    %c0_i32_0 = arith.constant 0 : i32
    %c0_i32_1 = arith.constant 0 : i32
    return %c0_i32, %c0_i32_0 : i32, i32
  }
  func.func @transform_5(%arg0: i32) -> (i32, i32) {
    %c0_i32 = arith.constant 0 : i32
    %c0_i32_0 = arith.constant 0 : i32
    %c0_i32_1 = arith.constant 0 : i32
    return %c0_i32, %c0_i32_0 : i32, i32
  }
  func.func @transform_6(%arg0: i32) -> (i32, i32) {
    %c0_i32 = arith.constant 0 : i32
    %c0_i32_0 = arith.constant 0 : i32
    %c0_i32_1 = arith.constant 0 : i32
    return %c0_i32, %c0_i32_0 : i32, i32
  }
  func.func @transform_7(%arg0: i32) -> (i32, i32) {
    %c0_i32 = arith.constant 0 : i32
    %c0_i32_0 = arith.constant 0 : i32
    %c0_i32_1 = arith.constant 0 : i32
    return %c0_i32, %c0_i32_0 : i32, i32
  }
  func.func @transform_8(%arg0: i32) -> (i32, i32) {
    %c0_i32 = arith.constant 0 : i32
    %c0_i32_0 = arith.constant 0 : i32
    %c0_i32_1 = arith.constant 0 : i32
    return %c0_i32, %c0_i32_0 : i32, i32
  }
  func.func @transform_9(%arg0: i32) -> (i32, i32) {
    %c0_i32 = arith.constant 0 : i32
    %c0_i32_0 = arith.constant 0 : i32
    %c0_i32_1 = arith.constant 0 : i32
    return %c0_i32, %c0_i32_0 : i32, i32
  }
  func.func @transform_10(%arg0: i32) -> (i32, i32) {
    %c0_i32 = arith.constant 0 : i32
    %c0_i32_0 = arith.constant 0 : i32
    %c0_i32_1 = arith.constant 0 : i32
    return %c0_i32, %c0_i32_0 : i32, i32
  }
  func.func @transform_11(%arg0: i32) -> (i32, i32) {
    %c0_i32 = arith.constant 0 : i32
    %c0_i32_0 = arith.constant 0 : i32
    %c0_i32_1 = arith.constant 0 : i32
    return %c0_i32, %c0_i32_0 : i32, i32
  }
  func.func @transform_12(%arg0: i32) -> (i32, i32) {
    %c0_i32 = arith.constant 0 : i32
    %c0_i32_0 = arith.constant 0 : i32
    %c0_i32_1 = arith.constant 0 : i32
    return %c0_i32, %c0_i32_0 : i32, i32
  }
  func.func @transform_13(%arg0: i32) -> (i32, i32) {
    %c0_i32 = arith.constant 0 : i32
    %c0_i32_0 = arith.constant 0 : i32
    %c0_i32_1 = arith.constant 0 : i32
    return %c0_i32, %c0_i32_0 : i32, i32
  }
  func.func @transform_14(%arg0: i32) -> (i32, i32) {
    %c0_i32 = arith.constant 0 : i32
    %c0_i32_0 = arith.constant 0 : i32
    %c0_i32_1 = arith.constant 0 : i32
    return %c0_i32, %c0_i32_0 : i32, i32
  }
  func.func @transform_15(%arg0: i32) -> (i32, i32) {
    %c0_i32 = arith.constant 0 : i32
    %c0_i32_0 = arith.constant 0 : i32
    %c0_i32_1 = arith.constant 0 : i32
    return %c0_i32, %c0_i32_0 : i32, i32
  }
  func.func @transform_16(%arg0: i32) -> (i32, i32) {
    %c0_i32 = arith.constant 0 : i32
    %c0_i32_0 = arith.constant 0 : i32
    %c0_i32_1 = arith.constant 0 : i32
    return %c0_i32, %c0_i32_0 : i32, i32
  }
  func.func @transform_17(%arg0: i32) -> (i32, i32) {
    %c0_i32 = arith.constant 0 : i32
    %c0_i32_0 = arith.constant 0 : i32
    %c0_i32_1 = arith.constant 0 : i32
    return %c0_i32, %c0_i32_0 : i32, i32
  }
  func.func @transform_18(%arg0: i32) -> (i32, i32) {
    %c0_i32 = arith.constant 0 : i32
    %c0_i32_0 = arith.constant 0 : i32
    %c0_i32_1 = arith.constant 0 : i32
    return %c0_i32, %c0_i32_0 : i32, i32
  }
  func.func @transform_19(%arg0: i32) -> (i32, i32) {
    %c0_i32 = arith.constant 0 : i32
    %c0_i32_0 = arith.constant 0 : i32
    %c0_i32_1 = arith.constant 0 : i32
    return %c0_i32, %c0_i32_0 : i32, i32
  }
  func.func @transform_20(%arg0: i32) -> (i32, i32) {
    %c0_i32 = arith.constant 0 : i32
    %c0_i32_0 = arith.constant 0 : i32
    %c0_i32_1 = arith.constant 0 : i32
    return %c0_i32, %c0_i32_0 : i32, i32
  }
  func.func @transform_21(%arg0: i32) -> (i32, i32) {
    %c0_i32 = arith.constant 0 : i32
    %c0_i32_0 = arith.constant 0 : i32
    %c0_i32_1 = arith.constant 0 : i32
    return %c0_i32, %c0_i32_0 : i32, i32
  }
  func.func @transform_22(%arg0: i32) -> (i32, i32) {
    %c0_i32 = arith.constant 0 : i32
    %c0_i32_0 = arith.constant 0 : i32
    return %arg0, %c0_i32 : i32, i32
  }
}

</mosaic_0001>

<llo_original>
// kernel: colbert_head.1
$region0: #{colbert_head.1}
  #allocation0 [shape = 'u32[]', space=smem, size = 0x4, offset = 0x4, fixed_abs, tag = 'smem constant byte address 0x4 - core index']
  #allocation1 [shape = 'u32[144,128]{1,0:T(1,128)}', space=vmem, size = 0x12000, scoped, tag = 'internal scratch']
  %s0 = inlined_call_operand.hbm [shape: f32[2,3840], index: 0, kind: input, shape index: {}]
  %s1 = inlined_call_operand.vmem [shape: f32[2,768], index: 1, kind: input, shape index: {}]
  %s2 = inlined_call_operand.hbm [shape: bf16[3072,128], index: 2, kind: input, shape index: {}]
  %s3 = inlined_call_operand.vmem [shape: f32[1,128], index: 3, kind: input, shape index: {}]
  %s4 = inlined_call_operand.vmem [shape: bf16[768,32], index: 4, kind: input, shape index: {}]
  %s5 = inlined_call_operand.vmem [shape: f32[1,32], index: 5, kind: input, shape index: {}]
  %s6 = inlined_call_operand.vmem [shape: bf16[128,32], index: 6, kind: input, shape index: {}]
  %s7 = inlined_call_operand.vmem [shape: f32[1,32], index: 7, kind: input, shape index: {}]
  %s8 = inlined_call_operand.vmem [shape: bf16[32,8], index: 8, kind: input, shape index: {}]
  %s9 = inlined_call_operand.vmem [shape: f32[1,8], index: 9, kind: input, shape index: {}]
  %s10 = inlined_call_operand.vmem [shape: bf16[768,256], index: 10, kind: input, shape index: {}]
  %s11 = inlined_call_operand.vmem [shape: f32[1,256], index: 11, kind: input, shape index: {}]
  %s12 = inlined_call_operand.vmem [shape: bf16[256,64], index: 12, kind: input, shape index: {}]
  %s13 = inlined_call_operand.vmem [shape: f32[1,64], index: 13, kind: input, shape index: {}]
  %s14 = inlined_call_operand.hbm [shape: bf16[32,512], index: 14, kind: input, shape index: {}]
  %s15 = inlined_call_operand.vmem [shape: bf16[8,512], index: 15, kind: input, shape index: {}]
  %s16 = inlined_call_operand.hbm [shape: bf16[64,512], index: 16, kind: input, shape index: {}]
  %s17 = inlined_call_operand.vmem [shape: f32[1,512], index: 17, kind: input, shape index: {}]
  %s18 = inlined_call_operand.hbm [shape: bf16[512,256], index: 18, kind: input, shape index: {}]
  %s19 = inlined_call_operand.vmem [shape: f32[1,256], index: 19, kind: input, shape index: {}]
  %s20 = inlined_call_operand.hbm [shape: bf16[256,128], index: 20, kind: input, shape index: {}]
  %s21 = inlined_call_operand.vmem [shape: f32[1,128], index: 21, kind: input, shape index: {}]
  %s22 = inlined_call_operand.vmem [shape: bf16[2,128], index: 22, kind: output, shape index: {}]
  %s23 = sld [smem:[#allocation0]]
  $region152: #{colbert_head.1} parent=0
    _
  %s25 = ssub.s32 1, %s23
  %s26 = scalar_select 0, %s25, %s23
  $region1: #{colbert_head.1} parent=0
    #allocation2 [shape = 'u8[122880]{0}', space=vmem, size = 0x1e000, scoped, tag = 'input window, operand 0, single buffered']
    #allocation3 [shape = 's32[1]{0}', space=sflag, size = 0x4, scoped, tag = 'scoped memory for colbert_head.1']
    #allocation4 [shape = 'u8[786432]{0}', space=vmem, size = 0xc0000, scoped, tag = 'input window, operand 2, single buffered']
    #allocation5 [shape = 's32[1]{0}', space=sflag, size = 0x4, scoped, tag = 'scoped memory for colbert_head.1']
    #allocation6 [shape = 'u8[32768]{0}', space=vmem, size = 0x8000, scoped, tag = 'input window, operand 14, single buffered']
    #allocation7 [shape = 'u8[65536]{0}', space=vmem, size = 0x10000, scoped, tag = 'input window, operand 16, single buffered']
    #allocation8 [shape = 's32[1]{0}', space=sflag, size = 0x4, scoped, tag = 'scoped memory for colbert_head.1']
    #allocation9 [shape = 'u8[262144]{0}', space=vmem, size = 0x40000, scoped, tag = 'input window, operand 18, single buffered']
    #allocation10 [shape = 'u8[65536]{0}', space=vmem, size = 0x10000, scoped, tag = 'input window, operand 20, single buffered']
    #allocation11 [shape = 's32[1]{0}', space=sflag, size = 0x4, scoped, tag = 'scoped memory for colbert_head.1']
    #allocation12 [shape = 'u8[2048]{0}', space=vmem, size = 0x800, scoped, tag = 'output window, operand 0, single buffered']
    %27 = vsyncpa [#allocation3], 0
    %28 = vsyncpa [#allocation5], 0
    %29 = vsyncpa [#allocation8], 0
    %30 = vsyncpa [#allocation11], 0
    // Predicated region
    $region2: #{colbert_head.1} parent=1 // pred_check
      _
    $region3: #{colbert_head.1} parent=1 // pred_check_branch
      %32 = sbr.rel (0) target = $region5
    $region4: #{colbert_head.1} parent=1 // pred_region
      %s34 = ssub.s32 3840, 960
      %35 = vsyncadd [#allocation3], %s34
      %s36 = sshll.u32 [#allocation2], 4
      %s37 = int_to_ptr.vmem [resolvable:$true] %s36
      %42 = dma.hbm_to_vmem [thread:$0]  %s0, 960, %s37, [#allocation3], 960, 960, 60
    $region5: #{colbert_head.1} parent=1 // pred_fallthru
      _
    // Predicated region
    $region6: #{colbert_head.1} parent=1 // pred_check
      _
    $region7: #{colbert_head.1} parent=1 // pred_check_branch
      %44 = sbr.rel (0) target = $region9
    $region8: #{colbert_head.1} parent=1 // pred_region
      _
    $region9: #{colbert_head.1} parent=1 // pred_fallthru
      _
    // Predicated region
    $region10: #{colbert_head.1} parent=1 // pred_check
      _
    $region11: #{colbert_head.1} parent=1 // pred_check_branch
      %46 = sbr.rel (0) target = $region13
    $region12: #{colbert_head.1} parent=1 // pred_region
      %s48 = ssub.s32 24576, 24576
      %49 = vsyncadd [#allocation5], %s48
      %s50 = sshll.u32 [#allocation4], 4
      %s51 = int_to_ptr.vmem [resolvable:$true] %s50
      %56 = dma.hbm_to_vmem [thread:$0]  %s2, 24576, %s51, [#allocation5], 64, 64, 4
    $region13: #{colbert_head.1} parent=1 // pred_fallthru
      _
    // Predicated region
    $region14: #{colbert_head.1} parent=1 // pred_check
      _
    $region15: #{colbert_head.1} parent=1 // pred_check_branch
      %58 = sbr.rel (0) target = $region17
    $region16: #{colbert_head.1} parent=1 // pred_region
      _
    $region17: #{colbert_head.1} parent=1 // pred_fallthru
      _
    // Predicated region
    $region18: #{colbert_head.1} parent=1 // pred_check
      _
    $region19: #{colbert_head.1} parent=1 // pred_check_branch
      %60 = sbr.rel (0) target = $region21
    $region20: #{colbert_head.1} parent=1 // pred_region
      _
    $region21: #{colbert_head.1} parent=1 // pred_fallthru
      _
    // Predicated region
    $region22: #{colbert_head.1} parent=1 // pred_check
      _
    $region23: #{colbert_head.1} parent=1 // pred_check_branch
      %62 = sbr.rel (0) target = $region25
    $region24: #{colbert_head.1} parent=1 // pred_region
      _
    $region25: #{colbert_head.1} parent=1 // pred_fallthru
      _
    // Predicated region
    $region26: #{colbert_head.1} parent=1 // pred_check
      _
    $region27: #{colbert_head.1} parent=1 // pred_check_branch
      %64 = sbr.rel (0) target = $region29
    $region28: #{colbert_head.1} parent=1 // pred_region
      _
    $region29: #{colbert_head.1} parent=1 // pred_fallthru
      _
    // Predicated region
    $region30: #{colbert_head.1} parent=1 // pred_check
      _
    $region31: #{colbert_head.1} parent=1 // pred_check_branch
      %66 = sbr.rel (0) target = $region33
    $region32: #{colbert_head.1} parent=1 // pred_region
      _
    $region33: #{colbert_head.1} parent=1 // pred_fallthru
      _
    // Predicated region
    $region34: #{colbert_head.1} parent=1 // pred_check
      _
    $region35: #{colbert_head.1} parent=1 // pred_check_branch
      %68 = sbr.rel (0) target = $region37
    $region36: #{colbert_head.1} parent=1 // pred_region
      _
    $region37: #{colbert_head.1} parent=1 // pred_fallthru
      _
    // Predicated region
    $region38: #{colbert_head.1} parent=1 // pred_check
      _
    $region39: #{colbert_head.1} parent=1 // pred_check_branch
      %70 = sbr.rel (0) target = $region41
    $region40: #{colbert_head.1} parent=1 // pred_region
      _
    $region41: #{colbert_head.1} parent=1 // pred_fallthru
      _
    // Predicated region
    $region42: #{colbert_head.1} parent=1 // pred_check
      _
    $region43: #{colbert_head.1} parent=1 // pred_check_branch
      %72 = sbr.rel (0) target = $region45
    $region44: #{colbert_head.1} parent=1 // pred_region
      _
    $region45: #{colbert_head.1} parent=1 // pred_fallthru
      _
    // Predicated region
    $region46: #{colbert_head.1} parent=1 // pred_check
      _
    $region47: #{colbert_head.1} parent=1 // pred_check_branch
      %74 = sbr.rel (0) target = $region49
    $region48: #{colbert_head.1} parent=1 // pred_region
      _
    $region49: #{colbert_head.1} parent=1 // pred_fallthru
      _
    // Predicated region
    $region50: #{colbert_head.1} parent=1 // pred_check
      _
    $region51: #{colbert_head.1} parent=1 // pred_check_branch
      %76 = sbr.rel (0) target = $region53
    $region52: #{colbert_head.1} parent=1 // pred_region
      _
    $region53: #{colbert_head.1} parent=1 // pred_fallthru
      _
    // Predicated region
    $region54: #{colbert_head.1} parent=1 // pred_check
      _
    $region55: #{colbert_head.1} parent=1 // pred_check_branch
      %78 = sbr.rel (0) target = $region57
    $region56: #{colbert_head.1} parent=1 // pred_region
      _
    $region57: #{colbert_head.1} parent=1 // pred_fallthru
      _
    // Predicated region
    $region58: #{colbert_head.1} parent=1 // pred_check
      _
    $region59: #{colbert_head.1} parent=1 // pred_check_branch
      %80 = sbr.rel (0) target = $region61
    $region60: #{colbert_head.1} parent=1 // pred_region
      %s82 = ssub.s32 1024, 1024
      %83 = vsyncadd [#allocation5], %s82
      %s84 = sshll.u32 [#allocation6], 4
      %s85 = int_to_ptr.vmem [resolvable:$true] %s84
      %90 = dma.hbm_to_vmem [thread:$0]  %s14, 1024, %s85, [#allocation5], 256, 256, 16
    $region61: #{colbert_head.1} parent=1 // pred_fallthru
      _
    // Predicated region
    $region62: #{colbert_head.1} parent=1 // pred_check
      _
    $region63: #{colbert_head.1} parent=1 // pred_check_branch
      %92 = sbr.rel (0) target = $region65
    $region64: #{colbert_head.1} parent=1 // pred_region
      _
    $region65: #{colbert_head.1} parent=1 // pred_fallthru
      _
    // Predicated region
    $region66: #{colbert_head.1} parent=1 // pred_check
      _
    $region67: #{colbert_head.1} parent=1 // pred_check_branch
      %94 = sbr.rel (0) target = $region69
    $region68: #{colbert_head.1} parent=1 // pred_region
      %s96 = ssub.s32 2048, 2048
      %97 = vsyncadd [#allocation8], %s96
      %s98 = sshll.u32 [#allocation7], 4
      %s99 = int_to_ptr.vmem [resolvable:$true] %s98
      %104 = dma.hbm_to_vmem [thread:$0]  %s16, 2048, %s99, [#allocation8], 256, 256, 16
    $region69: #{colbert_head.1} parent=1 // pred_fallthru
      _
    // Predicated region
    $region70: #{colbert_head.1} parent=1 // pred_check
      _
    $region71: #{colbert_head.1} parent=1 // pred_check_branch
      %106 = sbr.rel (0) target = $region73
    $region72: #{colbert_head.1} parent=1 // pred_region
      _
    $region73: #{colbert_head.1} parent=1 // pred_fallthru
      _
    // Predicated region
    $region74: #{colbert_head.1} parent=1 // pred_check
      _
    $region75: #{colbert_head.1} parent=1 // pred_check_branch
      %108 = sbr.rel (0) target = $region77
    $region76: #{colbert_head.1} parent=1 // pred_region
      %s110 = ssub.s32 8192, 8192
      %111 = vsyncadd [#allocation8], %s110
      %s112 = sshll.u32 [#allocation9], 4
      %s113 = int_to_ptr.vmem [resolvable:$true] %s112
      %118 = dma.hbm_to_vmem [thread:$0]  %s18, 8192, %s113, [#allocation8], 128, 128, 8
    $region77: #{colbert_head.1} parent=1 // pred_fallthru
      _
    // Predicated region
    $region78: #{colbert_head.1} parent=1 // pred_check
      _
    $region79: #{colbert_head.1} parent=1 // pred_check_branch
      %120 = sbr.rel (0) target = $region81
    $region80: #{colbert_head.1} parent=1 // pred_region
      _
    $region81: #{colbert_head.1} parent=1 // pred_fallthru
      _
    // Predicated region
    $region82: #{colbert_head.1} parent=1 // pred_check
      _
    $region83: #{colbert_head.1} parent=1 // pred_check_branch
      %122 = sbr.rel (0) target = $region85
    $region84: #{colbert_head.1} parent=1 // pred_region
      %s124 = ssub.s32 2048, 2048
      %125 = vsyncadd [#allocation11], %s124
      %s126 = sshll.u32 [#allocation10], 4
      %s127 = int_to_ptr.vmem [resolvable:$true] %s126
      %132 = dma.hbm_to_vmem [thread:$0]  %s20, 2048, %s127, [#allocation11], 64, 64, 4
    $region85: #{colbert_head.1} parent=1 // pred_fallthru
      _
    // Predicated region
    $region86: #{colbert_head.1} parent=1 // pred_check
      _
    $region87: #{colbert_head.1} parent=1 // pred_check_branch
      %134 = sbr.rel (0) target = $region89
    $region88: #{colbert_head.1} parent=1 // pred_region
      _
    $region89: #{colbert_head.1} parent=1 // pred_fallthru
      _
    // Predicated region
    $region90: #{colbert_head.1} parent=1 // pred_check
      _
    $region91: #{colbert_head.1} parent=1 // pred_check_branch
      %136 = sbr.rel (0) target = $region93
    $region92: #{colbert_head.1} parent=1 // pred_region
      %137 = dma.done [#allocation3], 3840
    $region93: #{colbert_head.1} parent=1 // pred_fallthru
      _
    // Predicated region
    $region94: #{colbert_head.1} parent=1 // pred_check
      _
    $region95: #{colbert_head.1} parent=1 // pred_check_branch
      %139 = sbr.rel (0) target = $region97
    $region96: #{colbert_head.1} parent=1 // pred_region
      %140 = dma.done [#allocation5], 24576
    $region97: #{colbert_head.1} parent=1 // pred_fallthru
      _
    // Predicated region
    $region98: #{colbert_head.1} parent=1 // pred_check
      _
    $region99: #{colbert_head.1} parent=1 // pred_check_branch
      %142 = sbr.rel (0) target = $region101
    $region100: #{colbert_head.1} parent=1 // pred_region
      %143 = dma.done [#allocation5], 1024
    $region101: #{colbert_head.1} parent=1 // pred_fallthru
      _
    // Predicated region
    $region102: #{colbert_head.1} parent=1 // pred_check
      _
    $region103: #{colbert_head.1} parent=1 // pred_check_branch
      %145 = sbr.rel (0) target = $region105
    $region104: #{colbert_head.1} parent=1 // pred_region
      %146 = dma.done [#allocation8], 2048
    $region105: #{colbert_head.1} parent=1 // pred_fallthru
      _
    // Predicated region
    $region106: #{colbert_head.1} parent=1 // pred_check
      _
    $region107: #{colbert_head.1} parent=1 // pred_check_branch
      %148 = sbr.rel (0) target = $region109
    $region108: #{colbert_head.1} parent=1 // pred_region
      %149 = dma.done [#allocation8], 8192
    $region109: #{colbert_head.1} parent=1 // pred_fallthru
      _
    // Predicated region
    $region110: #{colbert_head.1} parent=1 // pred_check
      _
    $region111: #{colbert_head.1} parent=1 // pred_check_branch
      %151 = sbr.rel (0) target = $region113
    $region112: #{colbert_head.1} parent=1 // pred_region
      %152 = dma.done [#allocation11], 2048
    $region113: #{colbert_head.1} parent=1 // pred_fallthru
      _
    %v154 = vld [vmem:[#allocation2] sm:$0xff]
    %v155 = vld [vmem:[#allocation2 + $0x8] sm:$0xff]
    %v156 = vld [vmem:[#allocation2 + $0x10] sm:$0xff]
    %v157 = vld [vmem:[#allocation2 + $0x18] sm:$0xff]
    %v158 = vld [vmem:[#allocation2 + $0x20] sm:$0xff]
    %v159 = vld [vmem:[#allocation2 + $0x28] sm:$0xff]
    %v160 = vld [vmem:[#allocation2 + $0x3c] sm:$0xff]
    %v161 = vld [vmem:[#allocation2 + $0x44] sm:$0xff]
    %v162 = vld [vmem:[#allocation2 + $0x4c] sm:$0xff]
    %v163 = vld [vmem:[#allocation2 + $0x54] sm:$0xff]
    %v164 = vld [vmem:[#allocation2 + $0x5c] sm:$0xff]
    %v165 = vld [vmem:[#allocation2 + $0x64] sm:$0xff]
    %v166 = vld [vmem:[#allocation2 + $0x78] sm:$0xff]
    %v167 = vld [vmem:[#allocation2 + $0x80] sm:$0xff]
    %v168 = vld [vmem:[#allocation2 + $0x88] sm:$0xff]
    %v169 = vld [vmem:[#allocation2 + $0x90] sm:$0xff]
    %v170 = vld [vmem:[#allocation2 + $0x98] sm:$0xff]
    %v171 = vld [vmem:[#allocation2 + $0xa0] sm:$0xff]
    %v172 = vld [vmem:[#allocation2 + $0xb4] sm:$0xff]
    %v173 = vld [vmem:[#allocation2 + $0xbc] sm:$0xff]
    %v174 = vld [vmem:[#allocation2 + $0xc4] sm:$0xff]
    %v175 = vld [vmem:[#allocation2 + $0xcc] sm:$0xff]
    %v176 = vld [vmem:[#allocation2 + $0xd4] sm:$0xff]
    %v177 = vld [vmem:[#allocation2 + $0xdc] sm:$0xff]
    %v202 = vcombine.low %v154, %v160
    %v203 = vcombine.high %v154, %v160
    %v204 = vcombine.low %v166, %v172
    %v205 = vcombine.high %v166, %v172
    %v207 = vunpack.c.l.s4 1983009808
    %v208 = vunpack.c.0.s8 %v207
    %v209 = vlaneseq
    %v210 = vshrl.u32 %v209, 7
    %v211 = vsub.s32 %v208, %v210
    %v212 = vrot.slane %v202, %v211
    %v214 = vunpack.c.l.s4 1983009808
    %v215 = vunpack.c.0.s8 %v214
    %v216 = vlaneseq
    %v217 = vshrl.u32 %v216, 7
    %v218 = vsub.s32 %v215, %v217
    %v219 = vrot.slane %v203, %v218
    %v221 = vunpack.c.l.s4 1983009808
    %v222 = vunpack.c.0.s8 %v221
    %v223 = vlaneseq
    %v224 = vshrl.u32 %v223, 7
    %v225 = vsub.s32 %v222, %v224
    %v226 = vrot.slane %v204, %v225
    %v228 = vunpack.c.l.s4 1983009808
    %v229 = vunpack.c.0.s8 %v228
    %v230 = vlaneseq
    %v231 = vshrl.u32 %v230, 7
    %v232 = vsub.s32 %v229, %v231
    %v233 = vrot.slane %v205, %v232
    %v234 = vcombine.low %v212, %v226
    %v235 = vcombine.high %v212, %v226
    %v236 = vcombine.low %v219, %v233
    %v237 = vcombine.high %v219, %v233
    %v238 = vcombine.low %v155, %v161
    %v239 = vcombine.high %v155, %v161
    %v240 = vcombine.low %v167, %v173
    %v241 = vcombine.high %v167, %v173
    %v243 = vunpack.c.l.s4 1983009808
    %v244 = vunpack.c.0.s8 %v243
    %v245 = vlaneseq
    %v246 = vshrl.u32 %v245, 7
    %v247 = vsub.s32 %v244, %v246
    %v248 = vrot.slane %v238, %v247
    %v250 = vunpack.c.l.s4 1983009808
    %v251 = vunpack.c.0.s8 %v250
    %v252 = vlaneseq
    %v253 = vshrl.u32 %v252, 7
    %v254 = vsub.s32 %v251, %v253
    %v255 = vrot.slane %v239, %v254
    %v257 = vunpack.c.l.s4 1983009808
    %v258 = vunpack.c.0.s8 %v257
    %v259 = vlaneseq
    %v260 = vshrl.u32 %v259, 7
    %v261 = vsub.s32 %v258, %v260
    %v262 = vrot.slane %v240, %v261
    %v264 = vunpack.c.l.s4 1983009808
    %v265 = vunpack.c.0.s8 %v264
    %v266 = vlaneseq
    %v267 = vshrl.u32 %v266, 7
    %v268 = vsub.s32 %v265, %v267
    %v269 = vrot.slane %v241, %v268
    %v270 = vcombine.low %v248, %v262
    %v271 = vcombine.high %v248, %v262
    %v272 = vcombine.low %v255, %v269
    %v273 = vcombine.high %v255, %v269
    %v274 = vcombine.low %v156, %v162
    %v275 = vcombine.high %v156, %v162
    %v276 = vcombine.low %v168, %v174
    %v277 = vcombine.high %v168, %v174
    %v279 = vunpack.c.l.s4 1983009808
    %v280 = vunpack.c.0.s8 %v279
    %v281 = vlaneseq
    %v282 = vshrl.u32 %v281, 7
    %v283 = vsub.s32 %v280, %v282
    %v284 = vrot.slane %v274, %v283
    %v286 = vunpack.c.l.s4 1983009808
    %v287 = vunpack.c.0.s8 %v286
    %v288 = vlaneseq
    %v289 = vshrl.u32 %v288, 7
    %v290 = vsub.s32 %v287, %v289
    %v291 = vrot.slane %v275, %v290
    %v293 = vunpack.c.l.s4 1983009808
    %v294 = vunpack.c.0.s8 %v293
    %v295 = vlaneseq
    %v296 = vshrl.u32 %v295, 7
    %v297 = vsub.s32 %v294, %v296
    %v298 = vrot.slane %v276, %v297
    %v300 = vunpack.c.l.s4 1983009808
    %v301 = vunpack.c.0.s8 %v300
    %v302 = vlaneseq
    %v303 = vshrl.u32 %v302, 7
    %v304 = vsub.s32 %v301, %v303
    %v305 = vrot.slane %v277, %v304
    %v306 = vcombine.low %v284, %v298
    %v307 = vcombine.high %v284, %v298
    %v308 = vcombine.low %v291, %v305
    %v309 = vcombine.high %v291, %v305
    %v310 = vcombine.low %v157, %v163
    %v311 = vcombine.high %v157, %v163
    %v312 = vcombine.low %v169, %v175
    %v313 = vcombine.high %v169, %v175
    %v315 = vunpack.c.l.s4 1983009808
    %v316 = vunpack.c.0.s8 %v315
    %v317 = vlaneseq
    %v318 = vshrl.u32 %v317, 7
    %v319 = vsub.s32 %v316, %v318
    %v320 = vrot.slane %v310, %v319
    %v322 = vunpack.c.l.s4 1983009808
    %v323 = vunpack.c.0.s8 %v322
    %v324 = vlaneseq
    %v325 = vshrl.u32 %v324, 7
    %v326 = vsub.s32 %v323, %v325
    %v327 = vrot.slane %v311, %v326
    %v329 = vunpack.c.l.s4 1983009808
    %v330 = vunpack.c.0.s8 %v329
    %v331 = vlaneseq
    %v332 = vshrl.u32 %v331, 7
    %v333 = vsub.s32 %v330, %v332
    %v334 = vrot.slane %v312, %v333
    %v336 = vunpack.c.l.s4 1983009808
    %v337 = vunpack.c.0.s8 %v336
    %v338 = vlaneseq
    %v339 = vshrl.u32 %v338, 7
    %v340 = vsub.s32 %v337, %v339
    %v341 = vrot.slane %v313, %v340
    %v342 = vcombine.low %v320, %v334
    %v343 = vcombine.high %v320, %v334
    %v344 = vcombine.low %v327, %v341
    %v345 = vcombine.high %v327, %v341
    %v346 = vcombine.low %v158, %v164
    %v347 = vcombine.high %v158, %v164
    %v348 = vcombine.low %v170, %v176
    %v349 = vcombine.high %v170, %v176
    %v351 = vunpack.c.l.s4 1983009808
    %v352 = vunpack.c.0.s8 %v351
    %v353 = vlaneseq
    %v354 = vshrl.u32 %v353, 7
    %v355 = vsub.s32 %v352, %v354
    %v356 = vrot.slane %v346, %v355
    %v358 = vunpack.c.l.s4 1983009808
    %v359 = vunpack.c.0.s8 %v358
    %v360 = vlaneseq
    %v361 = vshrl.u32 %v360, 7
    %v362 = vsub.s32 %v359, %v361
    %v363 = vrot.slane %v347, %v362
    %v365 = vunpack.c.l.s4 1983009808
    %v366 = vunpack.c.0.s8 %v365
    %v367 = vlaneseq
    %v368 = vshrl.u32 %v367, 7
    %v369 = vsub.s32 %v366, %v368
    %v370 = vrot.slane %v348, %v369
    %v372 = vunpack.c.l.s4 1983009808
    %v373 = vunpack.c.0.s8 %v372
    %v374 = vlaneseq
    %v375 = vshrl.u32 %v374, 7
    %v376 = vsub.s32 %v373, %v375
    %v377 = vrot.slane %v349, %v376
    %v378 = vcombine.low %v356, %v370
    %v379 = vcombine.high %v356, %v370
    %v380 = vcombine.low %v363, %v377
    %v381 = vcombine.high %v363, %v377
    %v382 = vcombine.low %v159, %v165
    %v383 = vcombine.high %v159, %v165
    %v384 = vcombine.low %v171, %v177
    %v385 = vcombine.high %v171, %v177
    %v387 = vunpack.c.l.s4 1983009808
    %v388 = vunpack.c.0.s8 %v387
    %v389 = vlaneseq
    %v390 = vshrl.u32 %v389, 7
    %v391 = vsub.s32 %v388, %v390
    %v392 = vrot.slane %v382, %v391
    %v394 = vunpack.c.l.s4 1983009808
    %v395 = vunpack.c.0.s8 %v394
    %v396 = vlaneseq
    %v397 = vshrl.u32 %v396, 7
    %v398 = vsub.s32 %v395, %v397
    %v399 = vrot.slane %v383, %v398
    %v401 = vunpack.c.l.s4 1983009808
    %v402 = vunpack.c.0.s8 %v401
    %v403 = vlaneseq
    %v404 = vshrl.u32 %v403, 7
    %v405 = vsub.s32 %v402, %v404
    %v406 = vrot.slane %v384, %v405
    %v408 = vunpack.c.l.s4 1983009808
    %v409 = vunpack.c.0.s8 %v408
    %v410 = vlaneseq
    %v411 = vshrl.u32 %v410, 7
    %v412 = vsub.s32 %v409, %v411
    %v413 = vrot.slane %v385, %v412
    %v414 = vcombine.low %v392, %v406
    %v415 = vcombine.high %v392, %v406
    %v416 = vcombine.low %v399, %v413
    %v417 = vcombine.high %v399, %v413
    %v442 = vpack.c.bf16 %v234, %v234
    %v443 = vpack.c.bf16 %v235, %v235
    %v444 = vpack.c.bf16 %v236, %v236
    %v445 = vpack.c.bf16 %v237, %v237
    %v446 = vpack.c.bf16 %v270, %v270
    %v447 = vpack.c.bf16 %v271, %v271
    %v448 = vpack.c.bf16 %v272, %v272
    %v449 = vpack.c.bf16 %v273, %v273
    %v450 = vpack.c.bf16 %v306, %v306
    %v451 = vpack.c.bf16 %v307, %v307
    %v452 = vpack.c.bf16 %v308, %v308
    %v453 = vpack.c.bf16 %v309, %v309
    %v454 = vpack.c.bf16 %v342, %v342
    %v455 = vpack.c.bf16 %v343, %v343
    %v456 = vpack.c.bf16 %v344, %v344
    %v457 = vpack.c.bf16 %v345, %v345
    %v458 = vpack.c.bf16 %v378, %v378
    %v459 = vpack.c.bf16 %v379, %v379
    %v460 = vpack.c.bf16 %v380, %v380
    %v461 = vpack.c.bf16 %v381, %v381
    %v462 = vpack.c.bf16 %v414, %v414
    %v463 = vpack.c.bf16 %v415, %v415
    %v464 = vpack.c.bf16 %v416, %v416
    %v465 = vpack.c.bf16 %v417, %v417
    %v466 = vld [vmem:[#allocation2 + $0x30] sm:$0xff]
    %v467 = vld [vmem:[#allocation2 + $0x38] sm:$0xf]
    %v468 = vld [vmem:[#allocation2 + $0x6c] sm:$0xff]
    %v469 = vld [vmem:[#allocation2 + $0x74] sm:$0xf]
    %v470 = vld [vmem:[#allocation2 + $0xa8] sm:$0xff]
    %v471 = vld [vmem:[#allocation2 + $0xb0] sm:$0xf]
    %v472 = vld [vmem:[#allocation2 + $0xe4] sm:$0xff]
    %v473 = vld [vmem:[#allocation2 + $0xec] sm:$0xf]
    %v482 = vcombine.low %v466, %v468
    %v483 = vcombine.high %v466, %v468
    %v484 = vcombine.low %v470, %v472
    %v485 = vcombine.high %v470, %v472
    %v487 = vunpack.c.l.s4 1983009808
    %v488 = vunpack.c.0.s8 %v487
    %v489 = vlaneseq
    %v490 = vshrl.u32 %v489, 7
    %v491 = vsub.s32 %v488, %v490
    %v492 = vrot.slane %v482, %v491
    %v494 = vunpack.c.l.s4 1983009808
    %v495 = vunpack.c.0.s8 %v494
    %v496 = vlaneseq
    %v497 = vshrl.u32 %v496, 7
    %v498 = vsub.s32 %v495, %v497
    %v499 = vrot.slane %v483, %v498
    %v501 = vunpack.c.l.s4 1983009808
    %v502 = vunpack.c.0.s8 %v501
    %v503 = vlaneseq
    %v504 = vshrl.u32 %v503, 7
    %v505 = vsub.s32 %v502, %v504
    %v506 = vrot.slane %v484, %v505
    %v508 = vunpack.c.l.s4 1983009808
    %v509 = vunpack.c.0.s8 %v508
    %v510 = vlaneseq
    %v511 = vshrl.u32 %v510, 7
    %v512 = vsub.s32 %v509, %v511
    %v513 = vrot.slane %v485, %v512
    %v514 = vcombine.low %v492, %v506
    %v515 = vcombine.high %v492, %v506
    %v516 = vcombine.low %v499, %v513
    %v517 = vcombine.high %v499, %v513
    %v518 = vcombine.low %v467, %v469
    %v519 = vcombine.low %v471, %v473
    %v521 = vunpack.c.l.s4 1983009808
    %v522 = vunpack.c.0.s8 %v521
    %v523 = vlaneseq
    %v524 = vshrl.u32 %v523, 7
    %v525 = vsub.s32 %v522, %v524
    %v526 = vrot.slane %v518, %v525
    %v528 = vunpack.c.l.s4 1983009808
    %v529 = vunpack.c.0.s8 %v528
    %v530 = vlaneseq
    %v531 = vshrl.u32 %v530, 7
    %v532 = vsub.s32 %v529, %v531
    %v533 = vrot.slane %v519, %v532
    %v534 = vcombine.low %v526, %v533
    %v535 = vcombine.high %v526, %v533
    %v542 = vpack.c.bf16 %v514, %v514
    %v543 = vpack.c.bf16 %v515, %v515
    %v544 = vpack.c.bf16 %v516, %v516
    %v545 = vpack.c.bf16 %v517, %v517
    %v546 = vpack.c.bf16 %v534, %v534
    %v547 = vpack.c.bf16 %v535, %v535
    %v548 = vld [vmem:[%s1] sm:$0xff]
    %v549 = vld [vmem:[%s1 + $0x8] sm:$0xf]
    %v550 = vld [vmem:[%s1 + $0xc] sm:$0xff]
    %v551 = vld [vmem:[%s1 + $0x14] sm:$0xf]
    %v552 = vld [vmem:[%s1 + $0x18] sm:$0xff]
    %v553 = vld [vmem:[%s1 + $0x20] sm:$0xf]
    %v554 = vld [vmem:[%s1 + $0x24] sm:$0xff]
    %v555 = vld [vmem:[%s1 + $0x2c] sm:$0xf]
    %v564 = vcombine.low %v548, %v550
    %v565 = vcombine.high %v548, %v550
    %v566 = vcombine.low %v552, %v554
    %v567 = vcombine.high %v552, %v554
    %v569 = vunpack.c.l.s4 1983009808
    %v570 = vunpack.c.0.s8 %v569
    %v571 = vlaneseq
    %v572 = vshrl.u32 %v571, 7
    %v573 = vsub.s32 %v570, %v572
    %v574 = vrot.slane %v564, %v573
    %v576 = vunpack.c.l.s4 1983009808
    %v577 = vunpack.c.0.s8 %v576
    %v578 = vlaneseq
    %v579 = vshrl.u32 %v578, 7
    %v580 = vsub.s32 %v577, %v579
    %v581 = vrot.slane %v565, %v580
    %v583 = vunpack.c.l.s4 1983009808
    %v584 = vunpack.c.0.s8 %v583
    %v585 = vlaneseq
    %v586 = vshrl.u32 %v585, 7
    %v587 = vsub.s32 %v584, %v586
    %v588 = vrot.slane %v566, %v587
    %v590 = vunpack.c.l.s4 1983009808
    %v591 = vunpack.c.0.s8 %v590
    %v592 = vlaneseq
    %v593 = vshrl.u32 %v592, 7
    %v594 = vsub.s32 %v591, %v593
    %v595 = vrot.slane %v567, %v594
    %v596 = vcombine.low %v574, %v588
    %v597 = vcombine.high %v574, %v588
    %v598 = vcombine.low %v581, %v595
    %v599 = vcombine.high %v581, %v595
    %v600 = vcombine.low %v549, %v551
    %v601 = vcombine.low %v553, %v555
    %v603 = vunpack.c.l.s4 1983009808
    %v604 = vunpack.c.0.s8 %v603
    %v605 = vlaneseq
    %v606 = vshrl.u32 %v605, 7
    %v607 = vsub.s32 %v604, %v606
    %v608 = vrot.slane %v600, %v607
    %v610 = vunpack.c.l.s4 1983009808
    %v611 = vunpack.c.0.s8 %v610
    %v612 = vlaneseq
    %v613 = vshrl.u32 %v612, 7
    %v614 = vsub.s32 %v611, %v613
    %v615 = vrot.slane %v601, %v614
    %v616 = vcombine.low %v608, %v615
    %v617 = vcombine.high %v608, %v615
    %v624 = vpack.c.bf16 %v596, %v596
    %v625 = vpack.c.bf16 %v597, %v597
    %v626 = vpack.c.bf16 %v598, %v598
    %v627 = vpack.c.bf16 %v599, %v599
    %v628 = vpack.c.bf16 %v616, %v616
    %v629 = vpack.c.bf16 %v617, %v617
    %v630 = vld [vmem:[#allocation4] sm:$0xf]
    %v631 = vld [vmem:[#allocation4 + $0x4] sm:$0xf]
    %v632 = vld [vmem:[#allocation4 + $0x8] sm:$0xf]
    %v633 = vld [vmem:[#allocation4 + $0xc] sm:$0xf]
    %v634 = vld [vmem:[#allocation4 + $0x10] sm:$0xf]
    %v635 = vld [vmem:[#allocation4 + $0x14] sm:$0xf]
    %v636 = vld [vmem:[#allocation4 + $0x18] sm:$0xf]
    %v637 = vld [vmem:[#allocation4 + $0x1c] sm:$0xf]
    %v638 = vld [vmem:[#allocation4 + $0x20] sm:$0xf]
    %v639 = vld [vmem:[#allocation4 + $0x24] sm:$0xf]
    %v640 = vld [vmem:[#allocation4 + $0x28] sm:$0xf]
    %v641 = vld [vmem:[#allocation4 + $0x2c] sm:$0xf]
    %v642 = vld [vmem:[#allocation4 + $0x30] sm:$0xf]
    %v643 = vld [vmem:[#allocation4 + $0x34] sm:$0xf]
    %v644 = vld [vmem:[#allocation4 + $0x38] sm:$0xf]
    %v645 = vld [vmem:[#allocation4 + $0x3c] sm:$0xf]
    %v646 = vld [vmem:[#allocation4 + $0x40] sm:$0xf]
    %v647 = vld [vmem:[#allocation4 + $0x44] sm:$0xf]
    %v648 = vld [vmem:[#allocation4 + $0x48] sm:$0xf]
    %v649 = vld [vmem:[#allocation4 + $0x4c] sm:$0xf]
    %v650 = vld [vmem:[#allocation4 + $0x50] sm:$0xf]
    %v651 = vld [vmem:[#allocation4 + $0x54] sm:$0xf]
    %v652 = vld [vmem:[#allocation4 + $0x58] sm:$0xf]
    %v653 = vld [vmem:[#allocation4 + $0x5c] sm:$0xf]
    %v654 = vld [vmem:[#allocation4 + $0x60] sm:$0xf]
    %v655 = vld [vmem:[#allocation4 + $0x64] sm:$0xf]
    %v656 = vld [vmem:[#allocation4 + $0x68] sm:$0xf]
    %v657 = vld [vmem:[#allocation4 + $0x6c] sm:$0xf]
    %v658 = vld [vmem:[#allocation4 + $0x70] sm:$0xf]
    %v659 = vld [vmem:[#allocation4 + $0x74] sm:$0xf]
    %v660 = vld [vmem:[#allocation4 + $0x78] sm:$0xf]
    %v661 = vld [vmem:[#allocation4 + $0x7c] sm:$0xf]
    %v662 = vld [vmem:[#allocation4 + $0x80] sm:$0xf]
    %v663 = vld [vmem:[#allocation4 + $0x84] sm:$0xf]
    %v664 = vld [vmem:[#allocation4 + $0x88] sm:$0xf]
    %v665 = vld [vmem:[#allocation4 + $0x8c] sm:$0xf]
    %v666 = vld [vmem:[#allocation4 + $0x90] sm:$0xf]
    %v667 = vld [vmem:[#allocation4 + $0x94] sm:$0xf]
    %v668 = vld [vmem:[#allocation4 + $0x98] sm:$0xf]
    %v669 = vld [vmem:[#allocation4 + $0x9c] sm:$0xf]
    %v670 = vld [vmem:[#allocation4 + $0xa0] sm:$0xf]
    %v671 = vld [vmem:[#allocation4 + $0xa4] sm:$0xf]
    %v672 = vld [vmem:[#allocation4 + $0xa8] sm:$0xf]
    %v673 = vld [vmem:[#allocation4 + $0xac] sm:$0xf]
    %v674 = vld [vmem:[#allocation4 + $0xb0] sm:$0xf]
    %v675 = vld [vmem:[#allocation4 + $0xb4] sm:$0xf]
    %v676 = vld [vmem:[#allocation4 + $0xb8] sm:$0xf]
    %v677 = vld [vmem:[#allocation4 + $0xbc] sm:$0xf]
    %v678 = vld [vmem:[#allocation4 + $0xc0] sm:$0xf]
    %v679 = vld [vmem:[#allocation4 + $0xc4] sm:$0xf]
    %v680 = vld [vmem:[#allocation4 + $0xc8] sm:$0xf]
    %v681 = vld [vmem:[#allocation4 + $0xcc] sm:$0xf]
    %v682 = vld [vmem:[#allocation4 + $0xd0] sm:$0xf]
    %v683 = vld [vmem:[#allocation4 + $0xd4] sm:$0xf]
    %v684 = vld [vmem:[#allocation4 + $0xd8] sm:$0xf]
    %v685 = vld [vmem:[#allocation4 + $0xdc] sm:$0xf]
    %v686 = vld [vmem:[#allocation4 + $0xe0] sm:$0xf]
    %v687 = vld [vmem:[#allocation4 + $0xe4] sm:$0xf]
    %v688 = vld [vmem:[#allocation4 + $0xe8] sm:$0xf]
    %v689 = vld [vmem:[#allocation4 + $0xec] sm:$0xf]
    %v690 = vld [vmem:[#allocation4 + $0xf0] sm:$0xf]
    %v691 = vld [vmem:[#allocation4 + $0xf4] sm:$0xf]
    %v692 = vld [vmem:[#allocation4 + $0xf8] sm:$0xf]
    %v693 = vld [vmem:[#allocation4 + $0xfc] sm:$0xf]
    %v694 = vld [vmem:[#allocation4 + $0x100] sm:$0xf]
    %v695 = vld [vmem:[#allocation4 + $0x104] sm:$0xf]
    %v696 = vld [vmem:[#allocation4 + $0x108] sm:$0xf]
    %v697 = vld [vmem:[#allocation4 + $0x10c] sm:$0xf]
    %v698 = vld [vmem:[#allocation4 + $0x110] sm:$0xf]
    %v699 = vld [vmem:[#allocation4 + $0x114] sm:$0xf]
    %v700 = vld [vmem:[#allocation4 + $0x118] sm:$0xf]
    %v701 = vld [vmem:[#allocation4 + $0x11c] sm:$0xf]
    %v702 = vld [vmem:[#allocation4 + $0x120] sm:$0xf]
    %v703 = vld [vmem:[#allocation4 + $0x124] sm:$0xf]
    %v704 = vld [vmem:[#allocation4 + $0x128] sm:$0xf]
    %v705 = vld [vmem:[#allocation4 + $0x12c] sm:$0xf]
    %v706 = vld [vmem:[#allocation4 + $0x130] sm:$0xf]
    %v707 = vld [vmem:[#allocation4 + $0x134] sm:$0xf]
    %v708 = vld [vmem:[#allocation4 + $0x138] sm:$0xf]
    %v709 = vld [vmem:[#allocation4 + $0x13c] sm:$0xf]
    %v710 = vld [vmem:[#allocation4 + $0x140] sm:$0xf]
    %v711 = vld [vmem:[#allocation4 + $0x144] sm:$0xf]
    %v712 = vld [vmem:[#allocation4 + $0x148] sm:$0xf]
    %v713 = vld [vmem:[#allocation4 + $0x14c] sm:$0xf]
    %v714 = vld [vmem:[#allocation4 + $0x150] sm:$0xf]
    %v715 = vld [vmem:[#allocation4 + $0x154] sm:$0xf]
    %v716 = vld [vmem:[#allocation4 + $0x158] sm:$0xf]
    %v717 = vld [vmem:[#allocation4 + $0x15c] sm:$0xf]
    %v718 = vld [vmem:[#allocation4 + $0x160] sm:$0xf]
    %v719 = vld [vmem:[#allocation4 + $0x164] sm:$0xf]
    %v720 = vld [vmem:[#allocation4 + $0x168] sm:$0xf]
    %v721 = vld [vmem:[#allocation4 + $0x16c] sm:$0xf]
    %v722 = vld [vmem:[#allocation4 + $0x170] sm:$0xf]
    %v723 = vld [vmem:[#allocation4 + $0x174] sm:$0xf]
    %v724 = vld [vmem:[#allocation4 + $0x178] sm:$0xf]
    %v725 = vld [vmem:[#allocation4 + $0x17c] sm:$0xf]
    %v726 = vld [vmem:[#allocation4 + $0x180] sm:$0xf]
    %v727 = vld [vmem:[#allocation4 + $0x184] sm:$0xf]
    %v728 = vld [vmem:[#allocation4 + $0x188] sm:$0xf]
    %v729 = vld [vmem:[#allocation4 + $0x18c] sm:$0xf]
    %v730 = vld [vmem:[#allocation4 + $0x190] sm:$0xf]
    %v731 = vld [vmem:[#allocation4 + $0x194] sm:$0xf]
    %v732 = vld [vmem:[#allocation4 + $0x198] sm:$0xf]
    %v733 = vld [vmem:[#allocation4 + $0x19c] sm:$0xf]
    %v734 = vld [vmem:[#allocation4 + $0x1a0] sm:$0xf]
    %v735 = vld [vmem:[#allocation4 + $0x1a4] sm:$0xf]
    %v736 = vld [vmem:[#allocation4 + $0x1a8] sm:$0xf]
    %v737 = vld [vmem:[#allocation4 + $0x1ac] sm:$0xf]
    %v738 = vld [vmem:[#allocation4 + $0x1b0] sm:$0xf]
    %v739 = vld [vmem:[#allocation4 + $0x1b4] sm:$0xf]
    %v740 = vld [vmem:[#allocation4 + $0x1b8] sm:$0xf]
    %v741 = vld [vmem:[#allocation4 + $0x1bc] sm:$0xf]
    %v742 = vld [vmem:[#allocation4 + $0x1c0] sm:$0xf]
    %v743 = vld [vmem:[#allocation4 + $0x1c4] sm:$0xf]
    %v744 = vld [vmem:[#allocation4 + $0x1c8] sm:$0xf]
    %v745 = vld [vmem:[#allocation4 + $0x1cc] sm:$0xf]
    %v746 = vld [vmem:[#allocation4 + $0x1d0] sm:$0xf]
    %v747 = vld [vmem:[#allocation4 + $0x1d4] sm:$0xf]
    %v748 = vld [vmem:[#allocation4 + $0x1d8] sm:$0xf]
    %v749 = vld [vmem:[#allocation4 + $0x1dc] sm:$0xf]
    %v750 = vld [vmem:[#allocation4 + $0x1e0] sm:$0xf]
    %v751 = vld [vmem:[#allocation4 + $0x1e4] sm:$0xf]
    %v752 = vld [vmem:[#allocation4 + $0x1e8] sm:$0xf]
    %v753 = vld [vmem:[#allocation4 + $0x1ec] sm:$0xf]
    %v754 = vld [vmem:[#allocation4 + $0x1f0] sm:$0xf]
    %v755 = vld [vmem:[#allocation4 + $0x1f4] sm:$0xf]
    %v756 = vld [vmem:[#allocation4 + $0x1f8] sm:$0xf]
    %v757 = vld [vmem:[#allocation4 + $0x1fc] sm:$0xf]
    %v758 = vld [vmem:[#allocation4 + $0x200] sm:$0xf]
    %v759 = vld [vmem:[#allocation4 + $0x204] sm:$0xf]
    %v760 = vld [vmem:[#allocation4 + $0x208] sm:$0xf]
    %v761 = vld [vmem:[#allocation4 + $0x20c] sm:$0xf]
    %v762 = vld [vmem:[#allocation4 + $0x210] sm:$0xf]
    %v763 = vld [vmem:[#allocation4 + $0x214] sm:$0xf]
    %v764 = vld [vmem:[#allocation4 + $0x218] sm:$0xf]
    %v765 = vld [vmem:[#allocation4 + $0x21c] sm:$0xf]
    %v766 = vld [vmem:[#allocation4 + $0x220] sm:$0xf]
    %v767 = vld [vmem:[#allocation4 + $0x224] sm:$0xf]
    %v768 = vld [vmem:[#allocation4 + $0x228] sm:$0xf]
    %v769 = vld [vmem:[#allocation4 + $0x22c] sm:$0xf]
    %v770 = vld [vmem:[#allocation4 + $0x230] sm:$0xf]
    %v771 = vld [vmem:[#allocation4 + $0x234] sm:$0xf]
    %v772 = vld [vmem:[#allocation4 + $0x238] sm:$0xf]
    %v773 = vld [vmem:[#allocation4 + $0x23c] sm:$0xf]
    %v774 = vld [vmem:[#allocation4 + $0x240] sm:$0xf]
    %v775 = vld [vmem:[#allocation4 + $0x244] sm:$0xf]
    %v776 = vld [vmem:[#allocation4 + $0x248] sm:$0xf]
    %v777 = vld [vmem:[#allocation4 + $0x24c] sm:$0xf]
    %v778 = vld [vmem:[#allocation4 + $0x250] sm:$0xf]
    %v779 = vld [vmem:[#allocation4 + $0x254] sm:$0xf]
    %v780 = vld [vmem:[#allocation4 + $0x258] sm:$0xf]
    %v781 = vld [vmem:[#allocation4 + $0x25c] sm:$0xf]
    %v782 = vld [vmem:[#allocation4 + $0x260] sm:$0xf]
    %v783 = vld [vmem:[#allocation4 + $0x264] sm:$0xf]
    %v784 = vld [vmem:[#allocation4 + $0x268] sm:$0xf]
    %v785 = vld [vmem:[#allocation4 + $0x26c] sm:$0xf]
    %v786 = vld [vmem:[#allocation4 + $0x270] sm:$0xf]
    %v787 = vld [vmem:[#allocation4 + $0x274] sm:$0xf]
    %v788 = vld [vmem:[#allocation4 + $0x278] sm:$0xf]
    %v789 = vld [vmem:[#allocation4 + $0x27c] sm:$0xf]
    %v790 = vld [vmem:[#allocation4 + $0x280] sm:$0xf]
    %v791 = vld [vmem:[#allocation4 + $0x284] sm:$0xf]
    %v792 = vld [vmem:[#allocation4 + $0x288] sm:$0xf]
    %v793 = vld [vmem:[#allocation4 + $0x28c] sm:$0xf]
    %v794 = vld [vmem:[#allocation4 + $0x290] sm:$0xf]
    %v795 = vld [vmem:[#allocation4 + $0x294] sm:$0xf]
    %v796 = vld [vmem:[#allocation4 + $0x298] sm:$0xf]
    %v797 = vld [vmem:[#allocation4 + $0x29c] sm:$0xf]
    %v798 = vld [vmem:[#allocation4 + $0x2a0] sm:$0xf]
    %v799 = vld [vmem:[#allocation4 + $0x2a4] sm:$0xf]
    %v800 = vld [vmem:[#allocation4 + $0x2a8] sm:$0xf]
    %v801 = vld [vmem:[#allocation4 + $0x2ac] sm:$0xf]
    %v802 = vld [vmem:[#allocation4 + $0x2b0] sm:$0xf]
    %v803 = vld [vmem:[#allocation4 + $0x2b4] sm:$0xf]
    %v804 = vld [vmem:[#allocation4 + $0x2b8] sm:$0xf]
    %v805 = vld [vmem:[#allocation4 + $0x2bc] sm:$0xf]
    %v806 = vld [vmem:[#allocation4 + $0x2c0] sm:$0xf]
    %v807 = vld [vmem:[#allocation4 + $0x2c4] sm:$0xf]
    %v808 = vld [vmem:[#allocation4 + $0x2c8] sm:$0xf]
    %v809 = vld [vmem:[#allocation4 + $0x2cc] sm:$0xf]
    %v810 = vld [vmem:[#allocation4 + $0x2d0] sm:$0xf]
    %v811 = vld [vmem:[#allocation4 + $0x2d4] sm:$0xf]
    %v812 = vld [vmem:[#allocation4 + $0x2d8] sm:$0xf]
    %v813 = vld [vmem:[#allocation4 + $0x2dc] sm:$0xf]
    %v814 = vld [vmem:[#allocation4 + $0x2e0] sm:$0xf]
    %v815 = vld [vmem:[#allocation4 + $0x2e4] sm:$0xf]
    %v816 = vld [vmem:[#allocation4 + $0x2e8] sm:$0xf]
    %v817 = vld [vmem:[#allocation4 + $0x2ec] sm:$0xf]
    %v818 = vld [vmem:[#allocation4 + $0x2f0] sm:$0xf]
    %v819 = vld [vmem:[#allocation4 + $0x2f4] sm:$0xf]
    %v820 = vld [vmem:[#allocation4 + $0x2f8] sm:$0xf]
    %v821 = vld [vmem:[#allocation4 + $0x2fc] sm:$0xf]
    %v822 = vld [vmem:[#allocation4 + $0x300] sm:$0xf]
    %v823 = vld [vmem:[#allocation4 + $0x304] sm:$0xf]
    %v824 = vld [vmem:[#allocation4 + $0x308] sm:$0xf]
    %v825 = vld [vmem:[#allocation4 + $0x30c] sm:$0xf]
    %v826 = vld [vmem:[#allocation4 + $0x310] sm:$0xf]
    %v827 = vld [vmem:[#allocation4 + $0x314] sm:$0xf]
    %v828 = vld [vmem:[#allocation4 + $0x318] sm:$0xf]
    %v829 = vld [vmem:[#allocation4 + $0x31c] sm:$0xf]
    %v830 = vld [vmem:[#allocation4 + $0x320] sm:$0xf]
    %v831 = vld [vmem:[#allocation4 + $0x324] sm:$0xf]
    %v832 = vld [vmem:[#allocation4 + $0x328] sm:$0xf]
    %v833 = vld [vmem:[#allocation4 + $0x32c] sm:$0xf]
    %v834 = vld [vmem:[#allocation4 + $0x330] sm:$0xf]
    %v835 = vld [vmem:[#allocation4 + $0x334] sm:$0xf]
    %v836 = vld [vmem:[#allocation4 + $0x338] sm:$0xf]
    %v837 = vld [vmem:[#allocation4 + $0x33c] sm:$0xf]
    %v838 = vld [vmem:[#allocation4 + $0x340] sm:$0xf]
    %v839 = vld [vmem:[#allocation4 + $0x344] sm:$0xf]
    %v840 = vld [vmem:[#allocation4 + $0x348] sm:$0xf]
    %v841 = vld [vmem:[#allocation4 + $0x34c] sm:$0xf]
    %v842 = vld [vmem:[#allocation4 + $0x350] sm:$0xf]
    %v843 = vld [vmem:[#allocation4 + $0x354] sm:$0xf]
    %v844 = vld [vmem:[#allocation4 + $0x358] sm:$0xf]
    %v845 = vld [vmem:[#allocation4 + $0x35c] sm:$0xf]
    %v846 = vld [vmem:[#allocation4 + $0x360] sm:$0xf]
    %v847 = vld [vmem:[#allocation4 + $0x364] sm:$0xf]
    %v848 = vld [vmem:[#allocation4 + $0x368] sm:$0xf]
    %v849 = vld [vmem:[#allocation4 + $0x36c] sm:$0xf]
    %v850 = vld [vmem:[#allocation4 + $0x370] sm:$0xf]
    %v851 = vld [vmem:[#allocation4 + $0x374] sm:$0xf]
    %v852 = vld [vmem:[#allocation4 + $0x378] sm:$0xf]
    %v853 = vld [vmem:[#allocation4 + $0x37c] sm:$0xf]
    %v854 = vld [vmem:[#allocation4 + $0x380] sm:$0xf]
    %v855 = vld [vmem:[#allocation4 + $0x384] sm:$0xf]
    %v856 = vld [vmem:[#allocation4 + $0x388] sm:$0xf]
    %v857 = vld [vmem:[#allocation4 + $0x38c] sm:$0xf]
    %v858 = vld [vmem:[#allocation4 + $0x390] sm:$0xf]
    %v859 = vld [vmem:[#allocation4 + $0x394] sm:$0xf]
    %v860 = vld [vmem:[#allocation4 + $0x398] sm:$0xf]
    %v861 = vld [vmem:[#allocation4 + $0x39c] sm:$0xf]
    %v862 = vld [vmem:[#allocation4 + $0x3a0] sm:$0xf]
    %v863 = vld [vmem:[#allocation4 + $0x3a4] sm:$0xf]
    %v864 = vld [vmem:[#allocation4 + $0x3a8] sm:$0xf]
    %v865 = vld [vmem:[#allocation4 + $0x3ac] sm:$0xf]
    %v866 = vld [vmem:[#allocation4 + $0x3b0] sm:$0xf]
    %v867 = vld [vmem:[#allocation4 + $0x3b4] sm:$0xf]
    %v868 = vld [vmem:[#allocation4 + $0x3b8] sm:$0xf]
    %v869 = vld [vmem:[#allocation4 + $0x3bc] sm:$0xf]
    %v870 = vld [vmem:[#allocation4 + $0x3c0] sm:$0xf]
    %v871 = vld [vmem:[#allocation4 + $0x3c4] sm:$0xf]
    %v872 = vld [vmem:[#allocation4 + $0x3c8] sm:$0xf]
    %v873 = vld [vmem:[#allocation4 + $0x3cc] sm:$0xf]
    %v874 = vld [vmem:[#allocation4 + $0x3d0] sm:$0xf]
    %v875 = vld [vmem:[#allocation4 + $0x3d4] sm:$0xf]
    %v876 = vld [vmem:[#allocation4 + $0x3d8] sm:$0xf]
    %v877 = vld [vmem:[#allocation4 + $0x3dc] sm:$0xf]
    %v878 = vld [vmem:[#allocation4 + $0x3e0] sm:$0xf]
    %v879 = vld [vmem:[#allocation4 + $0x3e4] sm:$0xf]
    %v880 = vld [vmem:[#allocation4 + $0x3e8] sm:$0xf]
    %v881 = vld [vmem:[#allocation4 + $0x3ec] sm:$0xf]
    %v882 = vld [vmem:[#allocation4 + $0x3f0] sm:$0xf]
    %v883 = vld [vmem:[#allocation4 + $0x3f4] sm:$0xf]
    %v884 = vld [vmem:[#allocation4 + $0x3f8] sm:$0xf]
    %v885 = vld [vmem:[#allocation4 + $0x3fc] sm:$0xf]
    %v886 = vld [vmem:[#allocation4 + $0x400] sm:$0xf]
    %v887 = vld [vmem:[#allocation4 + $0x404] sm:$0xf]
    %v888 = vld [vmem:[#allocation4 + $0x408] sm:$0xf]
    %v889 = vld [vmem:[#allocation4 + $0x40c] sm:$0xf]
    %v890 = vld [vmem:[#allocation4 + $0x410] sm:$0xf]
    %v891 = vld [vmem:[#allocation4 + $0x414] sm:$0xf]
    %v892 = vld [vmem:[#allocation4 + $0x418] sm:$0xf]
    %v893 = vld [vmem:[#allocation4 + $0x41c] sm:$0xf]
    %v894 = vld [vmem:[#allocation4 + $0x420] sm:$0xf]
    %v895 = vld [vmem:[#allocation4 + $0x424] sm:$0xf]
    %v896 = vld [vmem:[#allocation4 + $0x428] sm:$0xf]
    %v897 = vld [vmem:[#allocation4 + $0x42c] sm:$0xf]
    %v898 = vld [vmem:[#allocation4 + $0x430] sm:$0xf]
    %v899 = vld [vmem:[#allocation4 + $0x434] sm:$0xf]
    %v900 = vld [vmem:[#allocation4 + $0x438] sm:$0xf]
    %v901 = vld [vmem:[#allocation4 + $0x43c] sm:$0xf]
    %v902 = vld [vmem:[#allocation4 + $0x440] sm:$0xf]
    %v903 = vld [vmem:[#allocation4 + $0x444] sm:$0xf]
    %v904 = vld [vmem:[#allocation4 + $0x448] sm:$0xf]
    %v905 = vld [vmem:[#allocation4 + $0x44c] sm:$0xf]
    %v906 = vld [vmem:[#allocation4 + $0x450] sm:$0xf]
    %v907 = vld [vmem:[#allocation4 + $0x454] sm:$0xf]
    %v908 = vld [vmem:[#allocation4 + $0x458] sm:$0xf]
    %v909 = vld [vmem:[#allocation4 + $0x45c] sm:$0xf]
    %v910 = vld [vmem:[#allocation4 + $0x460] sm:$0xf]
    %v911 = vld [vmem:[#allocation4 + $0x464] sm:$0xf]
    %v912 = vld [vmem:[#allocation4 + $0x468] sm:$0xf]
    %v913 = vld [vmem:[#allocation4 + $0x46c] sm:$0xf]
    %v914 = vld [vmem:[#allocation4 + $0x470] sm:$0xf]
    %v915 = vld [vmem:[#allocation4 + $0x474] sm:$0xf]
    %v916 = vld [vmem:[#allocation4 + $0x478] sm:$0xf]
    %v917 = vld [vmem:[#allocation4 + $0x47c] sm:$0xf]
    %v918 = vld [vmem:[#allocation4 + $0x480] sm:$0xf]
    %v919 = vld [vmem:[#allocation4 + $0x484] sm:$0xf]
    %v920 = vld [vmem:[#allocation4 + $0x488] sm:$0xf]
    %v921 = vld [vmem:[#allocation4 + $0x48c] sm:$0xf]
    %v922 = vld [vmem:[#allocation4 + $0x490] sm:$0xf]
    %v923 = vld [vmem:[#allocation4 + $0x494] sm:$0xf]
    %v924 = vld [vmem:[#allocation4 + $0x498] sm:$0xf]
    %v925 = vld [vmem:[#allocation4 + $0x49c] sm:$0xf]
    %v926 = vld [vmem:[#allocation4 + $0x4a0] sm:$0xf]
    %v927 = vld [vmem:[#allocation4 + $0x4a4] sm:$0xf]
    %v928 = vld [vmem:[#allocation4 + $0x4a8] sm:$0xf]
    %v929 = vld [vmem:[#allocation4 + $0x4ac] sm:$0xf]
    %v930 = vld [vmem:[#allocation4 + $0x4b0] sm:$0xf]
    %v931 = vld [vmem:[#allocation4 + $0x4b4] sm:$0xf]
    %v932 = vld [vmem:[#allocation4 + $0x4b8] sm:$0xf]
    %v933 = vld [vmem:[#allocation4 + $0x4bc] sm:$0xf]
    %v934 = vld [vmem:[#allocation4 + $0x4c0] sm:$0xf]
    %v935 = vld [vmem:[#allocation4 + $0x4c4] sm:$0xf]
    %v936 = vld [vmem:[#allocation4 + $0x4c8] sm:$0xf]
    %v937 = vld [vmem:[#allocation4 + $0x4cc] sm:$0xf]
    %v938 = vld [vmem:[#allocation4 + $0x4d0] sm:$0xf]
    %v939 = vld [vmem:[#allocation4 + $0x4d4] sm:$0xf]
    %v940 = vld [vmem:[#allocation4 + $0x4d8] sm:$0xf]
    %v941 = vld [vmem:[#allocation4 + $0x4dc] sm:$0xf]
    %v942 = vld [vmem:[#allocation4 + $0x4e0] sm:$0xf]
    %v943 = vld [vmem:[#allocation4 + $0x4e4] sm:$0xf]
    %v944 = vld [vmem:[#allocation4 + $0x4e8] sm:$0xf]
    %v945 = vld [vmem:[#allocation4 + $0x4ec] sm:$0xf]
    %v946 = vld [vmem:[#allocation4 + $0x4f0] sm:$0xf]
    %v947 = vld [vmem:[#allocation4 + $0x4f4] sm:$0xf]
    %v948 = vld [vmem:[#allocation4 + $0x4f8] sm:$0xf]
    %v949 = vld [vmem:[#allocation4 + $0x4fc] sm:$0xf]
    %v950 = vld [vmem:[#allocation4 + $0x500] sm:$0xf]
    %v951 = vld [vmem:[#allocation4 + $0x504] sm:$0xf]
    %v952 = vld [vmem:[#allocation4 + $0x508] sm:$0xf]
    %v953 = vld [vmem:[#allocation4 + $0x50c] sm:$0xf]
    %v954 = vld [vmem:[#allocation4 + $0x510] sm:$0xf]
    %v955 = vld [vmem:[#allocation4 + $0x514] sm:$0xf]
    %v956 = vld [vmem:[#allocation4 + $0x518] sm:$0xf]
    %v957 = vld [vmem:[#allocation4 + $0x51c] sm:$0xf]
    %v958 = vld [vmem:[#allocation4 + $0x520] sm:$0xf]
    %v959 = vld [vmem:[#allocation4 + $0x524] sm:$0xf]
    %v960 = vld [vmem:[#allocation4 + $0x528] sm:$0xf]
    %v961 = vld [vmem:[#allocation4 + $0x52c] sm:$0xf]
    %v962 = vld [vmem:[#allocation4 + $0x530] sm:$0xf]
    %v963 = vld [vmem:[#allocation4 + $0x534] sm:$0xf]
    %v964 = vld [vmem:[#allocation4 + $0x538] sm:$0xf]
    %v965 = vld [vmem:[#allocation4 + $0x53c] sm:$0xf]
    %v966 = vld [vmem:[#allocation4 + $0x540] sm:$0xf]
    %v967 = vld [vmem:[#allocation4 + $0x544] sm:$0xf]
    %v968 = vld [vmem:[#allocation4 + $0x548] sm:$0xf]
    %v969 = vld [vmem:[#allocation4 + $0x54c] sm:$0xf]
    %v970 = vld [vmem:[#allocation4 + $0x550] sm:$0xf]
    %v971 = vld [vmem:[#allocation4 + $0x554] sm:$0xf]
    %v972 = vld [vmem:[#allocation4 + $0x558] sm:$0xf]
    %v973 = vld [vmem:[#allocation4 + $0x55c] sm:$0xf]
    %v974 = vld [vmem:[#allocation4 + $0x560] sm:$0xf]
    %v975 = vld [vmem:[#allocation4 + $0x564] sm:$0xf]
    %v976 = vld [vmem:[#allocation4 + $0x568] sm:$0xf]
    %v977 = vld [vmem:[#allocation4 + $0x56c] sm:$0xf]
    %v978 = vld [vmem:[#allocation4 + $0x570] sm:$0xf]
    %v979 = vld [vmem:[#allocation4 + $0x574] sm:$0xf]
    %v980 = vld [vmem:[#allocation4 + $0x578] sm:$0xf]
    %v981 = vld [vmem:[#allocation4 + $0x57c] sm:$0xf]
    %v982 = vld [vmem:[#allocation4 + $0x580] sm:$0xf]
    %v983 = vld [vmem:[#allocation4 + $0x584] sm:$0xf]
    %v984 = vld [vmem:[#allocation4 + $0x588] sm:$0xf]
    %v985 = vld [vmem:[#allocation4 + $0x58c] sm:$0xf]
    %v986 = vld [vmem:[#allocation4 + $0x590] sm:$0xf]
    %v987 = vld [vmem:[#allocation4 + $0x594] sm:$0xf]
    %v988 = vld [vmem:[#allocation4 + $0x598] sm:$0xf]
    %v989 = vld [vmem:[#allocation4 + $0x59c] sm:$0xf]
    %v990 = vld [vmem:[#allocation4 + $0x5a0] sm:$0xf]
    %v991 = vld [vmem:[#allocation4 + $0x5a4] sm:$0xf]
    %v992 = vld [vmem:[#allocation4 + $0x5a8] sm:$0xf]
    %v993 = vld [vmem:[#allocation4 + $0x5ac] sm:$0xf]
    %v994 = vld [vmem:[#allocation4 + $0x5b0] sm:$0xf]
    %v995 = vld [vmem:[#allocation4 + $0x5b4] sm:$0xf]
    %v996 = vld [vmem:[#allocation4 + $0x5b8] sm:$0xf]
    %v997 = vld [vmem:[#allocation4 + $0x5bc] sm:$0xf]
    %v998 = vld [vmem:[#allocation4 + $0x5c0] sm:$0xf]
    %v999 = vld [vmem:[#allocation4 + $0x5c4] sm:$0xf]
    %v1000 = vld [vmem:[#allocation4 + $0x5c8] sm:$0xf]
    %v1001 = vld [vmem:[#allocation4 + $0x5cc] sm:$0xf]
    %v1002 = vld [vmem:[#allocation4 + $0x5d0] sm:$0xf]
    %v1003 = vld [vmem:[#allocation4 + $0x5d4] sm:$0xf]
    %v1004 = vld [vmem:[#allocation4 + $0x5d8] sm:$0xf]
    %v1005 = vld [vmem:[#allocation4 + $0x5dc] sm:$0xf]
    %v1006 = vld [vmem:[#allocation4 + $0x5e0] sm:$0xf]
    %v1007 = vld [vmem:[#allocation4 + $0x5e4] sm:$0xf]
    %v1008 = vld [vmem:[#allocation4 + $0x5e8] sm:$0xf]
    %v1009 = vld [vmem:[#allocation4 + $0x5ec] sm:$0xf]
    %v1010 = vld [vmem:[#allocation4 + $0x5f0] sm:$0xf]
    %v1011 = vld [vmem:[#allocation4 + $0x5f4] sm:$0xf]
    %v1012 = vld [vmem:[#allocation4 + $0x5f8] sm:$0xf]
    %v1013 = vld [vmem:[#allocation4 + $0x5fc] sm:$0xf]
    %v1014 = vld [vmem:[%s3] sm:$0x1]
    %v1016 = vlaneseq
    %v1017 = vshrl.u32 %v1016, 7
    %v1018 = vsub.s32 0, %v1017
    %v1019 = vrot.slane %v1014, %v1018
    %v1405 = vunpack.c.l.b16 %v630
    %v1406 = vunpack.c.l.b16 %v631
    %v1407 = vunpack.c.l.b16 %v632
    %v1408 = vunpack.c.l.b16 %v633
    %v1409 = vunpack.c.l.b16 %v634
    %v1410 = vunpack.c.l.b16 %v635
    %v1411 = vunpack.c.l.b16 %v636
    %v1412 = vunpack.c.l.b16 %v637
    %v1413 = vunpack.c.l.b16 %v638
    %v1414 = vunpack.c.l.b16 %v639
    %v1415 = vunpack.c.l.b16 %v640
    %v1416 = vunpack.c.l.b16 %v641
    %v1417 = vunpack.c.l.b16 %v642
    %v1418 = vunpack.c.l.b16 %v643
    %v1419 = vunpack.c.l.b16 %v644
    %v1420 = vunpack.c.l.b16 %v645
    %v1421 = vunpack.c.l.b16 %v646
    %v1422 = vunpack.c.l.b16 %v647
    %v1423 = vunpack.c.l.b16 %v648
    %v1424 = vunpack.c.l.b16 %v649
    %v1425 = vunpack.c.l.b16 %v650
    %v1426 = vunpack.c.l.b16 %v651
    %v1427 = vunpack.c.l.b16 %v652
    %v1428 = vunpack.c.l.b16 %v653
    %v1429 = vunpack.c.l.b16 %v654
    %v1430 = vunpack.c.l.b16 %v655
    %v1431 = vunpack.c.l.b16 %v656
    %v1432 = vunpack.c.l.b16 %v657
    %v1433 = vunpack.c.l.b16 %v658
    %v1434 = vunpack.c.l.b16 %v659
    %v1435 = vunpack.c.l.b16 %v660
    %v1436 = vunpack.c.l.b16 %v661
    %v1437 = vunpack.c.l.b16 %v662
    %v1438 = vunpack.c.l.b16 %v663
    %v1439 = vunpack.c.l.b16 %v664
    %v1440 = vunpack.c.l.b16 %v665
    %v1441 = vunpack.c.l.b16 %v666
    %v1442 = vunpack.c.l.b16 %v667
    %v1443 = vunpack.c.l.b16 %v668
    %v1444 = vunpack.c.l.b16 %v669
    %v1445 = vunpack.c.l.b16 %v670
    %v1446 = vunpack.c.l.b16 %v671
    %v1447 = vunpack.c.l.b16 %v672
    %v1448 = vunpack.c.l.b16 %v673
    %v1449 = vunpack.c.l.b16 %v674
    %v1450 = vunpack.c.l.b16 %v675
    %v1451 = vunpack.c.l.b16 %v676
    %v1452 = vunpack.c.l.b16 %v677
    %v1453 = vunpack.c.l.b16 %v678
    %v1454 = vunpack.c.l.b16 %v679
    %v1455 = vunpack.c.l.b16 %v680
    %v1456 = vunpack.c.l.b16 %v681
    %v1457 = vunpack.c.l.b16 %v682
    %v1458 = vunpack.c.l.b16 %v683
    %v1459 = vunpack.c.l.b16 %v684
    %v1460 = vunpack.c.l.b16 %v685
    %v1461 = vunpack.c.l.b16 %v686
    %v1462 = vunpack.c.l.b16 %v687
    %v1463 = vunpack.c.l.b16 %v688
    %v1464 = vunpack.c.l.b16 %v689
    %v1465 = vunpack.c.l.b16 %v690
    %v1466 = vunpack.c.l.b16 %v691
    %v1467 = vunpack.c.l.b16 %v692
    %v1468 = vunpack.c.l.b16 %v693
    %v1469 = vunpack.c.l.b16 %v694
    %v1470 = vunpack.c.l.b16 %v695
    %v1471 = vunpack.c.l.b16 %v696
    %v1472 = vunpack.c.l.b16 %v697
    %v1473 = vunpack.c.l.b16 %v698
    %v1474 = vunpack.c.l.b16 %v699
    %v1475 = vunpack.c.l.b16 %v700
    %v1476 = vunpack.c.l.b16 %v701
    %v1477 = vunpack.c.l.b16 %v702
    %v1478 = vunpack.c.l.b16 %v703
    %v1479 = vunpack.c.l.b16 %v704
    %v1480 = vunpack.c.l.b16 %v705
    %v1481 = vunpack.c.l.b16 %v706
    %v1482 = vunpack.c.l.b16 %v707
    %v1483 = vunpack.c.l.b16 %v708
    %v1484 = vunpack.c.l.b16 %v709
    %v1485 = vunpack.c.l.b16 %v710
    %v1486 = vunpack.c.l.b16 %v711
    %v1487 = vunpack.c.l.b16 %v712
    %v1488 = vunpack.c.l.b16 %v713
    %v1489 = vunpack.c.l.b16 %v714
    %v1490 = vunpack.c.l.b16 %v715
    %v1491 = vunpack.c.l.b16 %v716
    %v1492 = vunpack.c.l.b16 %v717
    %v1493 = vunpack.c.l.b16 %v718
    %v1494 = vunpack.c.l.b16 %v719
    %v1495 = vunpack.c.l.b16 %v720
    %v1496 = vunpack.c.l.b16 %v721
    %v1497 = vunpack.c.l.b16 %v722
    %v1498 = vunpack.c.l.b16 %v723
    %v1499 = vunpack.c.l.b16 %v724
    %v1500 = vunpack.c.l.b16 %v725
    %v1501 = vunpack.c.l.b16 %v726
    %v1502 = vunpack.c.l.b16 %v727
    %v1503 = vunpack.c.l.b16 %v728
    %v1504 = vunpack.c.l.b16 %v729
    %v1505 = vunpack.c.l.b16 %v730
    %v1506 = vunpack.c.l.b16 %v731
    %v1507 = vunpack.c.l.b16 %v732
    %v1508 = vunpack.c.l.b16 %v733
    %v1509 = vunpack.c.l.b16 %v734
    %v1510 = vunpack.c.l.b16 %v735
    %v1511 = vunpack.c.l.b16 %v736
    %v1512 = vunpack.c.l.b16 %v737
    %v1513 = vunpack.c.l.b16 %v738
    %v1514 = vunpack.c.l.b16 %v739
    %v1515 = vunpack.c.l.b16 %v740
    %v1516 = vunpack.c.l.b16 %v741
    %v1517 = vunpack.c.l.b16 %v742
    %v1518 = vunpack.c.l.b16 %v743
    %v1519 = vunpack.c.l.b16 %v744
    %v1520 = vunpack.c.l.b16 %v745
    %v1521 = vunpack.c.l.b16 %v746
    %v1522 = vunpack.c.l.b16 %v747
    %v1523 = vunpack.c.l.b16 %v748
    %v1524 = vunpack.c.l.b16 %v749
    %v1525 = vunpack.c.l.b16 %v750
    %v1526 = vunpack.c.l.b16 %v751
    %v1527 = vunpack.c.l.b16 %v752
    %v1528 = vunpack.c.l.b16 %v753
    %v1529 = vunpack.c.l.b16 %v754
    %v1530 = vunpack.c.l.b16 %v755
    %v1531 = vunpack.c.l.b16 %v756
    %v1532 = vunpack.c.l.b16 %v757
    %v1533 = vunpack.c.l.b16 %v758
    %v1534 = vunpack.c.l.b16 %v759
    %v1535 = vunpack.c.l.b16 %v760
    %v1536 = vunpack.c.l.b16 %v761
    %v1537 = vunpack.c.l.b16 %v762
    %v1538 = vunpack.c.l.b16 %v763
    %v1539 = vunpack.c.l.b16 %v764
    %v1540 = vunpack.c.l.b16 %v765
    %v1541 = vunpack.c.l.b16 %v766
    %v1542 = vunpack.c.l.b16 %v767
    %v1543 = vunpack.c.l.b16 %v768
    %v1544 = vunpack.c.l.b16 %v769
    %v1545 = vunpack.c.l.b16 %v770
    %v1546 = vunpack.c.l.b16 %v771
    %v1547 = vunpack.c.l.b16 %v772
    %v1548 = vunpack.c.l.b16 %v773
    %v1549 = vunpack.c.l.b16 %v774
    %v1550 = vunpack.c.l.b16 %v775
    %v1551 = vunpack.c.l.b16 %v776
    %v1552 = vunpack.c.l.b16 %v777
    %v1553 = vunpack.c.l.b16 %v778
    %v1554 = vunpack.c.l.b16 %v779
    %v1555 = vunpack.c.l.b16 %v780
    %v1556 = vunpack.c.l.b16 %v781
    %v1557 = vunpack.c.l.b16 %v782
    %v1558 = vunpack.c.l.b16 %v783
    %v1559 = vunpack.c.l.b16 %v784
    %v1560 = vunpack.c.l.b16 %v785
    %v1561 = vunpack.c.l.b16 %v786
    %v1562 = vunpack.c.l.b16 %v787
    %v1563 = vunpack.c.l.b16 %v788
    %v1564 = vunpack.c.l.b16 %v789
    %v1565 = vunpack.c.l.b16 %v790
    %v1566 = vunpack.c.l.b16 %v791
    %v1567 = vunpack.c.l.b16 %v792
    %v1568 = vunpack.c.l.b16 %v793
    %v1569 = vunpack.c.l.b16 %v794
    %v1570 = vunpack.c.l.b16 %v795
    %v1571 = vunpack.c.l.b16 %v796
    %v1572 = vunpack.c.l.b16 %v797
    %v1573 = vunpack.c.l.b16 %v798
    %v1574 = vunpack.c.l.b16 %v799
    %v1575 = vunpack.c.l.b16 %v800
    %v1576 = vunpack.c.l.b16 %v801
    %v1577 = vunpack.c.l.b16 %v802
    %v1578 = vunpack.c.l.b16 %v803
    %v1579 = vunpack.c.l.b16 %v804
    %v1580 = vunpack.c.l.b16 %v805
    %v1581 = vunpack.c.l.b16 %v806
    %v1582 = vunpack.c.l.b16 %v807
    %v1583 = vunpack.c.l.b16 %v808
    %v1584 = vunpack.c.l.b16 %v809
    %v1585 = vunpack.c.l.b16 %v810
    %v1586 = vunpack.c.l.b16 %v811
    %v1587 = vunpack.c.l.b16 %v812
    %v1588 = vunpack.c.l.b16 %v813
    %v1589 = vunpack.c.l.b16 %v814
    %v1590 = vunpack.c.l.b16 %v815
    %v1591 = vunpack.c.l.b16 %v816
    %v1592 = vunpack.c.l.b16 %v817
    %v1593 = vunpack.c.l.b16 %v818
    %v1594 = vunpack.c.l.b16 %v819
    %v1595 = vunpack.c.l.b16 %v820
    %v1596 = vunpack.c.l.b16 %v821
    %v1597 = vunpack.c.l.b16 %v822
    %v1598 = vunpack.c.l.b16 %v823
    %v1599 = vunpack.c.l.b16 %v824
    %v1600 = vunpack.c.l.b16 %v825
    %v1601 = vunpack.c.l.b16 %v826
    %v1602 = vunpack.c.l.b16 %v827
    %v1603 = vunpack.c.l.b16 %v828
    %v1604 = vunpack.c.l.b16 %v829
    %v1605 = vunpack.c.l.b16 %v830
    %v1606 = vunpack.c.l.b16 %v831
    %v1607 = vunpack.c.l.b16 %v832
    %v1608 = vunpack.c.l.b16 %v833
    %v1609 = vunpack.c.l.b16 %v834
    %v1610 = vunpack.c.l.b16 %v835
    %v1611 = vunpack.c.l.b16 %v836
    %v1612 = vunpack.c.l.b16 %v837
    %v1613 = vunpack.c.l.b16 %v838
    %v1614 = vunpack.c.l.b16 %v839
    %v1615 = vunpack.c.l.b16 %v840
    %v1616 = vunpack.c.l.b16 %v841
    %v1617 = vunpack.c.l.b16 %v842
    %v1618 = vunpack.c.l.b16 %v843
    %v1619 = vunpack.c.l.b16 %v844
    %v1620 = vunpack.c.l.b16 %v845
    %v1621 = vunpack.c.l.b16 %v846
    %v1622 = vunpack.c.l.b16 %v847
    %v1623 = vunpack.c.l.b16 %v848
    %v1624 = vunpack.c.l.b16 %v849
    %v1625 = vunpack.c.l.b16 %v850
    %v1626 = vunpack.c.l.b16 %v851
    %v1627 = vunpack.c.l.b16 %v852
    %v1628 = vunpack.c.l.b16 %v853
    %v1629 = vunpack.c.l.b16 %v854
    %v1630 = vunpack.c.l.b16 %v855
    %v1631 = vunpack.c.l.b16 %v856
    %v1632 = vunpack.c.l.b16 %v857
    %v1633 = vunpack.c.l.b16 %v858
    %v1634 = vunpack.c.l.b16 %v859
    %v1635 = vunpack.c.l.b16 %v860
    %v1636 = vunpack.c.l.b16 %v861
    %v1637 = vunpack.c.l.b16 %v862
    %v1638 = vunpack.c.l.b16 %v863
    %v1639 = vunpack.c.l.b16 %v864
    %v1640 = vunpack.c.l.b16 %v865
    %v1641 = vunpack.c.l.b16 %v866
    %v1642 = vunpack.c.l.b16 %v867
    %v1643 = vunpack.c.l.b16 %v868
    %v1644 = vunpack.c.l.b16 %v869
    %v1645 = vunpack.c.l.b16 %v870
    %v1646 = vunpack.c.l.b16 %v871
    %v1647 = vunpack.c.l.b16 %v872
    %v1648 = vunpack.c.l.b16 %v873
    %v1649 = vunpack.c.l.b16 %v874
    %v1650 = vunpack.c.l.b16 %v875
    %v1651 = vunpack.c.l.b16 %v876
    %v1652 = vunpack.c.l.b16 %v877
    %v1653 = vunpack.c.l.b16 %v878
    %v1654 = vunpack.c.l.b16 %v879
    %v1655 = vunpack.c.l.b16 %v880
    %v1656 = vunpack.c.l.b16 %v881
    %v1657 = vunpack.c.l.b16 %v882
    %v1658 = vunpack.c.l.b16 %v883
    %v1659 = vunpack.c.l.b16 %v884
    %v1660 = vunpack.c.l.b16 %v885
    %v1661 = vunpack.c.l.b16 %v886
    %v1662 = vunpack.c.l.b16 %v887
    %v1663 = vunpack.c.l.b16 %v888
    %v1664 = vunpack.c.l.b16 %v889
    %v1665 = vunpack.c.l.b16 %v890
    %v1666 = vunpack.c.l.b16 %v891
    %v1667 = vunpack.c.l.b16 %v892
    %v1668 = vunpack.c.l.b16 %v893
    %v1669 = vunpack.c.l.b16 %v894
    %v1670 = vunpack.c.l.b16 %v895
    %v1671 = vunpack.c.l.b16 %v896
    %v1672 = vunpack.c.l.b16 %v897
    %v1673 = vunpack.c.l.b16 %v898
    %v1674 = vunpack.c.l.b16 %v899
    %v1675 = vunpack.c.l.b16 %v900
    %v1676 = vunpack.c.l.b16 %v901
    %v1677 = vunpack.c.l.b16 %v902
    %v1678 = vunpack.c.l.b16 %v903
    %v1679 = vunpack.c.l.b16 %v904
    %v1680 = vunpack.c.l.b16 %v905
    %v1681 = vunpack.c.l.b16 %v906
    %v1682 = vunpack.c.l.b16 %v907
    %v1683 = vunpack.c.l.b16 %v908
    %v1684 = vunpack.c.l.b16 %v909
    %v1685 = vunpack.c.l.b16 %v910
    %v1686 = vunpack.c.l.b16 %v911
    %v1687 = vunpack.c.l.b16 %v912
    %v1688 = vunpack.c.l.b16 %v913
    %v1689 = vunpack.c.l.b16 %v914
    %v1690 = vunpack.c.l.b16 %v915
    %v1691 = vunpack.c.l.b16 %v916
    %v1692 = vunpack.c.l.b16 %v917
    %v1693 = vunpack.c.l.b16 %v918
    %v1694 = vunpack.c.l.b16 %v919
    %v1695 = vunpack.c.l.b16 %v920
    %v1696 = vunpack.c.l.b16 %v921
    %v1697 = vunpack.c.l.b16 %v922
    %v1698 = vunpack.c.l.b16 %v923
    %v1699 = vunpack.c.l.b16 %v924
    %v1700 = vunpack.c.l.b16 %v925
    %v1701 = vunpack.c.l.b16 %v926
    %v1702 = vunpack.c.l.b16 %v927
    %v1703 = vunpack.c.l.b16 %v928
    %v1704 = vunpack.c.l.b16 %v929
    %v1705 = vunpack.c.l.b16 %v930
    %v1706 = vunpack.c.l.b16 %v931
    %v1707 = vunpack.c.l.b16 %v932
    %v1708 = vunpack.c.l.b16 %v933
    %v1709 = vunpack.c.l.b16 %v934
    %v1710 = vunpack.c.l.b16 %v935
    %v1711 = vunpack.c.l.b16 %v936
    %v1712 = vunpack.c.l.b16 %v937
    %v1713 = vunpack.c.l.b16 %v938
    %v1714 = vunpack.c.l.b16 %v939
    %v1715 = vunpack.c.l.b16 %v940
    %v1716 = vunpack.c.l.b16 %v941
    %v1717 = vunpack.c.l.b16 %v942
    %v1718 = vunpack.c.l.b16 %v943
    %v1719 = vunpack.c.l.b16 %v944
    %v1720 = vunpack.c.l.b16 %v945
    %v1721 = vunpack.c.l.b16 %v946
    %v1722 = vunpack.c.l.b16 %v947
    %v1723 = vunpack.c.l.b16 %v948
    %v1724 = vunpack.c.l.b16 %v949
    %v1725 = vunpack.c.l.b16 %v950
    %v1726 = vunpack.c.l.b16 %v951
    %v1727 = vunpack.c.l.b16 %v952
    %v1728 = vunpack.c.l.b16 %v953
    %v1729 = vunpack.c.l.b16 %v954
    %v1730 = vunpack.c.l.b16 %v955
    %v1731 = vunpack.c.l.b16 %v956
    %v1732 = vunpack.c.l.b16 %v957
    %v1733 = vunpack.c.l.b16 %v958
    %v1734 = vunpack.c.l.b16 %v959
    %v1735 = vunpack.c.l.b16 %v960
    %v1736 = vunpack.c.l.b16 %v961
    %v1737 = vunpack.c.l.b16 %v962
    %v1738 = vunpack.c.l.b16 %v963
    %v1739 = vunpack.c.l.b16 %v964
    %v1740 = vunpack.c.l.b16 %v965
    %v1741 = vunpack.c.l.b16 %v966
    %v1742 = vunpack.c.l.b16 %v967
    %v1743 = vunpack.c.l.b16 %v968
    %v1744 = vunpack.c.l.b16 %v969
    %v1745 = vunpack.c.l.b16 %v970
    %v1746 = vunpack.c.l.b16 %v971
    %v1747 = vunpack.c.l.b16 %v972
    %v1748 = vunpack.c.l.b16 %v973
    %v1749 = vunpack.c.l.b16 %v974
    %v1750 = vunpack.c.l.b16 %v975
    %v1751 = vunpack.c.l.b16 %v976
    %v1752 = vunpack.c.l.b16 %v977
    %v1753 = vunpack.c.l.b16 %v978
    %v1754 = vunpack.c.l.b16 %v979
    %v1755 = vunpack.c.l.b16 %v980
    %v1756 = vunpack.c.l.b16 %v981
    %v1757 = vunpack.c.l.b16 %v982
    %v1758 = vunpack.c.l.b16 %v983
    %v1759 = vunpack.c.l.b16 %v984
    %v1760 = vunpack.c.l.b16 %v985
    %v1761 = vunpack.c.l.b16 %v986
    %v1762 = vunpack.c.l.b16 %v987
    %v1763 = vunpack.c.l.b16 %v988
    %v1764 = vunpack.c.l.b16 %v989
    %v1765 = vunpack.c.l.b16 %v990
    %v1766 = vunpack.c.l.b16 %v991
    %v1767 = vunpack.c.l.b16 %v992
    %v1768 = vunpack.c.l.b16 %v993
    %v1769 = vunpack.c.l.b16 %v994
    %v1770 = vunpack.c.l.b16 %v995
    %v1771 = vunpack.c.l.b16 %v996
    %v1772 = vunpack.c.l.b16 %v997
    %v1773 = vunpack.c.l.b16 %v998
    %v1774 = vunpack.c.l.b16 %v999
    %v1775 = vunpack.c.l.b16 %v1000
    %v1776 = vunpack.c.l.b16 %v1001
    %v1777 = vunpack.c.l.b16 %v1002
    %v1778 = vunpack.c.l.b16 %v1003
    %v1779 = vunpack.c.l.b16 %v1004
    %v1780 = vunpack.c.l.b16 %v1005
    %v1781 = vunpack.c.l.b16 %v1006
    %v1782 = vunpack.c.l.b16 %v1007
    %v1783 = vunpack.c.l.b16 %v1008
    %v1784 = vunpack.c.l.b16 %v1009
    %v1785 = vunpack.c.l.b16 %v1010
    %v1786 = vunpack.c.l.b16 %v1011
    %v1787 = vunpack.c.l.b16 %v1012
    %v1788 = vunpack.c.l.b16 %v1013
    %v1789 = vpack.c.b16 %v1406, %v1405
    %v1790 = vpack.c.b16 %v1408, %v1407
    %v1791 = vpack.c.b16 %v1410, %v1409
    %v1792 = vpack.c.b16 %v1412, %v1411
    %v1793 = vpack.c.b16 %v1414, %v1413
    %v1794 = vpack.c.b16 %v1416, %v1415
    %v1795 = vpack.c.b16 %v1418, %v1417
    %v1796 = vpack.c.b16 %v1420, %v1419
    %v1797 = vpack.c.b16 %v1422, %v1421
    %v1798 = vpack.c.b16 %v1424, %v1423
    %v1799 = vpack.c.b16 %v1426, %v1425
    %v1800 = vpack.c.b16 %v1428, %v1427
    %v1801 = vpack.c.b16 %v1430, %v1429
    %v1802 = vpack.c.b16 %v1432, %v1431
    %v1803 = vpack.c.b16 %v1434, %v1433
    %v1804 = vpack.c.b16 %v1436, %v1435
    %v1805 = vpack.c.b16 %v1438, %v1437
    %v1806 = vpack.c.b16 %v1440, %v1439
    %v1807 = vpack.c.b16 %v1442, %v1441
    %v1808 = vpack.c.b16 %v1444, %v1443
    %v1809 = vpack.c.b16 %v1446, %v1445
    %v1810 = vpack.c.b16 %v1448, %v1447
    %v1811 = vpack.c.b16 %v1450, %v1449
    %v1812 = vpack.c.b16 %v1452, %v1451
    %v1813 = vpack.c.b16 %v1454, %v1453
    %v1814 = vpack.c.b16 %v1456, %v1455
    %v1815 = vpack.c.b16 %v1458, %v1457
    %v1816 = vpack.c.b16 %v1460, %v1459
    %v1817 = vpack.c.b16 %v1462, %v1461
    %v1818 = vpack.c.b16 %v1464, %v1463
    %v1819 = vpack.c.b16 %v1466, %v1465
    %v1820 = vpack.c.b16 %v1468, %v1467
    %v1821 = vpack.c.b16 %v1470, %v1469
    %v1822 = vpack.c.b16 %v1472, %v1471
    %v1823 = vpack.c.b16 %v1474, %v1473
    %v1824 = vpack.c.b16 %v1476, %v1475
    %v1825 = vpack.c.b16 %v1478, %v1477
    %v1826 = vpack.c.b16 %v1480, %v1479
    %v1827 = vpack.c.b16 %v1482, %v1481
    %v1828 = vpack.c.b16 %v1484, %v1483
    %v1829 = vpack.c.b16 %v1486, %v1485
    %v1830 = vpack.c.b16 %v1488, %v1487
    %v1831 = vpack.c.b16 %v1490, %v1489
    %v1832 = vpack.c.b16 %v1492, %v1491
    %v1833 = vpack.c.b16 %v1494, %v1493
    %v1834 = vpack.c.b16 %v1496, %v1495
    %v1835 = vpack.c.b16 %v1498, %v1497
    %v1836 = vpack.c.b16 %v1500, %v1499
    %v1837 = vpack.c.b16 %v1502, %v1501
    %v1838 = vpack.c.b16 %v1504, %v1503
    %v1839 = vpack.c.b16 %v1506, %v1505
    %v1840 = vpack.c.b16 %v1508, %v1507
    %v1841 = vpack.c.b16 %v1510, %v1509
    %v1842 = vpack.c.b16 %v1512, %v1511
    %v1843 = vpack.c.b16 %v1514, %v1513
    %v1844 = vpack.c.b16 %v1516, %v1515
    %v1845 = vpack.c.b16 %v1518, %v1517
    %v1846 = vpack.c.b16 %v1520, %v1519
    %v1847 = vpack.c.b16 %v1522, %v1521
    %v1848 = vpack.c.b16 %v1524, %v1523
    %v1849 = vpack.c.b16 %v1526, %v1525
    %v1850 = vpack.c.b16 %v1528, %v1527
    %v1851 = vpack.c.b16 %v1530, %v1529
    %v1852 = vpack.c.b16 %v1532, %v1531
    %v1853 = vpack.c.b16 %v1534, %v1533
    %v1854 = vpack.c.b16 %v1536, %v1535
    %v1855 = vpack.c.b16 %v1538, %v1537
    %v1856 = vpack.c.b16 %v1540, %v1539
    %v1857 = vpack.c.b16 %v1542, %v1541
    %v1858 = vpack.c.b16 %v1544, %v1543
    %v1859 = vpack.c.b16 %v1546, %v1545
    %v1860 = vpack.c.b16 %v1548, %v1547
    %v1861 = vpack.c.b16 %v1550, %v1549
    %v1862 = vpack.c.b16 %v1552, %v1551
    %v1863 = vpack.c.b16 %v1554, %v1553
    %v1864 = vpack.c.b16 %v1556, %v1555
    %v1865 = vpack.c.b16 %v1558, %v1557
    %v1866 = vpack.c.b16 %v1560, %v1559
    %v1867 = vpack.c.b16 %v1562, %v1561
    %v1868 = vpack.c.b16 %v1564, %v1563
    %v1869 = vpack.c.b16 %v1566, %v1565
    %v1870 = vpack.c.b16 %v1568, %v1567
    %v1871 = vpack.c.b16 %v1570, %v1569
    %v1872 = vpack.c.b16 %v1572, %v1571
    %v1873 = vpack.c.b16 %v1574, %v1573
    %v1874 = vpack.c.b16 %v1576, %v1575
    %v1875 = vpack.c.b16 %v1578, %v1577
    %v1876 = vpack.c.b16 %v1580, %v1579
    %v1877 = vpack.c.b16 %v1582, %v1581
    %v1878 = vpack.c.b16 %v1584, %v1583
    %v1879 = vpack.c.b16 %v1586, %v1585
    %v1880 = vpack.c.b16 %v1588, %v1587
    %v1881 = vpack.c.b16 %v1590, %v1589
    %v1882 = vpack.c.b16 %v1592, %v1591
    %v1883 = vpack.c.b16 %v1594, %v1593
    %v1884 = vpack.c.b16 %v1596, %v1595
    %v1885 = vpack.c.b16 %v1598, %v1597
    %v1886 = vpack.c.b16 %v1600, %v1599
    %v1887 = vpack.c.b16 %v1602, %v1601
    %v1888 = vpack.c.b16 %v1604, %v1603
    %v1889 = vpack.c.b16 %v1606, %v1605
    %v1890 = vpack.c.b16 %v1608, %v1607
    %v1891 = vpack.c.b16 %v1610, %v1609
    %v1892 = vpack.c.b16 %v1612, %v1611
    %v1893 = vpack.c.b16 %v1614, %v1613
    %v1894 = vpack.c.b16 %v1616, %v1615
    %v1895 = vpack.c.b16 %v1618, %v1617
    %v1896 = vpack.c.b16 %v1620, %v1619
    %v1897 = vpack.c.b16 %v1622, %v1621
    %v1898 = vpack.c.b16 %v1624, %v1623
    %v1899 = vpack.c.b16 %v1626, %v1625
    %v1900 = vpack.c.b16 %v1628, %v1627
    %v1901 = vpack.c.b16 %v1630, %v1629
    %v1902 = vpack.c.b16 %v1632, %v1631
    %v1903 = vpack.c.b16 %v1634, %v1633
    %v1904 = vpack.c.b16 %v1636, %v1635
    %v1905 = vpack.c.b16 %v1638, %v1637
    %v1906 = vpack.c.b16 %v1640, %v1639
    %v1907 = vpack.c.b16 %v1642, %v1641
    %v1908 = vpack.c.b16 %v1644, %v1643
    %v1909 = vpack.c.b16 %v1646, %v1645
    %v1910 = vpack.c.b16 %v1648, %v1647
    %v1911 = vpack.c.b16 %v1650, %v1649
    %v1912 = vpack.c.b16 %v1652, %v1651
    %v1913 = vpack.c.b16 %v1654, %v1653
    %v1914 = vpack.c.b16 %v1656, %v1655
    %v1915 = vpack.c.b16 %v1658, %v1657
    %v1916 = vpack.c.b16 %v1660, %v1659
    %v1917 = vpack.c.b16 %v1662, %v1661
    %v1918 = vpack.c.b16 %v1664, %v1663
    %v1919 = vpack.c.b16 %v1666, %v1665
    %v1920 = vpack.c.b16 %v1668, %v1667
    %v1921 = vpack.c.b16 %v1670, %v1669
    %v1922 = vpack.c.b16 %v1672, %v1671
    %v1923 = vpack.c.b16 %v1674, %v1673
    %v1924 = vpack.c.b16 %v1676, %v1675
    %v1925 = vpack.c.b16 %v1678, %v1677
    %v1926 = vpack.c.b16 %v1680, %v1679
    %v1927 = vpack.c.b16 %v1682, %v1681
    %v1928 = vpack.c.b16 %v1684, %v1683
    %v1929 = vpack.c.b16 %v1686, %v1685
    %v1930 = vpack.c.b16 %v1688, %v1687
    %v1931 = vpack.c.b16 %v1690, %v1689
    %v1932 = vpack.c.b16 %v1692, %v1691
    %v1933 = vpack.c.b16 %v1694, %v1693
    %v1934 = vpack.c.b16 %v1696, %v1695
    %v1935 = vpack.c.b16 %v1698, %v1697
    %v1936 = vpack.c.b16 %v1700, %v1699
    %v1937 = vpack.c.b16 %v1702, %v1701
    %v1938 = vpack.c.b16 %v1704, %v1703
    %v1939 = vpack.c.b16 %v1706, %v1705
    %v1940 = vpack.c.b16 %v1708, %v1707
    %v1941 = vpack.c.b16 %v1710, %v1709
    %v1942 = vpack.c.b16 %v1712, %v1711
    %v1943 = vpack.c.b16 %v1714, %v1713
    %v1944 = vpack.c.b16 %v1716, %v1715
    %v1945 = vpack.c.b16 %v1718, %v1717
    %v1946 = vpack.c.b16 %v1720, %v1719
    %v1947 = vpack.c.b16 %v1722, %v1721
    %v1948 = vpack.c.b16 %v1724, %v1723
    %v1949 = vpack.c.b16 %v1726, %v1725
    %v1950 = vpack.c.b16 %v1728, %v1727
    %v1951 = vpack.c.b16 %v1730, %v1729
    %v1952 = vpack.c.b16 %v1732, %v1731
    %v1953 = vpack.c.b16 %v1734, %v1733
    %v1954 = vpack.c.b16 %v1736, %v1735
    %v1955 = vpack.c.b16 %v1738, %v1737
    %v1956 = vpack.c.b16 %v1740, %v1739
    %v1957 = vpack.c.b16 %v1742, %v1741
    %v1958 = vpack.c.b16 %v1744, %v1743
    %v1959 = vpack.c.b16 %v1746, %v1745
    %v1960 = vpack.c.b16 %v1748, %v1747
    %v1961 = vpack.c.b16 %v1750, %v1749
    %v1962 = vpack.c.b16 %v1752, %v1751
    %v1963 = vpack.c.b16 %v1754, %v1753
    %v1964 = vpack.c.b16 %v1756, %v1755
    %v1965 = vpack.c.b16 %v1758, %v1757
    %v1966 = vpack.c.b16 %v1760, %v1759
    %v1967 = vpack.c.b16 %v1762, %v1761
    %v1968 = vpack.c.b16 %v1764, %v1763
    %v1969 = vpack.c.b16 %v1766, %v1765
    %v1970 = vpack.c.b16 %v1768, %v1767
    %v1971 = vpack.c.b16 %v1770, %v1769
    %v1972 = vpack.c.b16 %v1772, %v1771
    %v1973 = vpack.c.b16 %v1774, %v1773
    %v1974 = vpack.c.b16 %v1776, %v1775
    %v1975 = vpack.c.b16 %v1778, %v1777
    %v1976 = vpack.c.b16 %v1780, %v1779
    %v1977 = vpack.c.b16 %v1782, %v1781
    %v1978 = vpack.c.b16 %v1784, %v1783
    %v1979 = vpack.c.b16 %v1786, %v1785
    %v1980 = vpack.c.b16 %v1788, %v1787
    %2173 = vmatprep.subr.bf16.mxu0 0
    %2174 = vmatpush1.bf16.msra.mxu0 %v1789
    %2175 = vmatprep.subr.bf16.mxu0 0
    %2176 = vmatpush1.bf16.msra.mxu0 %v1790
    %2177 = vmatprep.subr.bf16.mxu0 0
    %2178 = vmatpush1.bf16.msra.mxu0 %v1791
    %2179 = vmatprep.subr.bf16.mxu0 0
    %2180 = vmatpush1.bf16.msra.mxu0 %v1792
    %2181 = vmatprep.subr.bf16.mxu0 0
    %2182 = vmatpush1.bf16.msra.mxu0 %v1793
    %2183 = vmatprep.subr.bf16.mxu0 0
    %2184 = vmatpush1.bf16.msra.mxu0 %v1794
    %2185 = vmatprep.subr.bf16.mxu0 0
    %2186 = vmatpush1.bf16.msra.mxu0 %v1795
    %2187 = vmatprep.subr.bf16.mxu0 0
    %2188 = vmatpush1.bf16.msra.mxu0 %v1796
    %2189 = vmatprep.subr.bf16.mxu0 0
    %2190 = vmatpush1.bf16.msra.mxu0 %v1797
    %2191 = vmatprep.subr.bf16.mxu0 0
    %2192 = vmatpush1.bf16.msra.mxu0 %v1798
    %2193 = vmatprep.subr.bf16.mxu0 0
    %2194 = vmatpush1.bf16.msra.mxu0 %v1799
    %2195 = vmatprep.subr.bf16.mxu0 0
    %2196 = vmatpush1.bf16.msra.mxu0 %v1800
    %2197 = vmatprep.subr.bf16.mxu0 0
    %2198 = vmatpush1.bf16.msra.mxu0 %v1801
    %2199 = vmatprep.subr.bf16.mxu0 0
    %2200 = vmatpush1.bf16.msra.mxu0 %v1802
    %2201 = vmatprep.subr.bf16.mxu0 0
    %2202 = vmatpush1.bf16.msra.mxu0 %v1803
    %2203 = vmatprep.subr.bf16.mxu0 0
    %2204 = vmatpush1.bf16.msra.mxu0 %v1804
    %2205 = vmatprep.mubr.bf16.mxu0 %v443
    %2206 = vmatmul.mubr.bf16.gmra.mrb[0].mxu0 %v442
    %v2207 = vpop.f32.mrb[0].mxu0
    %v2208 = vadd.f32 %v1019, %v2207
    %v2209 = vpop.f32.mrb[0].mxu0
    %v2210 = vpop.f32.mrb[0].mxu0
    %v2211 = vpop.f32.mrb[0].mxu0
    %2212 = vdwg.mxu0
    %2213 = vmatprep.subr.bf16.mxu0 0
    %2214 = vmatpush1.bf16.msra.mxu0 %v1805
    %2215 = vmatprep.subr.bf16.mxu0 0
    %2216 = vmatpush1.bf16.msra.mxu0 %v1806
    %2217 = vmatprep.subr.bf16.mxu0 0
    %2218 = vmatpush1.bf16.msra.mxu0 %v1807
    %2219 = vmatprep.subr.bf16.mxu0 0
    %2220 = vmatpush1.bf16.msra.mxu0 %v1808
    %2221 = vmatprep.subr.bf16.mxu0 0
    %2222 = vmatpush1.bf16.msra.mxu0 %v1809
    %2223 = vmatprep.subr.bf16.mxu0 0
    %2224 = vmatpush1.bf16.msra.mxu0 %v1810
    %2225 = vmatprep.subr.bf16.mxu0 0
    %2226 = vmatpush1.bf16.msra.mxu0 %v1811
    %2227 = vmatprep.subr.bf16.mxu0 0
    %2228 = vmatpush1.bf16.msra.mxu0 %v1812
    %2229 = vmatprep.subr.bf16.mxu0 0
    %2230 = vmatpush1.bf16.msra.mxu0 %v1813
    %2231 = vmatprep.subr.bf16.mxu0 0
    %2232 = vmatpush1.bf16.msra.mxu0 %v1814
    %2233 = vmatprep.subr.bf16.mxu0 0
    %2234 = vmatpush1.bf16.msra.mxu0 %v1815
    %2235 = vmatprep.subr.bf16.mxu0 0
    %2236 = vmatpush1.bf16.msra.mxu0 %v1816
    %2237 = vmatprep.subr.bf16.mxu0 0
    %2238 = vmatpush1.bf16.msra.mxu0 %v1817
    %2239 = vmatprep.subr.bf16.mxu0 0
    %2240 = vmatpush1.bf16.msra.mxu0 %v1818
    %2241 = vmatprep.subr.bf16.mxu0 0
    %2242 = vmatpush1.bf16.msra.mxu0 %v1819
    %2243 = vmatprep.subr.bf16.mxu0 0
    %2244 = vmatpush1.bf16.msra.mxu0 %v1820
    %2245 = vmatprep.mubr.bf16.mxu0 %v445
    %2246 = vmatmul.mubr.bf16.gmra.mrb[0].mxu0 %v444
    %v2247 = vpop.f32.mrb[0].mxu0
    %v2248 = vadd.f32 %v2208, %v2247
    %v2249 = vpop.f32.mrb[0].mxu0
    %v2250 = vpop.f32.mrb[0].mxu0
    %v2251 = vpop.f32.mrb[0].mxu0
    %2252 = vdwg.mxu0
    %2253 = vmatprep.subr.bf16.mxu0 0
    %2254 = vmatpush1.bf16.msra.mxu0 %v1821
    %2255 = vmatprep.subr.bf16.mxu0 0
    %2256 = vmatpush1.bf16.msra.mxu0 %v1822
    %2257 = vmatprep.subr.bf16.mxu0 0
    %2258 = vmatpush1.bf16.msra.mxu0 %v1823
    %2259 = vmatprep.subr.bf16.mxu0 0
    %2260 = vmatpush1.bf16.msra.mxu0 %v1824
    %2261 = vmatprep.subr.bf16.mxu0 0
    %2262 = vmatpush1.bf16.msra.mxu0 %v1825
    %2263 = vmatprep.subr.bf16.mxu0 0
    %2264 = vmatpush1.bf16.msra.mxu0 %v1826
    %2265 = vmatprep.subr.bf16.mxu0 0
    %2266 = vmatpush1.bf16.msra.mxu0 %v1827
    %2267 = vmatprep.subr.bf16.mxu0 0
    %2268 = vmatpush1.bf16.msra.mxu0 %v1828
    %2269 = vmatprep.subr.bf16.mxu0 0
    %2270 = vmatpush1.bf16.msra.mxu0 %v1829
    %2271 = vmatprep.subr.bf16.mxu0 0
    %2272 = vmatpush1.bf16.msra.mxu0 %v1830
    %2273 = vmatprep.subr.bf16.mxu0 0
    %2274 = vmatpush1.bf16.msra.mxu0 %v1831
    %2275 = vmatprep.subr.bf16.mxu0 0
    %2276 = vmatpush1.bf16.msra.mxu0 %v1832
    %2277 = vmatprep.subr.bf16.mxu0 0
    %2278 = vmatpush1.bf16.msra.mxu0 %v1833
    %2279 = vmatprep.subr.bf16.mxu0 0
    %2280 = vmatpush1.bf16.msra.mxu0 %v1834
    %2281 = vmatprep.subr.bf16.mxu0 0
    %2282 = vmatpush1.bf16.msra.mxu0 %v1835
    %2283 = vmatprep.subr.bf16.mxu0 0
    %2284 = vmatpush1.bf16.msra.mxu0 %v1836
    %2285 = vmatprep.mubr.bf16.mxu0 %v447
    %2286 = vmatmul.mubr.bf16.gmra.mrb[0].mxu0 %v446
    %v2287 = vpop.f32.mrb[0].mxu0
    %v2288 = vadd.f32 %v2248, %v2287
    %v2289 = vpop.f32.mrb[0].mxu0
    %v2290 = vpop.f32.mrb[0].mxu0
    %v2291 = vpop.f32.mrb[0].mxu0
    %2292 = vdwg.mxu0
    %2293 = vmatprep.subr.bf16.mxu0 0
    %2294 = vmatpush1.bf16.msra.mxu0 %v1837
    %2295 = vmatprep.subr.bf16.mxu0 0
    %2296 = vmatpush1.bf16.msra.mxu0 %v1838
    %2297 = vmatprep.subr.bf16.mxu0 0
    %2298 = vmatpush1.bf16.msra.mxu0 %v1839
    %2299 = vmatprep.subr.bf16.mxu0 0
    %2300 = vmatpush1.bf16.msra.mxu0 %v1840
    %2301 = vmatprep.subr.bf16.mxu0 0
    %2302 = vmatpush1.bf16.msra.mxu0 %v1841
    %2303 = vmatprep.subr.bf16.mxu0 0
    %2304 = vmatpush1.bf16.msra.mxu0 %v1842
    %2305 = vmatprep.subr.bf16.mxu0 0
    %2306 = vmatpush1.bf16.msra.mxu0 %v1843
    %2307 = vmatprep.subr.bf16.mxu0 0
    %2308 = vmatpush1.bf16.msra.mxu0 %v1844
    %2309 = vmatprep.subr.bf16.mxu0 0
    %2310 = vmatpush1.bf16.msra.mxu0 %v1845
    %2311 = vmatprep.subr.bf16.mxu0 0
    %2312 = vmatpush1.bf16.msra.mxu0 %v1846
    %2313 = vmatprep.subr.bf16.mxu0 0
    %2314 = vmatpush1.bf16.msra.mxu0 %v1847
    %2315 = vmatprep.subr.bf16.mxu0 0
    %2316 = vmatpush1.bf16.msra.mxu0 %v1848
    %2317 = vmatprep.subr.bf16.mxu0 0
    %2318 = vmatpush1.bf16.msra.mxu0 %v1849
    %2319 = vmatprep.subr.bf16.mxu0 0
    %2320 = vmatpush1.bf16.msra.mxu0 %v1850
    %2321 = vmatprep.subr.bf16.mxu0 0
    %2322 = vmatpush1.bf16.msra.mxu0 %v1851
    %2323 = vmatprep.subr.bf16.mxu0 0
    %2324 = vmatpush1.bf16.msra.mxu0 %v1852
    %2325 = vmatprep.mubr.bf16.mxu0 %v449
    %2326 = vmatmul.mubr.bf16.gmra.mrb[0].mxu0 %v448
    %v2327 = vpop.f32.mrb[0].mxu0
    %v2328 = vadd.f32 %v2288, %v2327
    %v2329 = vpop.f32.mrb[0].mxu0
    %v2330 = vpop.f32.mrb[0].mxu0
    %v2331 = vpop.f32.mrb[0].mxu0
    %2332 = vdwg.mxu0
    %2333 = vmatprep.subr.bf16.mxu0 0
    %2334 = vmatpush1.bf16.msra.mxu0 %v1853
    %2335 = vmatprep.subr.bf16.mxu0 0
    %2336 = vmatpush1.bf16.msra.mxu0 %v1854
    %2337 = vmatprep.subr.bf16.mxu0 0
    %2338 = vmatpush1.bf16.msra.mxu0 %v1855
    %2339 = vmatprep.subr.bf16.mxu0 0
    %2340 = vmatpush1.bf16.msra.mxu0 %v1856
    %2341 = vmatprep.subr.bf16.mxu0 0
    %2342 = vmatpush1.bf16.msra.mxu0 %v1857
    %2343 = vmatprep.subr.bf16.mxu0 0
    %2344 = vmatpush1.bf16.msra.mxu0 %v1858
    %2345 = vmatprep.subr.bf16.mxu0 0
    %2346 = vmatpush1.bf16.msra.mxu0 %v1859
    %2347 = vmatprep.subr.bf16.mxu0 0
    %2348 = vmatpush1.bf16.msra.mxu0 %v1860
    %2349 = vmatprep.subr.bf16.mxu0 0
    %2350 = vmatpush1.bf16.msra.mxu0 %v1861
    %2351 = vmatprep.subr.bf16.mxu0 0
    %2352 = vmatpush1.bf16.msra.mxu0 %v1862
    %2353 = vmatprep.subr.bf16.mxu0 0
    %2354 = vmatpush1.bf16.msra.mxu0 %v1863
    %2355 = vmatprep.subr.bf16.mxu0 0
    %2356 = vmatpush1.bf16.msra.mxu0 %v1864
    %2357 = vmatprep.subr.bf16.mxu0 0
    %2358 = vmatpush1.bf16.msra.mxu0 %v1865
    %2359 = vmatprep.subr.bf16.mxu0 0
    %2360 = vmatpush1.bf16.msra.mxu0 %v1866
    %2361 = vmatprep.subr.bf16.mxu0 0
    %2362 = vmatpush1.bf16.msra.mxu0 %v1867
    %2363 = vmatprep.subr.bf16.mxu0 0
    %2364 = vmatpush1.bf16.msra.mxu0 %v1868
    %2365 = vmatprep.mubr.bf16.mxu0 %v451
    %2366 = vmatmul.mubr.bf16.gmra.mrb[0].mxu0 %v450
    %v2367 = vpop.f32.mrb[0].mxu0
    %v2368 = vadd.f32 %v2328, %v2367
    %v2369 = vpop.f32.mrb[0].mxu0
    %v2370 = vpop.f32.mrb[0].mxu0
    %v2371 = vpop.f32.mrb[0].mxu0
    %2372 = vdwg.mxu0
    %2373 = vmatprep.subr.bf16.mxu0 0
    %2374 = vmatpush1.bf16.msra.mxu0 %v1869
    %2375 = vmatprep.subr.bf16.mxu0 0
    %2376 = vmatpush1.bf16.msra.mxu0 %v1870
    %2377 = vmatprep.subr.bf16.mxu0 0
    %2378 = vmatpush1.bf16.msra.mxu0 %v1871
    %2379 = vmatprep.subr.bf16.mxu0 0
    %2380 = vmatpush1.bf16.msra.mxu0 %v1872
    %2381 = vmatprep.subr.bf16.mxu0 0
    %2382 = vmatpush1.bf16.msra.mxu0 %v1873
    %2383 = vmatprep.subr.bf16.mxu0 0
    %2384 = vmatpush1.bf16.msra.mxu0 %v1874
    %2385 = vmatprep.subr.bf16.mxu0 0
    %2386 = vmatpush1.bf16.msra.mxu0 %v1875
    %2387 = vmatprep.subr.bf16.mxu0 0
    %2388 = vmatpush1.bf16.msra.mxu0 %v1876
    %2389 = vmatprep.subr.bf16.mxu0 0
    %2390 = vmatpush1.bf16.msra.mxu0 %v1877
    %2391 = vmatprep.subr.bf16.mxu0 0
    %2392 = vmatpush1.bf16.msra.mxu0 %v1878
    %2393 = vmatprep.subr.bf16.mxu0 0
    %2394 = vmatpush1.bf16.msra.mxu0 %v1879
    %2395 = vmatprep.subr.bf16.mxu0 0
    %2396 = vmatpush1.bf16.msra.mxu0 %v1880
    %2397 = vmatprep.subr.bf16.mxu0 0
    %2398 = vmatpush1.bf16.msra.mxu0 %v1881
    %2399 = vmatprep.subr.bf16.mxu0 0
    %2400 = vmatpush1.bf16.msra.mxu0 %v1882
    %2401 = vmatprep.subr.bf16.mxu0 0
    %2402 = vmatpush1.bf16.msra.mxu0 %v1883
    %2403 = vmatprep.subr.bf16.mxu0 0
    %2404 = vmatpush1.bf16.msra.mxu0 %v1884
    %2405 = vmatprep.mubr.bf16.mxu0 %v453
    %2406 = vmatmul.mubr.bf16.gmra.mrb[0].mxu0 %v452
    %v2407 = vpop.f32.mrb[0].mxu0
    %v2408 = vadd.f32 %v2368, %v2407
    %v2409 = vpop.f32.mrb[0].mxu0
    %v2410 = vpop.f32.mrb[0].mxu0
    %v2411 = vpop.f32.mrb[0].mxu0
    %2412 = vdwg.mxu0
    %2413 = vmatprep.subr.bf16.mxu0 0
    %2414 = vmatpush1.bf16.msra.mxu0 %v1885
    %2415 = vmatprep.subr.bf16.mxu0 0
    %2416 = vmatpush1.bf16.msra.mxu0 %v1886
    %2417 = vmatprep.subr.bf16.mxu0 0
    %2418 = vmatpush1.bf16.msra.mxu0 %v1887
    %2419 = vmatprep.subr.bf16.mxu0 0
    %2420 = vmatpush1.bf16.msra.mxu0 %v1888
    %2421 = vmatprep.subr.bf16.mxu0 0
    %2422 = vmatpush1.bf16.msra.mxu0 %v1889
    %2423 = vmatprep.subr.bf16.mxu0 0
    %2424 = vmatpush1.bf16.msra.mxu0 %v1890
    %2425 = vmatprep.subr.bf16.mxu0 0
    %2426 = vmatpush1.bf16.msra.mxu0 %v1891
    %2427 = vmatprep.subr.bf16.mxu0 0
    %2428 = vmatpush1.bf16.msra.mxu0 %v1892
    %2429 = vmatprep.subr.bf16.mxu0 0
    %2430 = vmatpush1.bf16.msra.mxu0 %v1893
    %2431 = vmatprep.subr.bf16.mxu0 0
    %2432 = vmatpush1.bf16.msra.mxu0 %v1894
    %2433 = vmatprep.subr.bf16.mxu0 0
    %2434 = vmatpush1.bf16.msra.mxu0 %v1895
    %2435 = vmatprep.subr.bf16.mxu0 0
    %2436 = vmatpush1.bf16.msra.mxu0 %v1896
    %2437 = vmatprep.subr.bf16.mxu0 0
    %2438 = vmatpush1.bf16.msra.mxu0 %v1897
    %2439 = vmatprep.subr.bf16.mxu0 0
    %2440 = vmatpush1.bf16.msra.mxu0 %v1898
    %2441 = vmatprep.subr.bf16.mxu0 0
    %2442 = vmatpush1.bf16.msra.mxu0 %v1899
    %2443 = vmatprep.subr.bf16.mxu0 0
    %2444 = vmatpush1.bf16.msra.mxu0 %v1900
    %2445 = vmatprep.mubr.bf16.mxu0 %v455
    %2446 = vmatmul.mubr.bf16.gmra.mrb[0].mxu0 %v454
    %v2447 = vpop.f32.mrb[0].mxu0
    %v2448 = vadd.f32 %v2408, %v2447
    %v2449 = vpop.f32.mrb[0].mxu0
    %v2450 = vpop.f32.mrb[0].mxu0
    %v2451 = vpop.f32.mrb[0].mxu0
    %2452 = vdwg.mxu0
    %2453 = vmatprep.subr.bf16.mxu0 0
    %2454 = vmatpush1.bf16.msra.mxu0 %v1901
    %2455 = vmatprep.subr.bf16.mxu0 0
    %2456 = vmatpush1.bf16.msra.mxu0 %v1902
    %2457 = vmatprep.subr.bf16.mxu0 0
    %2458 = vmatpush1.bf16.msra.mxu0 %v1903
    %2459 = vmatprep.subr.bf16.mxu0 0
    %2460 = vmatpush1.bf16.msra.mxu0 %v1904
    %2461 = vmatprep.subr.bf16.mxu0 0
    %2462 = vmatpush1.bf16.msra.mxu0 %v1905
    %2463 = vmatprep.subr.bf16.mxu0 0
    %2464 = vmatpush1.bf16.msra.mxu0 %v1906
    %2465 = vmatprep.subr.bf16.mxu0 0
    %2466 = vmatpush1.bf16.msra.mxu0 %v1907
    %2467 = vmatprep.subr.bf16.mxu0 0
    %2468 = vmatpush1.bf16.msra.mxu0 %v1908
    %2469 = vmatprep.subr.bf16.mxu0 0
    %2470 = vmatpush1.bf16.msra.mxu0 %v1909
    %2471 = vmatprep.subr.bf16.mxu0 0
    %2472 = vmatpush1.bf16.msra.mxu0 %v1910
    %2473 = vmatprep.subr.bf16.mxu0 0
    %2474 = vmatpush1.bf16.msra.mxu0 %v1911
    %2475 = vmatprep.subr.bf16.mxu0 0
    %2476 = vmatpush1.bf16.msra.mxu0 %v1912
    %2477 = vmatprep.subr.bf16.mxu0 0
    %2478 = vmatpush1.bf16.msra.mxu0 %v1913
    %2479 = vmatprep.subr.bf16.mxu0 0
    %2480 = vmatpush1.bf16.msra.mxu0 %v1914
    %2481 = vmatprep.subr.bf16.mxu0 0
    %2482 = vmatpush1.bf16.msra.mxu0 %v1915
    %2483 = vmatprep.subr.bf16.mxu0 0
    %2484 = vmatpush1.bf16.msra.mxu0 %v1916
    %2485 = vmatprep.mubr.bf16.mxu0 %v457
    %2486 = vmatmul.mubr.bf16.gmra.mrb[0].mxu0 %v456
    %v2487 = vpop.f32.mrb[0].mxu0
    %v2488 = vadd.f32 %v2448, %v2487
    %v2489 = vpop.f32.mrb[0].mxu0
    %v2490 = vpop.f32.mrb[0].mxu0
    %v2491 = vpop.f32.mrb[0].mxu0
    %2492 = vdwg.mxu0
    %2493 = vmatprep.subr.bf16.mxu0 0
    %2494 = vmatpush1.bf16.msra.mxu0 %v1917
    %2495 = vmatprep.subr.bf16.mxu0 0
    %2496 = vmatpush1.bf16.msra.mxu0 %v1918
    %2497 = vmatprep.subr.bf16.mxu0 0
    %2498 = vmatpush1.bf16.msra.mxu0 %v1919
    %2499 = vmatprep.subr.bf16.mxu0 0
    %2500 = vmatpush1.bf16.msra.mxu0 %v1920
    %2501 = vmatprep.subr.bf16.mxu0 0
    %2502 = vmatpush1.bf16.msra.mxu0 %v1921
    %2503 = vmatprep.subr.bf16.mxu0 0
    %2504 = vmatpush1.bf16.msra.mxu0 %v1922
    %2505 = vmatprep.subr.bf16.mxu0 0
    %2506 = vmatpush1.bf16.msra.mxu0 %v1923
    %2507 = vmatprep.subr.bf16.mxu0 0
    %2508 = vmatpush1.bf16.msra.mxu0 %v1924
    %2509 = vmatprep.subr.bf16.mxu0 0
    %2510 = vmatpush1.bf16.msra.mxu0 %v1925
    %2511 = vmatprep.subr.bf16.mxu0 0
    %2512 = vmatpush1.bf16.msra.mxu0 %v1926
    %2513 = vmatprep.subr.bf16.mxu0 0
    %2514 = vmatpush1.bf16.msra.mxu0 %v1927
    %2515 = vmatprep.subr.bf16.mxu0 0
    %2516 = vmatpush1.bf16.msra.mxu0 %v1928
    %2517 = vmatprep.subr.bf16.mxu0 0
    %2518 = vmatpush1.bf16.msra.mxu0 %v1929
    %2519 = vmatprep.subr.bf16.mxu0 0
    %2520 = vmatpush1.bf16.msra.mxu0 %v1930
    %2521 = vmatprep.subr.bf16.mxu0 0
    %2522 = vmatpush1.bf16.msra.mxu0 %v1931
    %2523 = vmatprep.subr.bf16.mxu0 0
    %2524 = vmatpush1.bf16.msra.mxu0 %v1932
    %2525 = vmatprep.mubr.bf16.mxu0 %v459
    %2526 = vmatmul.mubr.bf16.gmra.mrb[0].mxu0 %v458
    %v2527 = vpop.f32.mrb[0].mxu0
    %v2528 = vadd.f32 %v2488, %v2527
    %v2529 = vpop.f32.mrb[0].mxu0
    %v2530 = vpop.f32.mrb[0].mxu0
    %v2531 = vpop.f32.mrb[0].mxu0
    %2532 = vdwg.mxu0
    %2533 = vmatprep.subr.bf16.mxu0 0
    %2534 = vmatpush1.bf16.msra.mxu0 %v1933
    %2535 = vmatprep.subr.bf16.mxu0 0
    %2536 = vmatpush1.bf16.msra.mxu0 %v1934
    %2537 = vmatprep.subr.bf16.mxu0 0
    %2538 = vmatpush1.bf16.msra.mxu0 %v1935
    %2539 = vmatprep.subr.bf16.mxu0 0
    %2540 = vmatpush1.bf16.msra.mxu0 %v1936
    %2541 = vmatprep.subr.bf16.mxu0 0
    %2542 = vmatpush1.bf16.msra.mxu0 %v1937
    %2543 = vmatprep.subr.bf16.mxu0 0
    %2544 = vmatpush1.bf16.msra.mxu0 %v1938
    %2545 = vmatprep.subr.bf16.mxu0 0
    %2546 = vmatpush1.bf16.msra.mxu0 %v1939
    %2547 = vmatprep.subr.bf16.mxu0 0
    %2548 = vmatpush1.bf16.msra.mxu0 %v1940
    %2549 = vmatprep.subr.bf16.mxu0 0
    %2550 = vmatpush1.bf16.msra.mxu0 %v1941
    %2551 = vmatprep.subr.bf16.mxu0 0
    %2552 = vmatpush1.bf16.msra.mxu0 %v1942
    %2553 = vmatprep.subr.bf16.mxu0 0
    %2554 = vmatpush1.bf16.msra.mxu0 %v1943
    %2555 = vmatprep.subr.bf16.mxu0 0
    %2556 = vmatpush1.bf16.msra.mxu0 %v1944
    %2557 = vmatprep.subr.bf16.mxu0 0
    %2558 = vmatpush1.bf16.msra.mxu0 %v1945
    %2559 = vmatprep.subr.bf16.mxu0 0
    %2560 = vmatpush1.bf16.msra.mxu0 %v1946
    %2561 = vmatprep.subr.bf16.mxu0 0
    %2562 = vmatpush1.bf16.msra.mxu0 %v1947
    %2563 = vmatprep.subr.bf16.mxu0 0
    %2564 = vmatpush1.bf16.msra.mxu0 %v1948
    %2565 = vmatprep.mubr.bf16.mxu0 %v461
    %2566 = vmatmul.mubr.bf16.gmra.mrb[0].mxu0 %v460
    %v2567 = vpop.f32.mrb[0].mxu0
    %v2568 = vadd.f32 %v2528, %v2567
    %v2569 = vpop.f32.mrb[0].mxu0
    %v2570 = vpop.f32.mrb[0].mxu0
    %v2571 = vpop.f32.mrb[0].mxu0
    %2572 = vdwg.mxu0
    %2573 = vmatprep.subr.bf16.mxu0 0
    %2574 = vmatpush1.bf16.msra.mxu0 %v1949
    %2575 = vmatprep.subr.bf16.mxu0 0
    %2576 = vmatpush1.bf16.msra.mxu0 %v1950
    %2577 = vmatprep.subr.bf16.mxu0 0
    %2578 = vmatpush1.bf16.msra.mxu0 %v1951
    %2579 = vmatprep.subr.bf16.mxu0 0
    %2580 = vmatpush1.bf16.msra.mxu0 %v1952
    %2581 = vmatprep.subr.bf16.mxu0 0
    %2582 = vmatpush1.bf16.msra.mxu0 %v1953
    %2583 = vmatprep.subr.bf16.mxu0 0
    %2584 = vmatpush1.bf16.msra.mxu0 %v1954
    %2585 = vmatprep.subr.bf16.mxu0 0
    %2586 = vmatpush1.bf16.msra.mxu0 %v1955
    %2587 = vmatprep.subr.bf16.mxu0 0
    %2588 = vmatpush1.bf16.msra.mxu0 %v1956
    %2589 = vmatprep.subr.bf16.mxu0 0
    %2590 = vmatpush1.bf16.msra.mxu0 %v1957
    %2591 = vmatprep.subr.bf16.mxu0 0
    %2592 = vmatpush1.bf16.msra.mxu0 %v1958
    %2593 = vmatprep.subr.bf16.mxu0 0
    %2594 = vmatpush1.bf16.msra.mxu0 %v1959
    %2595 = vmatprep.subr.bf16.mxu0 0
    %2596 = vmatpush1.bf16.msra.mxu0 %v1960
    %2597 = vmatprep.subr.bf16.mxu0 0
    %2598 = vmatpush1.bf16.msra.mxu0 %v1961
    %2599 = vmatprep.subr.bf16.mxu0 0
    %2600 = vmatpush1.bf16.msra.mxu0 %v1962
    %2601 = vmatprep.subr.bf16.mxu0 0
    %2602 = vmatpush1.bf16.msra.mxu0 %v1963
    %2603 = vmatprep.subr.bf16.mxu0 0
    %2604 = vmatpush1.bf16.msra.mxu0 %v1964
    %2605 = vmatprep.mubr.bf16.mxu0 %v463
    %2606 = vmatmul.mubr.bf16.gmra.mrb[0].mxu0 %v462
    %v2607 = vpop.f32.mrb[0].mxu0
    %v2608 = vadd.f32 %v2568, %v2607
    %v2609 = vpop.f32.mrb[0].mxu0
    %v2610 = vpop.f32.mrb[0].mxu0
    %v2611 = vpop.f32.mrb[0].mxu0
    %2612 = vdwg.mxu0
    %2613 = vmatprep.subr.bf16.mxu0 0
    %2614 = vmatpush1.bf16.msra.mxu0 %v1965
    %2615 = vmatprep.subr.bf16.mxu0 0
    %2616 = vmatpush1.bf16.msra.mxu0 %v1966
    %2617 = vmatprep.subr.bf16.mxu0 0
    %2618 = vmatpush1.bf16.msra.mxu0 %v1967
    %2619 = vmatprep.subr.bf16.mxu0 0
    %2620 = vmatpush1.bf16.msra.mxu0 %v1968
    %2621 = vmatprep.subr.bf16.mxu0 0
    %2622 = vmatpush1.bf16.msra.mxu0 %v1969
    %2623 = vmatprep.subr.bf16.mxu0 0
    %2624 = vmatpush1.bf16.msra.mxu0 %v1970
    %2625 = vmatprep.subr.bf16.mxu0 0
    %2626 = vmatpush1.bf16.msra.mxu0 %v1971
    %2627 = vmatprep.subr.bf16.mxu0 0
    %2628 = vmatpush1.bf16.msra.mxu0 %v1972
    %2629 = vmatprep.subr.bf16.mxu0 0
    %2630 = vmatpush1.bf16.msra.mxu0 %v1973
    %2631 = vmatprep.subr.bf16.mxu0 0
    %2632 = vmatpush1.bf16.msra.mxu0 %v1974
    %2633 = vmatprep.subr.bf16.mxu0 0
    %2634 = vmatpush1.bf16.msra.mxu0 %v1975
    %2635 = vmatprep.subr.bf16.mxu0 0
    %2636 = vmatpush1.bf16.msra.mxu0 %v1976
    %2637 = vmatprep.subr.bf16.mxu0 0
    %2638 = vmatpush1.bf16.msra.mxu0 %v1977
    %2639 = vmatprep.subr.bf16.mxu0 0
    %2640 = vmatpush1.bf16.msra.mxu0 %v1978
    %2641 = vmatprep.subr.bf16.mxu0 0
    %2642 = vmatpush1.bf16.msra.mxu0 %v1979
    %2643 = vmatprep.subr.bf16.mxu0 0
    %2644 = vmatpush1.bf16.msra.mxu0 %v1980
    %2645 = vmatprep.mubr.bf16.mxu0 %v465
    %2646 = vmatmul.mubr.bf16.gmra.mrb[0].mxu0 %v464
    %v2647 = vpop.f32.mrb[0].mxu0
    %v2648 = vadd.f32 %v2608, %v2647
    %v2649 = vpop.f32.mrb[0].mxu0
    %v2650 = vpop.f32.mrb[0].mxu0
    %v2651 = vpop.f32.mrb[0].mxu0
    %2652 = vdwg.mxu0
    %v2653 = vmax.f32 %v2648, 0.0
    %v2654 = vld [vmem:[%s4] sm:$0xf]
    %v2655 = vld [vmem:[%s4 + $0x4] sm:$0xf]
    %v2656 = vld [vmem:[%s4 + $0x8] sm:$0xf]
    %v2657 = vld [vmem:[%s4 + $0xc] sm:$0xf]
    %v2658 = vld [vmem:[%s4 + $0x10] sm:$0xf]
    %v2659 = vld [vmem:[%s4 + $0x14] sm:$0xf]
    %v2660 = vld [vmem:[%s4 + $0x18] sm:$0xf]
    %v2661 = vld [vmem:[%s4 + $0x1c] sm:$0xf]
    %v2662 = vld [vmem:[%s4 + $0x20] sm:$0xf]
    %v2663 = vld [vmem:[%s4 + $0x24] sm:$0xf]
    %v2664 = vld [vmem:[%s4 + $0x28] sm:$0xf]
    %v2665 = vld [vmem:[%s4 + $0x2c] sm:$0xf]
    %v2666 = vld [vmem:[%s4 + $0x30] sm:$0xf]
    %v2667 = vld [vmem:[%s4 + $0x34] sm:$0xf]
    %v2668 = vld [vmem:[%s4 + $0x38] sm:$0xf]
    %v2669 = vld [vmem:[%s4 + $0x3c] sm:$0xf]
    %v2670 = vld [vmem:[%s4 + $0x40] sm:$0xf]
    %v2671 = vld [vmem:[%s4 + $0x44] sm:$0xf]
    %v2672 = vld [vmem:[%s4 + $0x48] sm:$0xf]
    %v2673 = vld [vmem:[%s4 + $0x4c] sm:$0xf]
    %v2674 = vld [vmem:[%s4 + $0x50] sm:$0xf]
    %v2675 = vld [vmem:[%s4 + $0x54] sm:$0xf]
    %v2676 = vld [vmem:[%s4 + $0x58] sm:$0xf]
    %v2677 = vld [vmem:[%s4 + $0x5c] sm:$0xf]
    %v2678 = vld [vmem:[%s4 + $0x60] sm:$0xf]
    %v2679 = vld [vmem:[%s4 + $0x64] sm:$0xf]
    %v2680 = vld [vmem:[%s4 + $0x68] sm:$0xf]
    %v2681 = vld [vmem:[%s4 + $0x6c] sm:$0xf]
    %v2682 = vld [vmem:[%s4 + $0x70] sm:$0xf]
    %v2683 = vld [vmem:[%s4 + $0x74] sm:$0xf]
    %v2684 = vld [vmem:[%s4 + $0x78] sm:$0xf]
    %v2685 = vld [vmem:[%s4 + $0x7c] sm:$0xf]
    %v2686 = vld [vmem:[%s4 + $0x80] sm:$0xf]
    %v2687 = vld [vmem:[%s4 + $0x84] sm:$0xf]
    %v2688 = vld [vmem:[%s4 + $0x88] sm:$0xf]
    %v2689 = vld [vmem:[%s4 + $0x8c] sm:$0xf]
    %v2690 = vld [vmem:[%s4 + $0x90] sm:$0xf]
    %v2691 = vld [vmem:[%s4 + $0x94] sm:$0xf]
    %v2692 = vld [vmem:[%s4 + $0x98] sm:$0xf]
    %v2693 = vld [vmem:[%s4 + $0x9c] sm:$0xf]
    %v2694 = vld [vmem:[%s4 + $0xa0] sm:$0xf]
    %v2695 = vld [vmem:[%s4 + $0xa4] sm:$0xf]
    %v2696 = vld [vmem:[%s4 + $0xa8] sm:$0xf]
    %v2697 = vld [vmem:[%s4 + $0xac] sm:$0xf]
    %v2698 = vld [vmem:[%s4 + $0xb0] sm:$0xf]
    %v2699 = vld [vmem:[%s4 + $0xb4] sm:$0xf]
    %v2700 = vld [vmem:[%s4 + $0xb8] sm:$0xf]
    %v2701 = vld [vmem:[%s4 + $0xbc] sm:$0xf]
    %v2702 = vld [vmem:[%s4 + $0xc0] sm:$0xf]
    %v2703 = vld [vmem:[%s4 + $0xc4] sm:$0xf]
    %v2704 = vld [vmem:[%s4 + $0xc8] sm:$0xf]
    %v2705 = vld [vmem:[%s4 + $0xcc] sm:$0xf]
    %v2706 = vld [vmem:[%s4 + $0xd0] sm:$0xf]
    %v2707 = vld [vmem:[%s4 + $0xd4] sm:$0xf]
    %v2708 = vld [vmem:[%s4 + $0xd8] sm:$0xf]
    %v2709 = vld [vmem:[%s4 + $0xdc] sm:$0xf]
    %v2710 = vld [vmem:[%s4 + $0xe0] sm:$0xf]
    %v2711 = vld [vmem:[%s4 + $0xe4] sm:$0xf]
    %v2712 = vld [vmem:[%s4 + $0xe8] sm:$0xf]
    %v2713 = vld [vmem:[%s4 + $0xec] sm:$0xf]
    %v2714 = vld [vmem:[%s4 + $0xf0] sm:$0xf]
    %v2715 = vld [vmem:[%s4 + $0xf4] sm:$0xf]
    %v2716 = vld [vmem:[%s4 + $0xf8] sm:$0xf]
    %v2717 = vld [vmem:[%s4 + $0xfc] sm:$0xf]
    %v2718 = vld [vmem:[%s4 + $0x100] sm:$0xf]
    %v2719 = vld [vmem:[%s4 + $0x104] sm:$0xf]
    %v2720 = vld [vmem:[%s4 + $0x108] sm:$0xf]
    %v2721 = vld [vmem:[%s4 + $0x10c] sm:$0xf]
    %v2722 = vld [vmem:[%s4 + $0x110] sm:$0xf]
    %v2723 = vld [vmem:[%s4 + $0x114] sm:$0xf]
    %v2724 = vld [vmem:[%s4 + $0x118] sm:$0xf]
    %v2725 = vld [vmem:[%s4 + $0x11c] sm:$0xf]
    %v2726 = vld [vmem:[%s4 + $0x120] sm:$0xf]
    %v2727 = vld [vmem:[%s4 + $0x124] sm:$0xf]
    %v2728 = vld [vmem:[%s4 + $0x128] sm:$0xf]
    %v2729 = vld [vmem:[%s4 + $0x12c] sm:$0xf]
    %v2730 = vld [vmem:[%s4 + $0x130] sm:$0xf]
    %v2731 = vld [vmem:[%s4 + $0x134] sm:$0xf]
    %v2732 = vld [vmem:[%s4 + $0x138] sm:$0xf]
    %v2733 = vld [vmem:[%s4 + $0x13c] sm:$0xf]
    %v2734 = vld [vmem:[%s4 + $0x140] sm:$0xf]
    %v2735 = vld [vmem:[%s4 + $0x144] sm:$0xf]
    %v2736 = vld [vmem:[%s4 + $0x148] sm:$0xf]
    %v2737 = vld [vmem:[%s4 + $0x14c] sm:$0xf]
    %v2738 = vld [vmem:[%s4 + $0x150] sm:$0xf]
    %v2739 = vld [vmem:[%s4 + $0x154] sm:$0xf]
    %v2740 = vld [vmem:[%s4 + $0x158] sm:$0xf]
    %v2741 = vld [vmem:[%s4 + $0x15c] sm:$0xf]
    %v2742 = vld [vmem:[%s4 + $0x160] sm:$0xf]
    %v2743 = vld [vmem:[%s4 + $0x164] sm:$0xf]
    %v2744 = vld [vmem:[%s4 + $0x168] sm:$0xf]
    %v2745 = vld [vmem:[%s4 + $0x16c] sm:$0xf]
    %v2746 = vld [vmem:[%s4 + $0x170] sm:$0xf]
    %v2747 = vld [vmem:[%s4 + $0x174] sm:$0xf]
    %v2748 = vld [vmem:[%s4 + $0x178] sm:$0xf]
    %v2749 = vld [vmem:[%s4 + $0x17c] sm:$0xf]
    %v2750 = vld [vmem:[%s5] sm:$0x1]
    %v2752 = vlaneseq
    %v2753 = vshrl.u32 %v2752, 7
    %v2754 = vsub.s32 0, %v2753
    %v2755 = vrot.slane %v2750, %v2754
    %v2853 = vunpack.c.l.b16 %v2654
    %v2854 = vunpack.c.l.b16 %v2655
    %v2855 = vunpack.c.l.b16 %v2656
    %v2856 = vunpack.c.l.b16 %v2657
    %v2857 = vunpack.c.l.b16 %v2658
    %v2858 = vunpack.c.l.b16 %v2659
    %v2859 = vunpack.c.l.b16 %v2660
    %v2860 = vunpack.c.l.b16 %v2661
    %v2861 = vunpack.c.l.b16 %v2662
    %v2862 = vunpack.c.l.b16 %v2663
    %v2863 = vunpack.c.l.b16 %v2664
    %v2864 = vunpack.c.l.b16 %v2665
    %v2865 = vunpack.c.l.b16 %v2666
    %v2866 = vunpack.c.l.b16 %v2667
    %v2867 = vunpack.c.l.b16 %v2668
    %v2868 = vunpack.c.l.b16 %v2669
    %v2869 = vunpack.c.l.b16 %v2670
    %v2870 = vunpack.c.l.b16 %v2671
    %v2871 = vunpack.c.l.b16 %v2672
    %v2872 = vunpack.c.l.b16 %v2673
    %v2873 = vunpack.c.l.b16 %v2674
    %v2874 = vunpack.c.l.b16 %v2675
    %v2875 = vunpack.c.l.b16 %v2676
    %v2876 = vunpack.c.l.b16 %v2677
    %v2877 = vunpack.c.l.b16 %v2678
    %v2878 = vunpack.c.l.b16 %v2679
    %v2879 = vunpack.c.l.b16 %v2680
    %v2880 = vunpack.c.l.b16 %v2681
    %v2881 = vunpack.c.l.b16 %v2682
    %v2882 = vunpack.c.l.b16 %v2683
    %v2883 = vunpack.c.l.b16 %v2684
    %v2884 = vunpack.c.l.b16 %v2685
    %v2885 = vunpack.c.l.b16 %v2686
    %v2886 = vunpack.c.l.b16 %v2687
    %v2887 = vunpack.c.l.b16 %v2688
    %v2888 = vunpack.c.l.b16 %v2689
    %v2889 = vunpack.c.l.b16 %v2690
    %v2890 = vunpack.c.l.b16 %v2691
    %v2891 = vunpack.c.l.b16 %v2692
    %v2892 = vunpack.c.l.b16 %v2693
    %v2893 = vunpack.c.l.b16 %v2694
    %v2894 = vunpack.c.l.b16 %v2695
    %v2895 = vunpack.c.l.b16 %v2696
    %v2896 = vunpack.c.l.b16 %v2697
    %v2897 = vunpack.c.l.b16 %v2698
    %v2898 = vunpack.c.l.b16 %v2699
    %v2899 = vunpack.c.l.b16 %v2700
    %v2900 = vunpack.c.l.b16 %v2701
    %v2901 = vunpack.c.l.b16 %v2702
    %v2902 = vunpack.c.l.b16 %v2703
    %v2903 = vunpack.c.l.b16 %v2704
    %v2904 = vunpack.c.l.b16 %v2705
    %v2905 = vunpack.c.l.b16 %v2706
    %v2906 = vunpack.c.l.b16 %v2707
    %v2907 = vunpack.c.l.b16 %v2708
    %v2908 = vunpack.c.l.b16 %v2709
    %v2909 = vunpack.c.l.b16 %v2710
    %v2910 = vunpack.c.l.b16 %v2711
    %v2911 = vunpack.c.l.b16 %v2712
    %v2912 = vunpack.c.l.b16 %v2713
    %v2913 = vunpack.c.l.b16 %v2714
    %v2914 = vunpack.c.l.b16 %v2715
    %v2915 = vunpack.c.l.b16 %v2716
    %v2916 = vunpack.c.l.b16 %v2717
    %v2917 = vunpack.c.l.b16 %v2718
    %v2918 = vunpack.c.l.b16 %v2719
    %v2919 = vunpack.c.l.b16 %v2720
    %v2920 = vunpack.c.l.b16 %v2721
    %v2921 = vunpack.c.l.b16 %v2722
    %v2922 = vunpack.c.l.b16 %v2723
    %v2923 = vunpack.c.l.b16 %v2724
    %v2924 = vunpack.c.l.b16 %v2725
    %v2925 = vunpack.c.l.b16 %v2726
    %v2926 = vunpack.c.l.b16 %v2727
    %v2927 = vunpack.c.l.b16 %v2728
    %v2928 = vunpack.c.l.b16 %v2729
    %v2929 = vunpack.c.l.b16 %v2730
    %v2930 = vunpack.c.l.b16 %v2731
    %v2931 = vunpack.c.l.b16 %v2732
    %v2932 = vunpack.c.l.b16 %v2733
    %v2933 = vunpack.c.l.b16 %v2734
    %v2934 = vunpack.c.l.b16 %v2735
    %v2935 = vunpack.c.l.b16 %v2736
    %v2936 = vunpack.c.l.b16 %v2737
    %v2937 = vunpack.c.l.b16 %v2738
    %v2938 = vunpack.c.l.b16 %v2739
    %v2939 = vunpack.c.l.b16 %v2740
    %v2940 = vunpack.c.l.b16 %v2741
    %v2941 = vunpack.c.l.b16 %v2742
    %v2942 = vunpack.c.l.b16 %v2743
    %v2943 = vunpack.c.l.b16 %v2744
    %v2944 = vunpack.c.l.b16 %v2745
    %v2945 = vunpack.c.l.b16 %v2746
    %v2946 = vunpack.c.l.b16 %v2747
    %v2947 = vunpack.c.l.b16 %v2748
    %v2948 = vunpack.c.l.b16 %v2749
    %v2949 = vpack.c.b16 %v2854, %v2853
    %v2950 = vpack.c.b16 %v2856, %v2855
    %v2951 = vpack.c.b16 %v2858, %v2857
    %v2952 = vpack.c.b16 %v2860, %v2859
    %v2953 = vpack.c.b16 %v2862, %v2861
    %v2954 = vpack.c.b16 %v2864, %v2863
    %v2955 = vpack.c.b16 %v2866, %v2865
    %v2956 = vpack.c.b16 %v2868, %v2867
    %v2957 = vpack.c.b16 %v2870, %v2869
    %v2958 = vpack.c.b16 %v2872, %v2871
    %v2959 = vpack.c.b16 %v2874, %v2873
    %v2960 = vpack.c.b16 %v2876, %v2875
    %v2961 = vpack.c.b16 %v2878, %v2877
    %v2962 = vpack.c.b16 %v2880, %v2879
    %v2963 = vpack.c.b16 %v2882, %v2881
    %v2964 = vpack.c.b16 %v2884, %v2883
    %v2965 = vpack.c.b16 %v2886, %v2885
    %v2966 = vpack.c.b16 %v2888, %v2887
    %v2967 = vpack.c.b16 %v2890, %v2889
    %v2968 = vpack.c.b16 %v2892, %v2891
    %v2969 = vpack.c.b16 %v2894, %v2893
    %v2970 = vpack.c.b16 %v2896, %v2895
    %v2971 = vpack.c.b16 %v2898, %v2897
    %v2972 = vpack.c.b16 %v2900, %v2899
    %v2973 = vpack.c.b16 %v2902, %v2901
    %v2974 = vpack.c.b16 %v2904, %v2903
    %v2975 = vpack.c.b16 %v2906, %v2905
    %v2976 = vpack.c.b16 %v2908, %v2907
    %v2977 = vpack.c.b16 %v2910, %v2909
    %v2978 = vpack.c.b16 %v2912, %v2911
    %v2979 = vpack.c.b16 %v2914, %v2913
    %v2980 = vpack.c.b16 %v2916, %v2915
    %v2981 = vpack.c.b16 %v2918, %v2917
    %v2982 = vpack.c.b16 %v2920, %v2919
    %v2983 = vpack.c.b16 %v2922, %v2921
    %v2984 = vpack.c.b16 %v2924, %v2923
    %v2985 = vpack.c.b16 %v2926, %v2925
    %v2986 = vpack.c.b16 %v2928, %v2927
    %v2987 = vpack.c.b16 %v2930, %v2929
    %v2988 = vpack.c.b16 %v2932, %v2931
    %v2989 = vpack.c.b16 %v2934, %v2933
    %v2990 = vpack.c.b16 %v2936, %v2935
    %v2991 = vpack.c.b16 %v2938, %v2937
    %v2992 = vpack.c.b16 %v2940, %v2939
    %v2993 = vpack.c.b16 %v2942, %v2941
    %v2994 = vpack.c.b16 %v2944, %v2943
    %v2995 = vpack.c.b16 %v2946, %v2945
    %v2996 = vpack.c.b16 %v2948, %v2947
    %3045 = vmatprep.subr.bf16.mxu0 0
    %3046 = vmatpush1.bf16.msra.mxu0 %v2949
    %3047 = vmatprep.subr.bf16.mxu0 0
    %3048 = vmatpush1.bf16.msra.mxu0 %v2950
    %3049 = vmatprep.subr.bf16.mxu0 0
    %3050 = vmatpush1.bf16.msra.mxu0 %v2951
    %3051 = vmatprep.subr.bf16.mxu0 0
    %3052 = vmatpush1.bf16.msra.mxu0 %v2952
    %3053 = vmatprep.subr.bf16.mxu0 0
    %3054 = vmatpush1.bf16.msra.mxu0 %v2953
    %3055 = vmatprep.subr.bf16.mxu0 0
    %3056 = vmatpush1.bf16.msra.mxu0 %v2954
    %3057 = vmatprep.subr.bf16.mxu0 0
    %3058 = vmatpush1.bf16.msra.mxu0 %v2955
    %3059 = vmatprep.subr.bf16.mxu0 0
    %3060 = vmatpush1.bf16.msra.mxu0 %v2956
    %3061 = vmatprep.subr.bf16.mxu0 0
    %3062 = vmatpush1.bf16.msra.mxu0 %v2957
    %3063 = vmatprep.subr.bf16.mxu0 0
    %3064 = vmatpush1.bf16.msra.mxu0 %v2958
    %3065 = vmatprep.subr.bf16.mxu0 0
    %3066 = vmatpush1.bf16.msra.mxu0 %v2959
    %3067 = vmatprep.subr.bf16.mxu0 0
    %3068 = vmatpush1.bf16.msra.mxu0 %v2960
    %3069 = vmatprep.subr.bf16.mxu0 0
    %3070 = vmatpush1.bf16.msra.mxu0 %v2961
    %3071 = vmatprep.subr.bf16.mxu0 0
    %3072 = vmatpush1.bf16.msra.mxu0 %v2962
    %3073 = vmatprep.subr.bf16.mxu0 0
    %3074 = vmatpush1.bf16.msra.mxu0 %v2963
    %3075 = vmatprep.subr.bf16.mxu0 0
    %3076 = vmatpush1.bf16.msra.mxu0 %v2964
    %3077 = vmatprep.mubr.bf16.mxu0 %v543
    %3078 = vmatmul.mubr.bf16.gmra.mrb[0].mxu0 %v542
    %v3079 = vpop.f32.mrb[0].mxu0
    %v3080 = vadd.f32 %v2755, %v3079
    %v3081 = vpop.f32.mrb[0].mxu0
    %v3082 = vpop.f32.mrb[0].mxu0
    %v3083 = vpop.f32.mrb[0].mxu0
    %3084 = vdwg.mxu0
    %3085 = vmatprep.subr.bf16.mxu0 0
    %3086 = vmatpush1.bf16.msra.mxu0 %v2965
    %3087 = vmatprep.subr.bf16.mxu0 0
    %3088 = vmatpush1.bf16.msra.mxu0 %v2966
    %3089 = vmatprep.subr.bf16.mxu0 0
    %3090 = vmatpush1.bf16.msra.mxu0 %v2967
    %3091 = vmatprep.subr.bf16.mxu0 0
    %3092 = vmatpush1.bf16.msra.mxu0 %v2968
    %3093 = vmatprep.subr.bf16.mxu0 0
    %3094 = vmatpush1.bf16.msra.mxu0 %v2969
    %3095 = vmatprep.subr.bf16.mxu0 0
    %3096 = vmatpush1.bf16.msra.mxu0 %v2970
    %3097 = vmatprep.subr.bf16.mxu0 0
    %3098 = vmatpush1.bf16.msra.mxu0 %v2971
    %3099 = vmatprep.subr.bf16.mxu0 0
    %3100 = vmatpush1.bf16.msra.mxu0 %v2972
    %3101 = vmatprep.subr.bf16.mxu0 0
    %3102 = vmatpush1.bf16.msra.mxu0 %v2973
    %3103 = vmatprep.subr.bf16.mxu0 0
    %3104 = vmatpush1.bf16.msra.mxu0 %v2974
    %3105 = vmatprep.subr.bf16.mxu0 0
    %3106 = vmatpush1.bf16.msra.mxu0 %v2975
    %3107 = vmatprep.subr.bf16.mxu0 0
    %3108 = vmatpush1.bf16.msra.mxu0 %v2976
    %3109 = vmatprep.subr.bf16.mxu0 0
    %3110 = vmatpush1.bf16.msra.mxu0 %v2977
    %3111 = vmatprep.subr.bf16.mxu0 0
    %3112 = vmatpush1.bf16.msra.mxu0 %v2978
    %3113 = vmatprep.subr.bf16.mxu0 0
    %3114 = vmatpush1.bf16.msra.mxu0 %v2979
    %3115 = vmatprep.subr.bf16.mxu0 0
    %3116 = vmatpush1.bf16.msra.mxu0 %v2980
    %3117 = vmatprep.mubr.bf16.mxu0 %v545
    %3118 = vmatmul.mubr.bf16.gmra.mrb[0].mxu0 %v544
    %v3119 = vpop.f32.mrb[0].mxu0
    %v3120 = vadd.f32 %v3080, %v3119
    %v3121 = vpop.f32.mrb[0].mxu0
    %v3122 = vpop.f32.mrb[0].mxu0
    %v3123 = vpop.f32.mrb[0].mxu0
    %3124 = vdwg.mxu0
    %3125 = vmatprep.subr.bf16.mxu0 0
    %3126 = vmatpush1.bf16.msra.mxu0 %v2981
    %3127 = vmatprep.subr.bf16.mxu0 0
    %3128 = vmatpush1.bf16.msra.mxu0 %v2982
    %3129 = vmatprep.subr.bf16.mxu0 0
    %3130 = vmatpush1.bf16.msra.mxu0 %v2983
    %3131 = vmatprep.subr.bf16.mxu0 0
    %3132 = vmatpush1.bf16.msra.mxu0 %v2984
    %3133 = vmatprep.subr.bf16.mxu0 0
    %3134 = vmatpush1.bf16.msra.mxu0 %v2985
    %3135 = vmatprep.subr.bf16.mxu0 0
    %3136 = vmatpush1.bf16.msra.mxu0 %v2986
    %3137 = vmatprep.subr.bf16.mxu0 0
    %3138 = vmatpush1.bf16.msra.mxu0 %v2987
    %3139 = vmatprep.subr.bf16.mxu0 0
    %3140 = vmatpush1.bf16.msra.mxu0 %v2988
    %3141 = vmatprep.subr.bf16.mxu0 0
    %3142 = vmatpush1.bf16.msra.mxu0 %v2989
    %3143 = vmatprep.subr.bf16.mxu0 0
    %3144 = vmatpush1.bf16.msra.mxu0 %v2990
    %3145 = vmatprep.subr.bf16.mxu0 0
    %3146 = vmatpush1.bf16.msra.mxu0 %v2991
    %3147 = vmatprep.subr.bf16.mxu0 0
    %3148 = vmatpush1.bf16.msra.mxu0 %v2992
    %3149 = vmatprep.subr.bf16.mxu0 0
    %3150 = vmatpush1.bf16.msra.mxu0 %v2993
    %3151 = vmatprep.subr.bf16.mxu0 0
    %3152 = vmatpush1.bf16.msra.mxu0 %v2994
    %3153 = vmatprep.subr.bf16.mxu0 0
    %3154 = vmatpush1.bf16.msra.mxu0 %v2995
    %3155 = vmatprep.subr.bf16.mxu0 0
    %3156 = vmatpush1.bf16.msra.mxu0 %v2996
    %3157 = vmatprep.mubr.bf16.mxu0 %v547
    %3158 = vmatmul.mubr.bf16.gmra.mrb[0].mxu0 %v546
    %v3159 = vpop.f32.mrb[0].mxu0
    %v3160 = vadd.f32 %v3120, %v3159
    %v3161 = vpop.f32.mrb[0].mxu0
    %v3162 = vpop.f32.mrb[0].mxu0
    %v3163 = vpop.f32.mrb[0].mxu0
    %3164 = vdwg.mxu0
    %v3165 = vmax.f32 %v3160, 0.0
    %v3166 = vpack.c.bf16 %v2653, %v2653
    %v3167 = vld [vmem:[%s6] sm:$0xf]
    %v3168 = vld [vmem:[%s6 + $0x4] sm:$0xf]
    %v3169 = vld [vmem:[%s6 + $0x8] sm:$0xf]
    %v3170 = vld [vmem:[%s6 + $0xc] sm:$0xf]
    %v3171 = vld [vmem:[%s6 + $0x10] sm:$0xf]
    %v3172 = vld [vmem:[%s6 + $0x14] sm:$0xf]
    %v3173 = vld [vmem:[%s6 + $0x18] sm:$0xf]
    %v3174 = vld [vmem:[%s6 + $0x1c] sm:$0xf]
    %v3175 = vld [vmem:[%s6 + $0x20] sm:$0xf]
    %v3176 = vld [vmem:[%s6 + $0x24] sm:$0xf]
    %v3177 = vld [vmem:[%s6 + $0x28] sm:$0xf]
    %v3178 = vld [vmem:[%s6 + $0x2c] sm:$0xf]
    %v3179 = vld [vmem:[%s6 + $0x30] sm:$0xf]
    %v3180 = vld [vmem:[%s6 + $0x34] sm:$0xf]
    %v3181 = vld [vmem:[%s6 + $0x38] sm:$0xf]
    %v3182 = vld [vmem:[%s6 + $0x3c] sm:$0xf]
    %v3183 = vld [vmem:[%s7] sm:$0x1]
    %v3185 = vlaneseq
    %v3186 = vshrl.u32 %v3185, 7
    %v3187 = vsub.s32 0, %v3186
    %v3188 = vrot.slane %v3183, %v3187
    %v3206 = vunpack.c.l.b16 %v3167
    %v3207 = vunpack.c.l.b16 %v3168
    %v3208 = vunpack.c.l.b16 %v3169
    %v3209 = vunpack.c.l.b16 %v3170
    %v3210 = vunpack.c.l.b16 %v3171
    %v3211 = vunpack.c.l.b16 %v3172
    %v3212 = vunpack.c.l.b16 %v3173
    %v3213 = vunpack.c.l.b16 %v3174
    %v3214 = vunpack.c.l.b16 %v3175
    %v3215 = vunpack.c.l.b16 %v3176
    %v3216 = vunpack.c.l.b16 %v3177
    %v3217 = vunpack.c.l.b16 %v3178
    %v3218 = vunpack.c.l.b16 %v3179
    %v3219 = vunpack.c.l.b16 %v3180
    %v3220 = vunpack.c.l.b16 %v3181
    %v3221 = vunpack.c.l.b16 %v3182
    %v3222 = vpack.c.b16 %v3207, %v3206
    %v3223 = vpack.c.b16 %v3209, %v3208
    %v3224 = vpack.c.b16 %v3211, %v3210
    %v3225 = vpack.c.b16 %v3213, %v3212
    %v3226 = vpack.c.b16 %v3215, %v3214
    %v3227 = vpack.c.b16 %v3217, %v3216
    %v3228 = vpack.c.b16 %v3219, %v3218
    %v3229 = vpack.c.b16 %v3221, %v3220
    %3238 = vmatprep.subr.bf16.mxu0 0
    %3239 = vmatpush1.bf16.msra.mxu0 %v3222
    %3240 = vmatprep.subr.bf16.mxu0 0
    %3241 = vmatpush1.bf16.msra.mxu0 %v3223
    %3242 = vmatprep.subr.bf16.mxu0 0
    %3243 = vmatpush1.bf16.msra.mxu0 %v3224
    %3244 = vmatprep.subr.bf16.mxu0 0
    %3245 = vmatpush1.bf16.msra.mxu0 %v3225
    %3246 = vmatprep.subr.bf16.mxu0 0
    %3247 = vmatpush1.bf16.msra.mxu0 %v3226
    %3248 = vmatprep.subr.bf16.mxu0 0
    %3249 = vmatpush1.bf16.msra.mxu0 %v3227
    %3250 = vmatprep.subr.bf16.mxu0 0
    %3251 = vmatpush1.bf16.msra.mxu0 %v3228
    %3252 = vmatprep.subr.bf16.mxu0 0
    %3253 = vmatpush1.bf16.msra.mxu0 %v3229
    %3254 = vmatprep.subr.bf16.mxu0 0
    %3255 = vmatpush1.bf16.msra.mxu0 0
    %3256 = vmatprep.subr.bf16.mxu0 0
    %3257 = vmatpush1.bf16.msra.mxu0 0
    %3258 = vmatprep.subr.bf16.mxu0 0
    %3259 = vmatpush1.bf16.msra.mxu0 0
    %3260 = vmatprep.subr.bf16.mxu0 0
    %3261 = vmatpush1.bf16.msra.mxu0 0
    %3262 = vmatprep.subr.bf16.mxu0 0
    %3263 = vmatpush1.bf16.msra.mxu0 0
    %3264 = vmatprep.subr.bf16.mxu0 0
    %3265 = vmatpush1.bf16.msra.mxu0 0
    %3266 = vmatprep.subr.bf16.mxu0 0
    %3267 = vmatpush1.bf16.msra.mxu0 0
    %3268 = vmatprep.subr.bf16.mxu0 0
    %3269 = vmatpush1.bf16.msra.mxu0 0
    %3270 = vmatprep.mubr.bf16.mxu0 0
    %3271 = vmatmul.mubr.bf16.gmra.mrb[0].mxu0 %v3166
    %v3272 = vpop.f32.mrb[0].mxu0
    %v3273 = vadd.f32 %v3188, %v3272
    %v3274 = vpop.f32.mrb[0].mxu0
    %v3275 = vpop.f32.mrb[0].mxu0
    %v3276 = vpop.f32.mrb[0].mxu0
    %3277 = vdwg.mxu0
    %v3278 = vmax.f32 %v3273, 0.0
    %v3279 = vpack.c.bf16 %v3165, %v3165
    %v3280 = vld [vmem:[%s8] sm:$0xf]
    %v3281 = vld [vmem:[%s8 + $0x4] sm:$0xf]
    %v3282 = vld [vmem:[%s8 + $0x8] sm:$0xf]
    %v3283 = vld [vmem:[%s8 + $0xc] sm:$0xf]
    %v3284 = vld [vmem:[%s9] sm:$0x1]
    %v3286 = vlaneseq
    %v3287 = vshrl.u32 %v3286, 7
    %v3288 = vsub.s32 0, %v3287
    %v3289 = vrot.slane %v3284, %v3288
    %v3295 = vunpack.c.l.b16 %v3280
    %v3296 = vunpack.c.l.b16 %v3281
    %v3297 = vunpack.c.l.b16 %v3282
    %v3298 = vunpack.c.l.b16 %v3283
    %v3299 = vpack.c.b16 %v3296, %v3295
    %v3300 = vpack.c.b16 %v3298, %v3297
    %vm3303 = vcmask 261120
    %v3305 = vsel %vm3303, %v3279, 0
    %3307 = vmatprep.subr.bf16.mxu0 0
    %3308 = vmatpush1.bf16.msra.mxu0 %v3299
    %3309 = vmatprep.subr.bf16.mxu0 0
    %3310 = vmatpush1.bf16.msra.mxu0 %v3300
    %3311 = vmatprep.subr.bf16.mxu0 0
    %3312 = vmatpush1.bf16.msra.mxu0 0
    %3313 = vmatprep.subr.bf16.mxu0 0
    %3314 = vmatpush1.bf16.msra.mxu0 0
    %3315 = vmatprep.subr.bf16.mxu0 0
    %3316 = vmatpush1.bf16.msra.mxu0 0
    %3317 = vmatprep.subr.bf16.mxu0 0
    %3318 = vmatpush1.bf16.msra.mxu0 0
    %3319 = vmatprep.subr.bf16.mxu0 0
    %3320 = vmatpush1.bf16.msra.mxu0 0
    %3321 = vmatprep.subr.bf16.mxu0 0
    %3322 = vmatpush1.bf16.msra.mxu0 0
    %3323 = vmatprep.subr.bf16.mxu0 0
    %3324 = vmatpush1.bf16.msra.mxu0 0
    %3325 = vmatprep.subr.bf16.mxu0 0
    %3326 = vmatpush1.bf16.msra.mxu0 0
    %3327 = vmatprep.subr.bf16.mxu0 0
    %3328 = vmatpush1.bf16.msra.mxu0 0
    %3329 = vmatprep.subr.bf16.mxu0 0
    %3330 = vmatpush1.bf16.msra.mxu0 0
    %3331 = vmatprep.subr.bf16.mxu0 0
    %3332 = vmatpush1.bf16.msra.mxu0 0
    %3333 = vmatprep.subr.bf16.mxu0 0
    %3334 = vmatpush1.bf16.msra.mxu0 0
    %3335 = vmatprep.subr.bf16.mxu0 0
    %3336 = vmatpush1.bf16.msra.mxu0 0
    %3337 = vmatprep.subr.bf16.mxu0 0
    %3338 = vmatpush1.bf16.msra.mxu0 0
    %3339 = vmatprep.mubr.bf16.mxu0 0
    %3340 = vmatmul.mubr.bf16.gmra.mrb[0].mxu0 %v3305
    %v3341 = vpop.f32.mrb[0].mxu0
    %v3342 = vadd.f32 %v3289, %v3341
    %v3343 = vpop.f32.mrb[0].mxu0
    %v3344 = vpop.f32.mrb[0].mxu0
    %v3345 = vpop.f32.mrb[0].mxu0
    %3346 = vdwg.mxu0
    %v3347 = vmax.f32 %v3342, 0.0
    %v3348 = vld [vmem:[%s10] sm:$0xff]
    %v3349 = vld [vmem:[%s10 + $0x8] sm:$0xff]
    %v3350 = vld [vmem:[%s10 + $0x10] sm:$0xff]
    %v3351 = vld [vmem:[%s10 + $0x18] sm:$0xff]
    %v3352 = vld [vmem:[%s10 + $0x20] sm:$0xff]
    %v3353 = vld [vmem:[%s10 + $0x28] sm:$0xff]
    %v3354 = vld [vmem:[%s10 + $0x30] sm:$0xff]
    %v3355 = vld [vmem:[%s10 + $0x38] sm:$0xff]
    %v3356 = vld [vmem:[%s10 + $0x40] sm:$0xff]
    %v3357 = vld [vmem:[%s10 + $0x48] sm:$0xff]
    %v3358 = vld [vmem:[%s10 + $0x50] sm:$0xff]
    %v3359 = vld [vmem:[%s10 + $0x58] sm:$0xff]
    %v3360 = vld [vmem:[%s10 + $0x60] sm:$0xff]
    %v3361 = vld [vmem:[%s10 + $0x68] sm:$0xff]
    %v3362 = vld [vmem:[%s10 + $0x70] sm:$0xff]
    %v3363 = vld [vmem:[%s10 + $0x78] sm:$0xff]
    %v3364 = vld [vmem:[%s10 + $0x80] sm:$0xff]
    %v3365 = vld [vmem:[%s10 + $0x88] sm:$0xff]
    %v3366 = vld [vmem:[%s10 + $0x90] sm:$0xff]
    %v3367 = vld [vmem:[%s10 + $0x98] sm:$0xff]
    %v3368 = vld [vmem:[%s10 + $0xa0] sm:$0xff]
    %v3369 = vld [vmem:[%s10 + $0xa8] sm:$0xff]
    %v3370 = vld [vmem:[%s10 + $0xb0] sm:$0xff]
    %v3371 = vld [vmem:[%s10 + $0xb8] sm:$0xff]
    %v3372 = vld [vmem:[%s10 + $0xc0] sm:$0xff]
    %v3373 = vld [vmem:[%s10 + $0xc8] sm:$0xff]
    %v3374 = vld [vmem:[%s10 + $0xd0] sm:$0xff]
    %v3375 = vld [vmem:[%s10 + $0xd8] sm:$0xff]
    %v3376 = vld [vmem:[%s10 + $0xe0] sm:$0xff]
    %v3377 = vld [vmem:[%s10 + $0xe8] sm:$0xff]
    %v3378 = vld [vmem:[%s10 + $0xf0] sm:$0xff]
    %v3379 = vld [vmem:[%s10 + $0xf8] sm:$0xff]
    %v3380 = vld [vmem:[%s10 + $0x100] sm:$0xff]
    %v3381 = vld [vmem:[%s10 + $0x108] sm:$0xff]
    %v3382 = vld [vmem:[%s10 + $0x110] sm:$0xff]
    %v3383 = vld [vmem:[%s10 + $0x118] sm:$0xff]
    %v3384 = vld [vmem:[%s10 + $0x120] sm:$0xff]
    %v3385 = vld [vmem:[%s10 + $0x128] sm:$0xff]
    %v3386 = vld [vmem:[%s10 + $0x130] sm:$0xff]
    %v3387 = vld [vmem:[%s10 + $0x138] sm:$0xff]
    %v3388 = vld [vmem:[%s10 + $0x140] sm:$0xff]
    %v3389 = vld [vmem:[%s10 + $0x148] sm:$0xff]
    %v3390 = vld [vmem:[%s10 + $0x150] sm:$0xff]
    %v3391 = vld [vmem:[%s10 + $0x158] sm:$0xff]
    %v3392 = vld [vmem:[%s10 + $0x160] sm:$0xff]
    %v3393 = vld [vmem:[%s10 + $0x168] sm:$0xff]
    %v3394 = vld [vmem:[%s10 + $0x170] sm:$0xff]
    %v3395 = vld [vmem:[%s10 + $0x178] sm:$0xff]
    %v3396 = vld [vmem:[%s10 + $0x180] sm:$0xff]
    %v3397 = vld [vmem:[%s10 + $0x188] sm:$0xff]
    %v3398 = vld [vmem:[%s10 + $0x190] sm:$0xff]
    %v3399 = vld [vmem:[%s10 + $0x198] sm:$0xff]
    %v3400 = vld [vmem:[%s10 + $0x1a0] sm:$0xff]
    %v3401 = vld [vmem:[%s10 + $0x1a8] sm:$0xff]
    %v3402 = vld [vmem:[%s10 + $0x1b0] sm:$0xff]
    %v3403 = vld [vmem:[%s10 + $0x1b8] sm:$0xff]
    %v3404 = vld [vmem:[%s10 + $0x1c0] sm:$0xff]
    %v3405 = vld [vmem:[%s10 + $0x1c8] sm:$0xff]
    %v3406 = vld [vmem:[%s10 + $0x1d0] sm:$0xff]
    %v3407 = vld [vmem:[%s10 + $0x1d8] sm:$0xff]
    %v3408 = vld [vmem:[%s10 + $0x1e0] sm:$0xff]
    %v3409 = vld [vmem:[%s10 + $0x1e8] sm:$0xff]
    %v3410 = vld [vmem:[%s10 + $0x1f0] sm:$0xff]
    %v3411 = vld [vmem:[%s10 + $0x1f8] sm:$0xff]
    %v3412 = vld [vmem:[%s10 + $0x200] sm:$0xff]
    %v3413 = vld [vmem:[%s10 + $0x208] sm:$0xff]
    %v3414 = vld [vmem:[%s10 + $0x210] sm:$0xff]
    %v3415 = vld [vmem:[%s10 + $0x218] sm:$0xff]
    %v3416 = vld [vmem:[%s10 + $0x220] sm:$0xff]
    %v3417 = vld [vmem:[%s10 + $0x228] sm:$0xff]
    %v3418 = vld [vmem:[%s10 + $0x230] sm:$0xff]
    %v3419 = vld [vmem:[%s10 + $0x238] sm:$0xff]
    %v3420 = vld [vmem:[%s10 + $0x240] sm:$0xff]
    %v3421 = vld [vmem:[%s10 + $0x248] sm:$0xff]
    %v3422 = vld [vmem:[%s10 + $0x250] sm:$0xff]
    %v3423 = vld [vmem:[%s10 + $0x258] sm:$0xff]
    %v3424 = vld [vmem:[%s10 + $0x260] sm:$0xff]
    %v3425 = vld [vmem:[%s10 + $0x268] sm:$0xff]
    %v3426 = vld [vmem:[%s10 + $0x270] sm:$0xff]
    %v3427 = vld [vmem:[%s10 + $0x278] sm:$0xff]
    %v3428 = vld [vmem:[%s10 + $0x280] sm:$0xff]
    %v3429 = vld [vmem:[%s10 + $0x288] sm:$0xff]
    %v3430 = vld [vmem:[%s10 + $0x290] sm:$0xff]
    %v3431 = vld [vmem:[%s10 + $0x298] sm:$0xff]
    %v3432 = vld [vmem:[%s10 + $0x2a0] sm:$0xff]
    %v3433 = vld [vmem:[%s10 + $0x2a8] sm:$0xff]
    %v3434 = vld [vmem:[%s10 + $0x2b0] sm:$0xff]
    %v3435 = vld [vmem:[%s10 + $0x2b8] sm:$0xff]
    %v3436 = vld [vmem:[%s10 + $0x2c0] sm:$0xff]
    %v3437 = vld [vmem:[%s10 + $0x2c8] sm:$0xff]
    %v3438 = vld [vmem:[%s10 + $0x2d0] sm:$0xff]
    %v3439 = vld [vmem:[%s10 + $0x2d8] sm:$0xff]
    %v3440 = vld [vmem:[%s10 + $0x2e0] sm:$0xff]
    %v3441 = vld [vmem:[%s10 + $0x2e8] sm:$0xff]
    %v3442 = vld [vmem:[%s10 + $0x2f0] sm:$0xff]
    %v3443 = vld [vmem:[%s10 + $0x2f8] sm:$0xff]
    %v3444 = vld [vmem:[%s11] sm:$0x3]
    %v3446 = vlaneseq
    %v3447 = vshrl.u32 %v3446, 7
    %v3448 = vsub.s32 0, %v3447
    %v3449 = vrot.slane %v3444, %v3448
    %v3450 = vlaneseq
    %v3451 = vshrl.u32 %v3450, 7
    %v3452 = vsub.s32 1, %v3451
    %v3453 = vrot.slane %v3444, %v3452
    %v3552 = vunpack.c.l.b16 %v3348
    %v3553 = vunpack.c.h.b16 %v3348
    %v3554 = vunpack.c.l.b16 %v3349
    %v3555 = vunpack.c.h.b16 %v3349
    %v3556 = vunpack.c.l.b16 %v3350
    %v3557 = vunpack.c.h.b16 %v3350
    %v3558 = vunpack.c.l.b16 %v3351
    %v3559 = vunpack.c.h.b16 %v3351
    %v3560 = vunpack.c.l.b16 %v3352
    %v3561 = vunpack.c.h.b16 %v3352
    %v3562 = vunpack.c.l.b16 %v3353
    %v3563 = vunpack.c.h.b16 %v3353
    %v3564 = vunpack.c.l.b16 %v3354
    %v3565 = vunpack.c.h.b16 %v3354
    %v3566 = vunpack.c.l.b16 %v3355
    %v3567 = vunpack.c.h.b16 %v3355
    %v3568 = vunpack.c.l.b16 %v3356
    %v3569 = vunpack.c.h.b16 %v3356
    %v3570 = vunpack.c.l.b16 %v3357
    %v3571 = vunpack.c.h.b16 %v3357
    %v3572 = vunpack.c.l.b16 %v3358
    %v3573 = vunpack.c.h.b16 %v3358
    %v3574 = vunpack.c.l.b16 %v3359
    %v3575 = vunpack.c.h.b16 %v3359
    %v3576 = vunpack.c.l.b16 %v3360
    %v3577 = vunpack.c.h.b16 %v3360
    %v3578 = vunpack.c.l.b16 %v3361
    %v3579 = vunpack.c.h.b16 %v3361
    %v3580 = vunpack.c.l.b16 %v3362
    %v3581 = vunpack.c.h.b16 %v3362
    %v3582 = vunpack.c.l.b16 %v3363
    %v3583 = vunpack.c.h.b16 %v3363
    %v3584 = vunpack.c.l.b16 %v3364
    %v3585 = vunpack.c.h.b16 %v3364
    %v3586 = vunpack.c.l.b16 %v3365
    %v3587 = vunpack.c.h.b16 %v3365
    %v3588 = vunpack.c.l.b16 %v3366
    %v3589 = vunpack.c.h.b16 %v3366
    %v3590 = vunpack.c.l.b16 %v3367
    %v3591 = vunpack.c.h.b16 %v3367
    %v3592 = vunpack.c.l.b16 %v3368
    %v3593 = vunpack.c.h.b16 %v3368
    %v3594 = vunpack.c.l.b16 %v3369
    %v3595 = vunpack.c.h.b16 %v3369
    %v3596 = vunpack.c.l.b16 %v3370
    %v3597 = vunpack.c.h.b16 %v3370
    %v3598 = vunpack.c.l.b16 %v3371
    %v3599 = vunpack.c.h.b16 %v3371
    %v3600 = vunpack.c.l.b16 %v3372
    %v3601 = vunpack.c.h.b16 %v3372
    %v3602 = vunpack.c.l.b16 %v3373
    %v3603 = vunpack.c.h.b16 %v3373
    %v3604 = vunpack.c.l.b16 %v3374
    %v3605 = vunpack.c.h.b16 %v3374
    %v3606 = vunpack.c.l.b16 %v3375
    %v3607 = vunpack.c.h.b16 %v3375
    %v3608 = vunpack.c.l.b16 %v3376
    %v3609 = vunpack.c.h.b16 %v3376
    %v3610 = vunpack.c.l.b16 %v3377
    %v3611 = vunpack.c.h.b16 %v3377
    %v3612 = vunpack.c.l.b16 %v3378
    %v3613 = vunpack.c.h.b16 %v3378
    %v3614 = vunpack.c.l.b16 %v3379
    %v3615 = vunpack.c.h.b16 %v3379
    %v3616 = vunpack.c.l.b16 %v3380
    %v3617 = vunpack.c.h.b16 %v3380
    %v3618 = vunpack.c.l.b16 %v3381
    %v3619 = vunpack.c.h.b16 %v3381
    %v3620 = vunpack.c.l.b16 %v3382
    %v3621 = vunpack.c.h.b16 %v3382
    %v3622 = vunpack.c.l.b16 %v3383
    %v3623 = vunpack.c.h.b16 %v3383
    %v3624 = vunpack.c.l.b16 %v3384
    %v3625 = vunpack.c.h.b16 %v3384
    %v3626 = vunpack.c.l.b16 %v3385
    %v3627 = vunpack.c.h.b16 %v3385
    %v3628 = vunpack.c.l.b16 %v3386
    %v3629 = vunpack.c.h.b16 %v3386
    %v3630 = vunpack.c.l.b16 %v3387
    %v3631 = vunpack.c.h.b16 %v3387
    %v3632 = vunpack.c.l.b16 %v3388
    %v3633 = vunpack.c.h.b16 %v3388
    %v3634 = vunpack.c.l.b16 %v3389
    %v3635 = vunpack.c.h.b16 %v3389
    %v3636 = vunpack.c.l.b16 %v3390
    %v3637 = vunpack.c.h.b16 %v3390
    %v3638 = vunpack.c.l.b16 %v3391
    %v3639 = vunpack.c.h.b16 %v3391
    %v3640 = vunpack.c.l.b16 %v3392
    %v3641 = vunpack.c.h.b16 %v3392
    %v3642 = vunpack.c.l.b16 %v3393
    %v3643 = vunpack.c.h.b16 %v3393
    %v3644 = vunpack.c.l.b16 %v3394
    %v3645 = vunpack.c.h.b16 %v3394
    %v3646 = vunpack.c.l.b16 %v3395
    %v3647 = vunpack.c.h.b16 %v3395
    %v3648 = vunpack.c.l.b16 %v3396
    %v3649 = vunpack.c.h.b16 %v3396
    %v3650 = vunpack.c.l.b16 %v3397
    %v3651 = vunpack.c.h.b16 %v3397
    %v3652 = vunpack.c.l.b16 %v3398
    %v3653 = vunpack.c.h.b16 %v3398
    %v3654 = vunpack.c.l.b16 %v3399
    %v3655 = vunpack.c.h.b16 %v3399
    %v3656 = vunpack.c.l.b16 %v3400
    %v3657 = vunpack.c.h.b16 %v3400
    %v3658 = vunpack.c.l.b16 %v3401
    %v3659 = vunpack.c.h.b16 %v3401
    %v3660 = vunpack.c.l.b16 %v3402
    %v3661 = vunpack.c.h.b16 %v3402
    %v3662 = vunpack.c.l.b16 %v3403
    %v3663 = vunpack.c.h.b16 %v3403
    %v3664 = vunpack.c.l.b16 %v3404
    %v3665 = vunpack.c.h.b16 %v3404
    %v3666 = vunpack.c.l.b16 %v3405
    %v3667 = vunpack.c.h.b16 %v3405
    %v3668 = vunpack.c.l.b16 %v3406
    %v3669 = vunpack.c.h.b16 %v3406
    %v3670 = vunpack.c.l.b16 %v3407
    %v3671 = vunpack.c.h.b16 %v3407
    %v3672 = vunpack.c.l.b16 %v3408
    %v3673 = vunpack.c.h.b16 %v3408
    %v3674 = vunpack.c.l.b16 %v3409
    %v3675 = vunpack.c.h.b16 %v3409
    %v3676 = vunpack.c.l.b16 %v3410
    %v3677 = vunpack.c.h.b16 %v3410
    %v3678 = vunpack.c.l.b16 %v3411
    %v3679 = vunpack.c.h.b16 %v3411
    %v3680 = vunpack.c.l.b16 %v3412
    %v3681 = vunpack.c.h.b16 %v3412
    %v3682 = vunpack.c.l.b16 %v3413
    %v3683 = vunpack.c.h.b16 %v3413
    %v3684 = vunpack.c.l.b16 %v3414
    %v3685 = vunpack.c.h.b16 %v3414
    %v3686 = vunpack.c.l.b16 %v3415
    %v3687 = vunpack.c.h.b16 %v3415
    %v3688 = vunpack.c.l.b16 %v3416
    %v3689 = vunpack.c.h.b16 %v3416
    %v3690 = vunpack.c.l.b16 %v3417
    %v3691 = vunpack.c.h.b16 %v3417
    %v3692 = vunpack.c.l.b16 %v3418
    %v3693 = vunpack.c.h.b16 %v3418
    %v3694 = vunpack.c.l.b16 %v3419
    %v3695 = vunpack.c.h.b16 %v3419
    %v3696 = vunpack.c.l.b16 %v3420
    %v3697 = vunpack.c.h.b16 %v3420
    %v3698 = vunpack.c.l.b16 %v3421
    %v3699 = vunpack.c.h.b16 %v3421
    %v3700 = vunpack.c.l.b16 %v3422
    %v3701 = vunpack.c.h.b16 %v3422
    %v3702 = vunpack.c.l.b16 %v3423
    %v3703 = vunpack.c.h.b16 %v3423
    %v3704 = vunpack.c.l.b16 %v3424
    %v3705 = vunpack.c.h.b16 %v3424
    %v3706 = vunpack.c.l.b16 %v3425
    %v3707 = vunpack.c.h.b16 %v3425
    %v3708 = vunpack.c.l.b16 %v3426
    %v3709 = vunpack.c.h.b16 %v3426
    %v3710 = vunpack.c.l.b16 %v3427
    %v3711 = vunpack.c.h.b16 %v3427
    %v3712 = vunpack.c.l.b16 %v3428
    %v3713 = vunpack.c.h.b16 %v3428
    %v3714 = vunpack.c.l.b16 %v3429
    %v3715 = vunpack.c.h.b16 %v3429
    %v3716 = vunpack.c.l.b16 %v3430
    %v3717 = vunpack.c.h.b16 %v3430
    %v3718 = vunpack.c.l.b16 %v3431
    %v3719 = vunpack.c.h.b16 %v3431
    %v3720 = vunpack.c.l.b16 %v3432
    %v3721 = vunpack.c.h.b16 %v3432
    %v3722 = vunpack.c.l.b16 %v3433
    %v3723 = vunpack.c.h.b16 %v3433
    %v3724 = vunpack.c.l.b16 %v3434
    %v3725 = vunpack.c.h.b16 %v3434
    %v3726 = vunpack.c.l.b16 %v3435
    %v3727 = vunpack.c.h.b16 %v3435
    %v3728 = vunpack.c.l.b16 %v3436
    %v3729 = vunpack.c.h.b16 %v3436
    %v3730 = vunpack.c.l.b16 %v3437
    %v3731 = vunpack.c.h.b16 %v3437
    %v3732 = vunpack.c.l.b16 %v3438
    %v3733 = vunpack.c.h.b16 %v3438
    %v3734 = vunpack.c.l.b16 %v3439
    %v3735 = vunpack.c.h.b16 %v3439
    %v3736 = vunpack.c.l.b16 %v3440
    %v3737 = vunpack.c.h.b16 %v3440
    %v3738 = vunpack.c.l.b16 %v3441
    %v3739 = vunpack.c.h.b16 %v3441
    %v3740 = vunpack.c.l.b16 %v3442
    %v3741 = vunpack.c.h.b16 %v3442
    %v3742 = vunpack.c.l.b16 %v3443
    %v3743 = vunpack.c.h.b16 %v3443
    %v3744 = vpack.c.b16 %v3554, %v3552
    %v3745 = vpack.c.b16 %v3555, %v3553
    %v3746 = vpack.c.b16 %v3558, %v3556
    %v3747 = vpack.c.b16 %v3559, %v3557
    %v3748 = vpack.c.b16 %v3562, %v3560
    %v3749 = vpack.c.b16 %v3563, %v3561
    %v3750 = vpack.c.b16 %v3566, %v3564
    %v3751 = vpack.c.b16 %v3567, %v3565
    %v3752 = vpack.c.b16 %v3570, %v3568
    %v3753 = vpack.c.b16 %v3571, %v3569
    %v3754 = vpack.c.b16 %v3574, %v3572
    %v3755 = vpack.c.b16 %v3575, %v3573
    %v3756 = vpack.c.b16 %v3578, %v3576
    %v3757 = vpack.c.b16 %v3579, %v3577
    %v3758 = vpack.c.b16 %v3582, %v3580
    %v3759 = vpack.c.b16 %v3583, %v3581
    %v3760 = vpack.c.b16 %v3586, %v3584
    %v3761 = vpack.c.b16 %v3587, %v3585
    %v3762 = vpack.c.b16 %v3590, %v3588
    %v3763 = vpack.c.b16 %v3591, %v3589
    %v3764 = vpack.c.b16 %v3594, %v3592
    %v3765 = vpack.c.b16 %v3595, %v3593
    %v3766 = vpack.c.b16 %v3598, %v3596
    %v3767 = vpack.c.b16 %v3599, %v3597
    %v3768 = vpack.c.b16 %v3602, %v3600
    %v3769 = vpack.c.b16 %v3603, %v3601
    %v3770 = vpack.c.b16 %v3606, %v3604
    %v3771 = vpack.c.b16 %v3607, %v3605
    %v3772 = vpack.c.b16 %v3610, %v3608
    %v3773 = vpack.c.b16 %v3611, %v3609
    %v3774 = vpack.c.b16 %v3614, %v3612
    %v3775 = vpack.c.b16 %v3615, %v3613
    %v3776 = vpack.c.b16 %v3618, %v3616
    %v3777 = vpack.c.b16 %v3619, %v3617
    %v3778 = vpack.c.b16 %v3622, %v3620
    %v3779 = vpack.c.b16 %v3623, %v3621
    %v3780 = vpack.c.b16 %v3626, %v3624
    %v3781 = vpack.c.b16 %v3627, %v3625
    %v3782 = vpack.c.b16 %v3630, %v3628
    %v3783 = vpack.c.b16 %v3631, %v3629
    %v3784 = vpack.c.b16 %v3634, %v3632
    %v3785 = vpack.c.b16 %v3635, %v3633
    %v3786 = vpack.c.b16 %v3638, %v3636
    %v3787 = vpack.c.b16 %v3639, %v3637
    %v3788 = vpack.c.b16 %v3642, %v3640
    %v3789 = vpack.c.b16 %v3643, %v3641
    %v3790 = vpack.c.b16 %v3646, %v3644
    %v3791 = vpack.c.b16 %v3647, %v3645
    %v3792 = vpack.c.b16 %v3650, %v3648
    %v3793 = vpack.c.b16 %v3651, %v3649
    %v3794 = vpack.c.b16 %v3654, %v3652
    %v3795 = vpack.c.b16 %v3655, %v3653
    %v3796 = vpack.c.b16 %v3658, %v3656
    %v3797 = vpack.c.b16 %v3659, %v3657
    %v3798 = vpack.c.b16 %v3662, %v3660
    %v3799 = vpack.c.b16 %v3663, %v3661
    %v3800 = vpack.c.b16 %v3666, %v3664
    %v3801 = vpack.c.b16 %v3667, %v3665
    %v3802 = vpack.c.b16 %v3670, %v3668
    %v3803 = vpack.c.b16 %v3671, %v3669
    %v3804 = vpack.c.b16 %v3674, %v3672
    %v3805 = vpack.c.b16 %v3675, %v3673
    %v3806 = vpack.c.b16 %v3678, %v3676
    %v3807 = vpack.c.b16 %v3679, %v3677
    %v3808 = vpack.c.b16 %v3682, %v3680
    %v3809 = vpack.c.b16 %v3683, %v3681
    %v3810 = vpack.c.b16 %v3686, %v3684
    %v3811 = vpack.c.b16 %v3687, %v3685
    %v3812 = vpack.c.b16 %v3690, %v3688
    %v3813 = vpack.c.b16 %v3691, %v3689
    %v3814 = vpack.c.b16 %v3694, %v3692
    %v3815 = vpack.c.b16 %v3695, %v3693
    %v3816 = vpack.c.b16 %v3698, %v3696
    %v3817 = vpack.c.b16 %v3699, %v3697
    %v3818 = vpack.c.b16 %v3702, %v3700
    %v3819 = vpack.c.b16 %v3703, %v3701
    %v3820 = vpack.c.b16 %v3706, %v3704
    %v3821 = vpack.c.b16 %v3707, %v3705
    %v3822 = vpack.c.b16 %v3710, %v3708
    %v3823 = vpack.c.b16 %v3711, %v3709
    %v3824 = vpack.c.b16 %v3714, %v3712
    %v3825 = vpack.c.b16 %v3715, %v3713
    %v3826 = vpack.c.b16 %v3718, %v3716
    %v3827 = vpack.c.b16 %v3719, %v3717
    %v3828 = vpack.c.b16 %v3722, %v3720
    %v3829 = vpack.c.b16 %v3723, %v3721
    %v3830 = vpack.c.b16 %v3726, %v3724
    %v3831 = vpack.c.b16 %v3727, %v3725
    %v3832 = vpack.c.b16 %v3730, %v3728
    %v3833 = vpack.c.b16 %v3731, %v3729
    %v3834 = vpack.c.b16 %v3734, %v3732
    %v3835 = vpack.c.b16 %v3735, %v3733
    %v3836 = vpack.c.b16 %v3738, %v3736
    %v3837 = vpack.c.b16 %v3739, %v3737
    %v3838 = vpack.c.b16 %v3742, %v3740
    %v3839 = vpack.c.b16 %v3743, %v3741
    %3936 = vmatprep.subr.bf16.mxu0 %v3745
    %3937 = vmatpush1.bf16.msra.mxu0 %v3744
    %3938 = vmatprep.subr.bf16.mxu0 %v3747
    %3939 = vmatpush1.bf16.msra.mxu0 %v3746
    %3940 = vmatprep.subr.bf16.mxu0 %v3749
    %3941 = vmatpush1.bf16.msra.mxu0 %v3748
    %3942 = vmatprep.subr.bf16.mxu0 %v3751
    %3943 = vmatpush1.bf16.msra.mxu0 %v3750
    %3944 = vmatprep.subr.bf16.mxu0 %v3753
    %3945 = vmatpush1.bf16.msra.mxu0 %v3752
    %3946 = vmatprep.subr.bf16.mxu0 %v3755
    %3947 = vmatpush1.bf16.msra.mxu0 %v3754
    %3948 = vmatprep.subr.bf16.mxu0 %v3757
    %3949 = vmatpush1.bf16.msra.mxu0 %v3756
    %3950 = vmatprep.subr.bf16.mxu0 %v3759
    %3951 = vmatpush1.bf16.msra.mxu0 %v3758
    %3952 = vmatprep.subr.bf16.mxu0 %v3761
    %3953 = vmatpush1.bf16.msra.mxu0 %v3760
    %3954 = vmatprep.subr.bf16.mxu0 %v3763
    %3955 = vmatpush1.bf16.msra.mxu0 %v3762
    %3956 = vmatprep.subr.bf16.mxu0 %v3765
    %3957 = vmatpush1.bf16.msra.mxu0 %v3764
    %3958 = vmatprep.subr.bf16.mxu0 %v3767
    %3959 = vmatpush1.bf16.msra.mxu0 %v3766
    %3960 = vmatprep.subr.bf16.mxu0 %v3769
    %3961 = vmatpush1.bf16.msra.mxu0 %v3768
    %3962 = vmatprep.subr.bf16.mxu0 %v3771
    %3963 = vmatpush1.bf16.msra.mxu0 %v3770
    %3964 = vmatprep.subr.bf16.mxu0 %v3773
    %3965 = vmatpush1.bf16.msra.mxu0 %v3772
    %3966 = vmatprep.subr.bf16.mxu0 %v3775
    %3967 = vmatpush1.bf16.msra.mxu0 %v3774
    %3968 = vmatprep.mubr.bf16.mxu0 %v625
    %3969 = vmatmul.mubr.bf16.gmra.mrb[0].mxu0 %v624
    %v3970 = vpop.f32.mrb[0].mxu0
    %v3971 = vadd.f32 %v3449, %v3970
    %v3972 = vpop.f32.mrb[0].mxu0
    %v3973 = vadd.f32 %v3453, %v3972
    %v3974 = vpop.f32.mrb[0].mxu0
    %v3975 = vpop.f32.mrb[0].mxu0
    %3976 = vdwg.mxu0
    %3977 = vmatprep.subr.bf16.mxu0 %v3777
    %3978 = vmatpush1.bf16.msra.mxu0 %v3776
    %3979 = vmatprep.subr.bf16.mxu0 %v3779
    %3980 = vmatpush1.bf16.msra.mxu0 %v3778
    %3981 = vmatprep.subr.bf16.mxu0 %v3781
    %3982 = vmatpush1.bf16.msra.mxu0 %v3780
    %3983 = vmatprep.subr.bf16.mxu0 %v3783
    %3984 = vmatpush1.bf16.msra.mxu0 %v3782
    %3985 = vmatprep.subr.bf16.mxu0 %v3785
    %3986 = vmatpush1.bf16.msra.mxu0 %v3784
    %3987 = vmatprep.subr.bf16.mxu0 %v3787
    %3988 = vmatpush1.bf16.msra.mxu0 %v3786
    %3989 = vmatprep.subr.bf16.mxu0 %v3789
    %3990 = vmatpush1.bf16.msra.mxu0 %v3788
    %3991 = vmatprep.subr.bf16.mxu0 %v3791
    %3992 = vmatpush1.bf16.msra.mxu0 %v3790
    %3993 = vmatprep.subr.bf16.mxu0 %v3793
    %3994 = vmatpush1.bf16.msra.mxu0 %v3792
    %3995 = vmatprep.subr.bf16.mxu0 %v3795
    %3996 = vmatpush1.bf16.msra.mxu0 %v3794
    %3997 = vmatprep.subr.bf16.mxu0 %v3797
    %3998 = vmatpush1.bf16.msra.mxu0 %v3796
    %3999 = vmatprep.subr.bf16.mxu0 %v3799
    %4000 = vmatpush1.bf16.msra.mxu0 %v3798
    %4001 = vmatprep.subr.bf16.mxu0 %v3801
    %4002 = vmatpush1.bf16.msra.mxu0 %v3800
    %4003 = vmatprep.subr.bf16.mxu0 %v3803
    %4004 = vmatpush1.bf16.msra.mxu0 %v3802
    %4005 = vmatprep.subr.bf16.mxu0 %v3805
    %4006 = vmatpush1.bf16.msra.mxu0 %v3804
    %4007 = vmatprep.subr.bf16.mxu0 %v3807
    %4008 = vmatpush1.bf16.msra.mxu0 %v3806
    %4009 = vmatprep.mubr.bf16.mxu0 %v627
    %4010 = vmatmul.mubr.bf16.gmra.mrb[0].mxu0 %v626
    %v4011 = vpop.f32.mrb[0].mxu0
    %v4012 = vadd.f32 %v3971, %v4011
    %v4013 = vpop.f32.mrb[0].mxu0
    %v4014 = vadd.f32 %v3973, %v4013
    %v4015 = vpop.f32.mrb[0].mxu0
    %v4016 = vpop.f32.mrb[0].mxu0
    %4017 = vdwg.mxu0
    %4018 = vmatprep.subr.bf16.mxu0 %v3809
    %4019 = vmatpush1.bf16.msra.mxu0 %v3808
    %4020 = vmatprep.subr.bf16.mxu0 %v3811
    %4021 = vmatpush1.bf16.msra.mxu0 %v3810
    %4022 = vmatprep.subr.bf16.mxu0 %v3813
    %4023 = vmatpush1.bf16.msra.mxu0 %v3812
    %4024 = vmatprep.subr.bf16.mxu0 %v3815
    %4025 = vmatpush1.bf16.msra.mxu0 %v3814
    %4026 = vmatprep.subr.bf16.mxu0 %v3817
    %4027 = vmatpush1.bf16.msra.mxu0 %v3816
    %4028 = vmatprep.subr.bf16.mxu0 %v3819
    %4029 = vmatpush1.bf16.msra.mxu0 %v3818
    %4030 = vmatprep.subr.bf16.mxu0 %v3821
    %4031 = vmatpush1.bf16.msra.mxu0 %v3820
    %4032 = vmatprep.subr.bf16.mxu0 %v3823
    %4033 = vmatpush1.bf16.msra.mxu0 %v3822
    %4034 = vmatprep.subr.bf16.mxu0 %v3825
    %4035 = vmatpush1.bf16.msra.mxu0 %v3824
    %4036 = vmatprep.subr.bf16.mxu0 %v3827
    %4037 = vmatpush1.bf16.msra.mxu0 %v3826
    %4038 = vmatprep.subr.bf16.mxu0 %v3829
    %4039 = vmatpush1.bf16.msra.mxu0 %v3828
    %4040 = vmatprep.subr.bf16.mxu0 %v3831
    %4041 = vmatpush1.bf16.msra.mxu0 %v3830
    %4042 = vmatprep.subr.bf16.mxu0 %v3833
    %4043 = vmatpush1.bf16.msra.mxu0 %v3832
    %4044 = vmatprep.subr.bf16.mxu0 %v3835
    %4045 = vmatpush1.bf16.msra.mxu0 %v3834
    %4046 = vmatprep.subr.bf16.mxu0 %v3837
    %4047 = vmatpush1.bf16.msra.mxu0 %v3836
    %4048 = vmatprep.subr.bf16.mxu0 %v3839
    %4049 = vmatpush1.bf16.msra.mxu0 %v3838
    %4050 = vmatprep.mubr.bf16.mxu0 %v629
    %4051 = vmatmul.mubr.bf16.gmra.mrb[0].mxu0 %v628
    %v4052 = vpop.f32.mrb[0].mxu0
    %v4053 = vadd.f32 %v4012, %v4052
    %v4054 = vpop.f32.mrb[0].mxu0
    %v4055 = vadd.f32 %v4014, %v4054
    %v4056 = vpop.f32.mrb[0].mxu0
    %v4057 = vpop.f32.mrb[0].mxu0
    %4058 = vdwg.mxu0
    %v4059 = vmax.f32 %v4053, 0.0
    %v4060 = vmax.f32 %v4055, 0.0
    %v4061 = vpack.c.bf16 %v4059, %v4059
    %v4062 = vpack.c.bf16 %v4060, %v4060
    %v4063 = vld [vmem:[%s12] sm:$0xf]
    %v4064 = vld [vmem:[%s12 + $0x4] sm:$0xf]
    %v4065 = vld [vmem:[%s12 + $0x8] sm:$0xf]
    %v4066 = vld [vmem:[%s12 + $0xc] sm:$0xf]
    %v4067 = vld [vmem:[%s12 + $0x10] sm:$0xf]
    %v4068 = vld [vmem:[%s12 + $0x14] sm:$0xf]
    %v4069 = vld [vmem:[%s12 + $0x18] sm:$0xf]
    %v4070 = vld [vmem:[%s12 + $0x1c] sm:$0xf]
    %v4071 = vld [vmem:[%s12 + $0x20] sm:$0xf]
    %v4072 = vld [vmem:[%s12 + $0x24] sm:$0xf]
    %v4073 = vld [vmem:[%s12 + $0x28] sm:$0xf]
    %v4074 = vld [vmem:[%s12 + $0x2c] sm:$0xf]
    %v4075 = vld [vmem:[%s12 + $0x30] sm:$0xf]
    %v4076 = vld [vmem:[%s12 + $0x34] sm:$0xf]
    %v4077 = vld [vmem:[%s12 + $0x38] sm:$0xf]
    %v4078 = vld [vmem:[%s12 + $0x3c] sm:$0xf]
    %v4079 = vld [vmem:[%s12 + $0x40] sm:$0xf]
    %v4080 = vld [vmem:[%s12 + $0x44] sm:$0xf]
    %v4081 = vld [vmem:[%s12 + $0x48] sm:$0xf]
    %v4082 = vld [vmem:[%s12 + $0x4c] sm:$0xf]
    %v4083 = vld [vmem:[%s12 + $0x50] sm:$0xf]
    %v4084 = vld [vmem:[%s12 + $0x54] sm:$0xf]
    %v4085 = vld [vmem:[%s12 + $0x58] sm:$0xf]
    %v4086 = vld [vmem:[%s12 + $0x5c] sm:$0xf]
    %v4087 = vld [vmem:[%s12 + $0x60] sm:$0xf]
    %v4088 = vld [vmem:[%s12 + $0x64] sm:$0xf]
    %v4089 = vld [vmem:[%s12 + $0x68] sm:$0xf]
    %v4090 = vld [vmem:[%s12 + $0x6c] sm:$0xf]
    %v4091 = vld [vmem:[%s12 + $0x70] sm:$0xf]
    %v4092 = vld [vmem:[%s12 + $0x74] sm:$0xf]
    %v4093 = vld [vmem:[%s12 + $0x78] sm:$0xf]
    %v4094 = vld [vmem:[%s12 + $0x7c] sm:$0xf]
    %v4095 = vld [vmem:[%s13] sm:$0x1]
    %v4097 = vlaneseq
    %v4098 = vshrl.u32 %v4097, 7
    %v4099 = vsub.s32 0, %v4098
    %v4100 = vrot.slane %v4095, %v4099
    %v4134 = vunpack.c.l.b16 %v4063
    %v4135 = vunpack.c.l.b16 %v4064
    %v4136 = vunpack.c.l.b16 %v4065
    %v4137 = vunpack.c.l.b16 %v4066
    %v4138 = vunpack.c.l.b16 %v4067
    %v4139 = vunpack.c.l.b16 %v4068
    %v4140 = vunpack.c.l.b16 %v4069
    %v4141 = vunpack.c.l.b16 %v4070
    %v4142 = vunpack.c.l.b16 %v4071
    %v4143 = vunpack.c.l.b16 %v4072
    %v4144 = vunpack.c.l.b16 %v4073
    %v4145 = vunpack.c.l.b16 %v4074
    %v4146 = vunpack.c.l.b16 %v4075
    %v4147 = vunpack.c.l.b16 %v4076
    %v4148 = vunpack.c.l.b16 %v4077
    %v4149 = vunpack.c.l.b16 %v4078
    %v4150 = vunpack.c.l.b16 %v4079
    %v4151 = vunpack.c.l.b16 %v4080
    %v4152 = vunpack.c.l.b16 %v4081
    %v4153 = vunpack.c.l.b16 %v4082
    %v4154 = vunpack.c.l.b16 %v4083
    %v4155 = vunpack.c.l.b16 %v4084
    %v4156 = vunpack.c.l.b16 %v4085
    %v4157 = vunpack.c.l.b16 %v4086
    %v4158 = vunpack.c.l.b16 %v4087
    %v4159 = vunpack.c.l.b16 %v4088
    %v4160 = vunpack.c.l.b16 %v4089
    %v4161 = vunpack.c.l.b16 %v4090
    %v4162 = vunpack.c.l.b16 %v4091
    %v4163 = vunpack.c.l.b16 %v4092
    %v4164 = vunpack.c.l.b16 %v4093
    %v4165 = vunpack.c.l.b16 %v4094
    %v4166 = vpack.c.b16 %v4135, %v4134
    %v4167 = vpack.c.b16 %v4137, %v4136
    %v4168 = vpack.c.b16 %v4139, %v4138
    %v4169 = vpack.c.b16 %v4141, %v4140
    %v4170 = vpack.c.b16 %v4143, %v4142
    %v4171 = vpack.c.b16 %v4145, %v4144
    %v4172 = vpack.c.b16 %v4147, %v4146
    %v4173 = vpack.c.b16 %v4149, %v4148
    %v4174 = vpack.c.b16 %v4151, %v4150
    %v4175 = vpack.c.b16 %v4153, %v4152
    %v4176 = vpack.c.b16 %v4155, %v4154
    %v4177 = vpack.c.b16 %v4157, %v4156
    %v4178 = vpack.c.b16 %v4159, %v4158
    %v4179 = vpack.c.b16 %v4161, %v4160
    %v4180 = vpack.c.b16 %v4163, %v4162
    %v4181 = vpack.c.b16 %v4165, %v4164
    %4198 = vmatprep.subr.bf16.mxu0 0
    %4199 = vmatpush1.bf16.msra.mxu0 %v4166
    %4200 = vmatprep.subr.bf16.mxu0 0
    %4201 = vmatpush1.bf16.msra.mxu0 %v4167
    %4202 = vmatprep.subr.bf16.mxu0 0
    %4203 = vmatpush1.bf16.msra.mxu0 %v4168
    %4204 = vmatprep.subr.bf16.mxu0 0
    %4205 = vmatpush1.bf16.msra.mxu0 %v4169
    %4206 = vmatprep.subr.bf16.mxu0 0
    %4207 = vmatpush1.bf16.msra.mxu0 %v4170
    %4208 = vmatprep.subr.bf16.mxu0 0
    %4209 = vmatpush1.bf16.msra.mxu0 %v4171
    %4210 = vmatprep.subr.bf16.mxu0 0
    %4211 = vmatpush1.bf16.msra.mxu0 %v4172
    %4212 = vmatprep.subr.bf16.mxu0 0
    %4213 = vmatpush1.bf16.msra.mxu0 %v4173
    %4214 = vmatprep.subr.bf16.mxu0 0
    %4215 = vmatpush1.bf16.msra.mxu0 %v4174
    %4216 = vmatprep.subr.bf16.mxu0 0
    %4217 = vmatpush1.bf16.msra.mxu0 %v4175
    %4218 = vmatprep.subr.bf16.mxu0 0
    %4219 = vmatpush1.bf16.msra.mxu0 %v4176
    %4220 = vmatprep.subr.bf16.mxu0 0
    %4221 = vmatpush1.bf16.msra.mxu0 %v4177
    %4222 = vmatprep.subr.bf16.mxu0 0
    %4223 = vmatpush1.bf16.msra.mxu0 %v4178
    %4224 = vmatprep.subr.bf16.mxu0 0
    %4225 = vmatpush1.bf16.msra.mxu0 %v4179
    %4226 = vmatprep.subr.bf16.mxu0 0
    %4227 = vmatpush1.bf16.msra.mxu0 %v4180
    %4228 = vmatprep.subr.bf16.mxu0 0
    %4229 = vmatpush1.bf16.msra.mxu0 %v4181
    %4230 = vmatprep.mubr.bf16.mxu0 %v4062
    %4231 = vmatmul.mubr.bf16.gmra.mrb[0].mxu0 %v4061
    %v4232 = vpop.f32.mrb[0].mxu0
    %v4233 = vadd.f32 %v4100, %v4232
    %v4234 = vpop.f32.mrb[0].mxu0
    %v4235 = vpop.f32.mrb[0].mxu0
    %v4236 = vpop.f32.mrb[0].mxu0
    %4237 = vdwg.mxu0
    %v4238 = vmax.f32 %v4233, 0.0
    %v4239 = vpack.c.bf16 %v3278, %v3278
    %v4240 = vld [vmem:[#allocation6] sm:$0xff]
    %v4241 = vld [vmem:[#allocation6 + $0x8] sm:$0xff]
    %v4242 = vld [vmem:[#allocation6 + $0x10] sm:$0xff]
    %v4243 = vld [vmem:[#allocation6 + $0x18] sm:$0xff]
    %v4244 = vld [vmem:[#allocation6 + $0x20] sm:$0xff]
    %v4245 = vld [vmem:[#allocation6 + $0x28] sm:$0xff]
    %v4246 = vld [vmem:[#allocation6 + $0x30] sm:$0xff]
    %v4247 = vld [vmem:[#allocation6 + $0x38] sm:$0xff]
    %v4248 = vpack.c.bf16 %v3347, %v3347
    %v4249 = vld [vmem:[%s15] sm:$0xff]
    %v4250 = vld [vmem:[%s15 + $0x8] sm:$0xff]
    %v4253 = vunpack.c.l.b16 %v4249
    %v4254 = vunpack.c.h.b16 %v4249
    %v4255 = vunpack.c.l.b16 %v4250
    %v4256 = vunpack.c.h.b16 %v4250
    %v4257 = vpack.c.b16 %v4253, %v4253
    %v4258 = vpack.c.b16 %v4254, %v4254
    %v4259 = vpack.c.b16 %v4255, %v4255
    %v4260 = vpack.c.b16 %v4256, %v4256
    %vm4261 = vcmask 64512
    %v4263 = vsel %vm4261, %v4248, 0
    %vm4265 = vcmask 1043456
    %v4267 = vsel %vm4265, %v4257, 0
    %v4270 = vsel %vm4265, %v4258, 0
    %v4273 = vsel %vm4265, %v4259, 0
    %v4276 = vsel %vm4265, %v4260, 0
    %4278 = vmatprep.subr.bf16.mxu0 %v4270
    %4279 = vmatpush1.bf16.msra.mxu0 %v4267
    %4280 = vmatprep.subr.bf16.mxu0 0
    %4281 = vmatpush1.bf16.msra.mxu0 0
    %4282 = vmatprep.subr.bf16.mxu0 0
    %4283 = vmatpush1.bf16.msra.mxu0 0
    %4284 = vmatprep.subr.bf16.mxu0 0
    %4285 = vmatpush1.bf16.msra.mxu0 0
    %4286 = vmatprep.subr.bf16.mxu0 0
    %4287 = vmatpush1.bf16.msra.mxu0 0
    %4288 = vmatprep.subr.bf16.mxu0 0
    %4289 = vmatpush1.bf16.msra.mxu0 0
    %4290 = vmatprep.subr.bf16.mxu0 0
    %4291 = vmatpush1.bf16.msra.mxu0 0
    %4292 = vmatprep.subr.bf16.mxu0 0
    %4293 = vmatpush1.bf16.msra.mxu0 0
    %4294 = vmatprep.subr.bf16.mxu0 0
    %4295 = vmatpush1.bf16.msra.mxu0 0
    %4296 = vmatprep.subr.bf16.mxu0 0
    %4297 = vmatpush1.bf16.msra.mxu0 0
    %4298 = vmatprep.subr.bf16.mxu0 0
    %4299 = vmatpush1.bf16.msra.mxu0 0
    %4300 = vmatprep.subr.bf16.mxu0 0
    %4301 = vmatpush1.bf16.msra.mxu0 0
    %4302 = vmatprep.subr.bf16.mxu0 0
    %4303 = vmatpush1.bf16.msra.mxu0 0
    %4304 = vmatprep.subr.bf16.mxu0 0
    %4305 = vmatpush1.bf16.msra.mxu0 0
    %4306 = vmatprep.subr.bf16.mxu0 0
    %4307 = vmatpush1.bf16.msra.mxu0 0
    %4308 = vmatprep.subr.bf16.mxu0 0
    %4309 = vmatpush1.bf16.msra.mxu0 0
    %4310 = vmatprep.mubr.bf16.mxu0 0
    %4311 = vmatmul.mubr.bf16.gmra.mrb[0].mxu0 %v4263
    %v4312 = vpop.f32.mrb[0].mxu0
    %v4313 = vadd.f32 0.0, %v4312
    %v4314 = vpop.f32.mrb[0].mxu0
    %v4315 = vadd.f32 0.0, %v4314
    %v4316 = vpop.f32.mrb[0].mxu0
    %v4317 = vpop.f32.mrb[0].mxu0
    %4318 = vdwg.mxu0
    %4319 = vmatprep.subr.bf16.mxu0 %v4276
    %4320 = vmatpush1.bf16.msra.mxu0 %v4273
    %4321 = vmatprep.subr.bf16.mxu0 0
    %4322 = vmatpush1.bf16.msra.mxu0 0
    %4323 = vmatprep.subr.bf16.mxu0 0
    %4324 = vmatpush1.bf16.msra.mxu0 0
    %4325 = vmatprep.subr.bf16.mxu0 0
    %4326 = vmatpush1.bf16.msra.mxu0 0
    %4327 = vmatprep.subr.bf16.mxu0 0
    %4328 = vmatpush1.bf16.msra.mxu0 0
    %4329 = vmatprep.subr.bf16.mxu0 0
    %4330 = vmatpush1.bf16.msra.mxu0 0
    %4331 = vmatprep.subr.bf16.mxu0 0
    %4332 = vmatpush1.bf16.msra.mxu0 0
    %4333 = vmatprep.subr.bf16.mxu0 0
    %4334 = vmatpush1.bf16.msra.mxu0 0
    %4335 = vmatprep.subr.bf16.mxu0 0
    %4336 = vmatpush1.bf16.msra.mxu0 0
    %4337 = vmatprep.subr.bf16.mxu0 0
    %4338 = vmatpush1.bf16.msra.mxu0 0
    %4339 = vmatprep.subr.bf16.mxu0 0
    %4340 = vmatpush1.bf16.msra.mxu0 0
    %4341 = vmatprep.subr.bf16.mxu0 0
    %4342 = vmatpush1.bf16.msra.mxu0 0
    %4343 = vmatprep.subr.bf16.mxu0 0
    %4344 = vmatpush1.bf16.msra.mxu0 0
    %4345 = vmatprep.subr.bf16.mxu0 0
    %4346 = vmatpush1.bf16.msra.mxu0 0
    %4347 = vmatprep.subr.bf16.mxu0 0
    %4348 = vmatpush1.bf16.msra.mxu0 0
    %4349 = vmatprep.subr.bf16.mxu0 0
    %4350 = vmatpush1.bf16.msra.mxu0 0
    %4351 = vmatprep.mubr.bf16.mxu0 0
    %4352 = vmatmul.mubr.bf16.gmra.mrb[0].mxu0 %v4263
    %v4353 = vpop.f32.mrb[0].mxu0
    %v4354 = vadd.f32 0.0, %v4353
    %v4355 = vpop.f32.mrb[0].mxu0
    %v4356 = vadd.f32 0.0, %v4355
    %v4357 = vpop.f32.mrb[0].mxu0
    %v4358 = vpop.f32.mrb[0].mxu0
    %4359 = vdwg.mxu0
    %v4368 = vunpack.c.l.b16 %v4240
    %v4369 = vunpack.c.h.b16 %v4240
    %v4370 = vunpack.c.l.b16 %v4241
    %v4371 = vunpack.c.h.b16 %v4241
    %v4372 = vunpack.c.l.b16 %v4242
    %v4373 = vunpack.c.h.b16 %v4242
    %v4374 = vunpack.c.l.b16 %v4243
    %v4375 = vunpack.c.h.b16 %v4243
    %v4376 = vunpack.c.l.b16 %v4244
    %v4377 = vunpack.c.h.b16 %v4244
    %v4378 = vunpack.c.l.b16 %v4245
    %v4379 = vunpack.c.h.b16 %v4245
    %v4380 = vunpack.c.l.b16 %v4246
    %v4381 = vunpack.c.h.b16 %v4246
    %v4382 = vunpack.c.l.b16 %v4247
    %v4383 = vunpack.c.h.b16 %v4247
    %v4384 = vpack.c.b16 %v4372, %v4368
    %v4385 = vpack.c.b16 %v4373, %v4369
    %v4386 = vpack.c.b16 %v4374, %v4370
    %v4387 = vpack.c.b16 %v4375, %v4371
    %v4388 = vpack.c.b16 %v4380, %v4376
    %v4389 = vpack.c.b16 %v4381, %v4377
    %v4390 = vpack.c.b16 %v4382, %v4378
    %v4391 = vpack.c.b16 %v4383, %v4379
    %v4401 = vsel %vm3303, %v4239, 0
    %4403 = vmatprep.subr.bf16.mxu0 %v4385
    %4404 = vmatpush1.bf16.msra.mxu0 %v4384
    %4405 = vmatprep.subr.bf16.mxu0 %v4389
    %4406 = vmatpush1.bf16.msra.mxu0 %v4388
    %4407 = vmatprep.subr.bf16.mxu0 0
    %4408 = vmatpush1.bf16.msra.mxu0 0
    %4409 = vmatprep.subr.bf16.mxu0 0
    %4410 = vmatpush1.bf16.msra.mxu0 0
    %4411 = vmatprep.subr.bf16.mxu0 0
    %4412 = vmatpush1.bf16.msra.mxu0 0
    %4413 = vmatprep.subr.bf16.mxu0 0
    %4414 = vmatpush1.bf16.msra.mxu0 0
    %4415 = vmatprep.subr.bf16.mxu0 0
    %4416 = vmatpush1.bf16.msra.mxu0 0
    %4417 = vmatprep.subr.bf16.mxu0 0
    %4418 = vmatpush1.bf16.msra.mxu0 0
    %4419 = vmatprep.subr.bf16.mxu0 0
    %4420 = vmatpush1.bf16.msra.mxu0 0
    %4421 = vmatprep.subr.bf16.mxu0 0
    %4422 = vmatpush1.bf16.msra.mxu0 0
    %4423 = vmatprep.subr.bf16.mxu0 0
    %4424 = vmatpush1.bf16.msra.mxu0 0
    %4425 = vmatprep.subr.bf16.mxu0 0
    %4426 = vmatpush1.bf16.msra.mxu0 0
    %4427 = vmatprep.subr.bf16.mxu0 0
    %4428 = vmatpush1.bf16.msra.mxu0 0
    %4429 = vmatprep.subr.bf16.mxu0 0
    %4430 = vmatpush1.bf16.msra.mxu0 0
    %4431 = vmatprep.subr.bf16.mxu0 0
    %4432 = vmatpush1.bf16.msra.mxu0 0
    %4433 = vmatprep.subr.bf16.mxu0 0
    %4434 = vmatpush1.bf16.msra.mxu0 0
    %4435 = vmatprep.mubr.bf16.mxu0 0
    %4436 = vmatmul.mubr.bf16.gmra.mrb[0].mxu0 %v4401
    %v4437 = vpop.f32.mrb[0].mxu0
    %v4438 = vadd.f32 %v4313, %v4437
    %v4439 = vpop.f32.mrb[0].mxu0
    %v4440 = vadd.f32 %v4315, %v4439
    %v4441 = vpop.f32.mrb[0].mxu0
    %v4442 = vpop.f32.mrb[0].mxu0
    %4443 = vdwg.mxu0
    %4444 = vmatprep.subr.bf16.mxu0 %v4387
    %4445 = vmatpush1.bf16.msra.mxu0 %v4386
    %4446 = vmatprep.subr.bf16.mxu0 %v4391
    %4447 = vmatpush1.bf16.msra.mxu0 %v4390
    %4448 = vmatprep.subr.bf16.mxu0 0
    %4449 = vmatpush1.bf16.msra.mxu0 0
    %4450 = vmatprep.subr.bf16.mxu0 0
    %4451 = vmatpush1.bf16.msra.mxu0 0
    %4452 = vmatprep.subr.bf16.mxu0 0
    %4453 = vmatpush1.bf16.msra.mxu0 0
    %4454 = vmatprep.subr.bf16.mxu0 0
    %4455 = vmatpush1.bf16.msra.mxu0 0
    %4456 = vmatprep.subr.bf16.mxu0 0
    %4457 = vmatpush1.bf16.msra.mxu0 0
    %4458 = vmatprep.subr.bf16.mxu0 0
    %4459 = vmatpush1.bf16.msra.mxu0 0
    %4460 = vmatprep.subr.bf16.mxu0 0
    %4461 = vmatpush1.bf16.msra.mxu0 0
    %4462 = vmatprep.subr.bf16.mxu0 0
    %4463 = vmatpush1.bf16.msra.mxu0 0
    %4464 = vmatprep.subr.bf16.mxu0 0
    %4465 = vmatpush1.bf16.msra.mxu0 0
    %4466 = vmatprep.subr.bf16.mxu0 0
    %4467 = vmatpush1.bf16.msra.mxu0 0
    %4468 = vmatprep.subr.bf16.mxu0 0
    %4469 = vmatpush1.bf16.msra.mxu0 0
    %4470 = vmatprep.subr.bf16.mxu0 0
    %4471 = vmatpush1.bf16.msra.mxu0 0
    %4472 = vmatprep.subr.bf16.mxu0 0
    %4473 = vmatpush1.bf16.msra.mxu0 0
    %4474 = vmatprep.subr.bf16.mxu0 0
    %4475 = vmatpush1.bf16.msra.mxu0 0
    %4476 = vmatprep.mubr.bf16.mxu0 0
    %4477 = vmatmul.mubr.bf16.gmra.mrb[0].mxu0 %v4401
    %v4478 = vpop.f32.mrb[0].mxu0
    %v4479 = vadd.f32 %v4354, %v4478
    %v4480 = vpop.f32.mrb[0].mxu0
    %v4481 = vadd.f32 %v4356, %v4480
    %v4482 = vpop.f32.mrb[0].mxu0
    %v4483 = vpop.f32.mrb[0].mxu0
    %4484 = vdwg.mxu0
    %v4485 = vpack.c.bf16 %v4238, %v4238
    %v4486 = vld [vmem:[#allocation7] sm:$0xff]
    %v4487 = vld [vmem:[#allocation7 + $0x8] sm:$0xff]
    %v4488 = vld [vmem:[#allocation7 + $0x10] sm:$0xff]
    %v4489 = vld [vmem:[#allocation7 + $0x18] sm:$0xff]
    %v4490 = vld [vmem:[#allocation7 + $0x20] sm:$0xff]
    %v4491 = vld [vmem:[#allocation7 + $0x28] sm:$0xff]
    %v4492 = vld [vmem:[#allocation7 + $0x30] sm:$0xff]
    %v4493 = vld [vmem:[#allocation7 + $0x38] sm:$0xff]
    %v4494 = vld [vmem:[#allocation7 + $0x40] sm:$0xff]
    %v4495 = vld [vmem:[#allocation7 + $0x48] sm:$0xff]
    %v4496 = vld [vmem:[#allocation7 + $0x50] sm:$0xff]
    %v4497 = vld [vmem:[#allocation7 + $0x58] sm:$0xff]
    %v4498 = vld [vmem:[#allocation7 + $0x60] sm:$0xff]
    %v4499 = vld [vmem:[#allocation7 + $0x68] sm:$0xff]
    %v4500 = vld [vmem:[#allocation7 + $0x70] sm:$0xff]
    %v4501 = vld [vmem:[#allocation7 + $0x78] sm:$0xff]
    %v4518 = vunpack.c.l.b16 %v4486
    %v4519 = vunpack.c.h.b16 %v4486
    %v4520 = vunpack.c.l.b16 %v4487
    %v4521 = vunpack.c.h.b16 %v4487
    %v4522 = vunpack.c.l.b16 %v4488
    %v4523 = vunpack.c.h.b16 %v4488
    %v4524 = vunpack.c.l.b16 %v4489
    %v4525 = vunpack.c.h.b16 %v4489
    %v4526 = vunpack.c.l.b16 %v4490
    %v4527 = vunpack.c.h.b16 %v4490
    %v4528 = vunpack.c.l.b16 %v4491
    %v4529 = vunpack.c.h.b16 %v4491
    %v4530 = vunpack.c.l.b16 %v4492
    %v4531 = vunpack.c.h.b16 %v4492
    %v4532 = vunpack.c.l.b16 %v4493
    %v4533 = vunpack.c.h.b16 %v4493
    %v4534 = vunpack.c.l.b16 %v4494
    %v4535 = vunpack.c.h.b16 %v4494
    %v4536 = vunpack.c.l.b16 %v4495
    %v4537 = vunpack.c.h.b16 %v4495
    %v4538 = vunpack.c.l.b16 %v4496
    %v4539 = vunpack.c.h.b16 %v4496
    %v4540 = vunpack.c.l.b16 %v4497
    %v4541 = vunpack.c.h.b16 %v4497
    %v4542 = vunpack.c.l.b16 %v4498
    %v4543 = vunpack.c.h.b16 %v4498
    %v4544 = vunpack.c.l.b16 %v4499
    %v4545 = vunpack.c.h.b16 %v4499
    %v4546 = vunpack.c.l.b16 %v4500
    %v4547 = vunpack.c.h.b16 %v4500
    %v4548 = vunpack.c.l.b16 %v4501
    %v4549 = vunpack.c.h.b16 %v4501
    %v4550 = vpack.c.b16 %v4522, %v4518
    %v4551 = vpack.c.b16 %v4523, %v4519
    %v4552 = vpack.c.b16 %v4524, %v4520
    %v4553 = vpack.c.b16 %v4525, %v4521
    %v4554 = vpack.c.b16 %v4530, %v4526
    %v4555 = vpack.c.b16 %v4531, %v4527
    %v4556 = vpack.c.b16 %v4532, %v4528
    %v4557 = vpack.c.b16 %v4533, %v4529
    %v4558 = vpack.c.b16 %v4538, %v4534
    %v4559 = vpack.c.b16 %v4539, %v4535
    %v4560 = vpack.c.b16 %v4540, %v4536
    %v4561 = vpack.c.b16 %v4541, %v4537
    %v4562 = vpack.c.b16 %v4546, %v4542
    %v4563 = vpack.c.b16 %v4547, %v4543
    %v4564 = vpack.c.b16 %v4548, %v4544
    %v4565 = vpack.c.b16 %v4549, %v4545
    %vm4582 = vcmask 523264
    %v4584 = vsel %vm4582, %v4485, 0
    %4586 = vmatprep.subr.bf16.mxu0 %v4551
    %4587 = vmatpush1.bf16.msra.mxu0 %v4550
    %4588 = vmatprep.subr.bf16.mxu0 %v4555
    %4589 = vmatpush1.bf16.msra.mxu0 %v4554
    %4590 = vmatprep.subr.bf16.mxu0 %v4559
    %4591 = vmatpush1.bf16.msra.mxu0 %v4558
    %4592 = vmatprep.subr.bf16.mxu0 %v4563
    %4593 = vmatpush1.bf16.msra.mxu0 %v4562
    %4594 = vmatprep.subr.bf16.mxu0 0
    %4595 = vmatpush1.bf16.msra.mxu0 0
    %4596 = vmatprep.subr.bf16.mxu0 0
    %4597 = vmatpush1.bf16.msra.mxu0 0
    %4598 = vmatprep.subr.bf16.mxu0 0
    %4599 = vmatpush1.bf16.msra.mxu0 0
    %4600 = vmatprep.subr.bf16.mxu0 0
    %4601 = vmatpush1.bf16.msra.mxu0 0
    %4602 = vmatprep.subr.bf16.mxu0 0
    %4603 = vmatpush1.bf16.msra.mxu0 0
    %4604 = vmatprep.subr.bf16.mxu0 0
    %4605 = vmatpush1.bf16.msra.mxu0 0
    %4606 = vmatprep.subr.bf16.mxu0 0
    %4607 = vmatpush1.bf16.msra.mxu0 0
    %4608 = vmatprep.subr.bf16.mxu0 0
    %4609 = vmatpush1.bf16.msra.mxu0 0
    %4610 = vmatprep.subr.bf16.mxu0 0
    %4611 = vmatpush1.bf16.msra.mxu0 0
    %4612 = vmatprep.subr.bf16.mxu0 0
    %4613 = vmatpush1.bf16.msra.mxu0 0
    %4614 = vmatprep.subr.bf16.mxu0 0
    %4615 = vmatpush1.bf16.msra.mxu0 0
    %4616 = vmatprep.subr.bf16.mxu0 0
    %4617 = vmatpush1.bf16.msra.mxu0 0
    %4618 = vmatprep.mubr.bf16.mxu0 0
    %4619 = vmatmul.mubr.bf16.gmra.mrb[0].mxu0 %v4584
    %v4620 = vpop.f32.mrb[0].mxu0
    %v4621 = vadd.f32 0.0, %v4620
    %v4622 = vpop.f32.mrb[0].mxu0
    %v4623 = vadd.f32 0.0, %v4622
    %v4624 = vpop.f32.mrb[0].mxu0
    %v4625 = vpop.f32.mrb[0].mxu0
    %4626 = vdwg.mxu0
    %4627 = vmatprep.subr.bf16.mxu0 %v4553
    %4628 = vmatpush1.bf16.msra.mxu0 %v4552
    %4629 = vmatprep.subr.bf16.mxu0 %v4557
    %4630 = vmatpush1.bf16.msra.mxu0 %v4556
    %4631 = vmatprep.subr.bf16.mxu0 %v4561
    %4632 = vmatpush1.bf16.msra.mxu0 %v4560
    %4633 = vmatprep.subr.bf16.mxu0 %v4565
    %4634 = vmatpush1.bf16.msra.mxu0 %v4564
    %4635 = vmatprep.subr.bf16.mxu0 0
    %4636 = vmatpush1.bf16.msra.mxu0 0
    %4637 = vmatprep.subr.bf16.mxu0 0
    %4638 = vmatpush1.bf16.msra.mxu0 0
    %4639 = vmatprep.subr.bf16.mxu0 0
    %4640 = vmatpush1.bf16.msra.mxu0 0
    %4641 = vmatprep.subr.bf16.mxu0 0
    %4642 = vmatpush1.bf16.msra.mxu0 0
    %4643 = vmatprep.subr.bf16.mxu0 0
    %4644 = vmatpush1.bf16.msra.mxu0 0
    %4645 = vmatprep.subr.bf16.mxu0 0
    %4646 = vmatpush1.bf16.msra.mxu0 0
    %4647 = vmatprep.subr.bf16.mxu0 0
    %4648 = vmatpush1.bf16.msra.mxu0 0
    %4649 = vmatprep.subr.bf16.mxu0 0
    %4650 = vmatpush1.bf16.msra.mxu0 0
    %4651 = vmatprep.subr.bf16.mxu0 0
    %4652 = vmatpush1.bf16.msra.mxu0 0
    %4653 = vmatprep.subr.bf16.mxu0 0
    %4654 = vmatpush1.bf16.msra.mxu0 0
    %4655 = vmatprep.subr.bf16.mxu0 0
    %4656 = vmatpush1.bf16.msra.mxu0 0
    %4657 = vmatprep.subr.bf16.mxu0 0
    %4658 = vmatpush1.bf16.msra.mxu0 0
    %4659 = vmatprep.mubr.bf16.mxu0 0
    %4660 = vmatmul.mubr.bf16.gmra.mrb[0].mxu0 %v4584
    %v4661 = vpop.f32.mrb[0].mxu0
    %v4662 = vadd.f32 0.0, %v4661
    %v4663 = vpop.f32.mrb[0].mxu0
    %v4664 = vadd.f32 0.0, %v4663
    %v4665 = vpop.f32.mrb[0].mxu0
    %v4666 = vpop.f32.mrb[0].mxu0
    %4667 = vdwg.mxu0
    %v4668 = vadd.f32 %v4438, %v4621
    %v4669 = vadd.f32 %v4440, %v4623
    %v4670 = vadd.f32 %v4479, %v4662
    %v4671 = vadd.f32 %v4481, %v4664
    %v4672 = vld [vmem:[%s17] sm:$0xf]
    %v4674 = vlaneseq
    %v4675 = vshrl.u32 %v4674, 7
    %v4676 = vsub.s32 0, %v4675
    %v4677 = vrot.slane %v4672, %v4676
    %v4678 = vlaneseq
    %v4679 = vshrl.u32 %v4678, 7
    %v4680 = vsub.s32 1, %v4679
    %v4681 = vrot.slane %v4672, %v4680
    %v4682 = vlaneseq
    %v4683 = vshrl.u32 %v4682, 7
    %v4684 = vsub.s32 2, %v4683
    %v4685 = vrot.slane %v4672, %v4684
    %v4686 = vlaneseq
    %v4687 = vshrl.u32 %v4686, 7
    %v4688 = vsub.s32 3, %v4687
    %v4689 = vrot.slane %v4672, %v4688
    %v4694 = vadd.f32 %v4668, %v4677
    %v4695 = vadd.f32 %v4669, %v4681
    %v4696 = vadd.f32 %v4670, %v4685
    %v4697 = vadd.f32 %v4671, %v4689
    %v4698 = vmax.f32 %v4694, 0.0
    %v4699 = vmax.f32 %v4695, 0.0
    %v4700 = vmax.f32 %v4696, 0.0
    %v4701 = vmax.f32 %v4697, 0.0
    %v4702 = vpack.c.bf16 %v4698, %v4698
    %v4703 = vpack.c.bf16 %v4699, %v4699
    %v4704 = vpack.c.bf16 %v4700, %v4700
    %v4705 = vpack.c.bf16 %v4701, %v4701
    %v4706 = vld [vmem:[#allocation9] sm:$0xff]
    %v4707 = vld [vmem:[#allocation9 + $0x8] sm:$0xff]
    %v4708 = vld [vmem:[#allocation9 + $0x10] sm:$0xff]
    %v4709 = vld [vmem:[#allocation9 + $0x18] sm:$0xff]
    %v4710 = vld [vmem:[#allocation9 + $0x20] sm:$0xff]
    %v4711 = vld [vmem:[#allocation9 + $0x28] sm:$0xff]
    %v4712 = vld [vmem:[#allocation9 + $0x30] sm:$0xff]
    %v4713 = vld [vmem:[#allocation9 + $0x38] sm:$0xff]
    %v4714 = vld [vmem:[#allocation9 + $0x40] sm:$0xff]
    %v4715 = vld [vmem:[#allocation9 + $0x48] sm:$0xff]
    %v4716 = vld [vmem:[#allocation9 + $0x50] sm:$0xff]
    %v4717 = vld [vmem:[#allocation9 + $0x58] sm:$0xff]
    %v4718 = vld [vmem:[#allocation9 + $0x60] sm:$0xff]
    %v4719 = vld [vmem:[#allocation9 + $0x68] sm:$0xff]
    %v4720 = vld [vmem:[#allocation9 + $0x70] sm:$0xff]
    %v4721 = vld [vmem:[#allocation9 + $0x78] sm:$0xff]
    %v4722 = vld [vmem:[#allocation9 + $0x80] sm:$0xff]
    %v4723 = vld [vmem:[#allocation9 + $0x88] sm:$0xff]
    %v4724 = vld [vmem:[#allocation9 + $0x90] sm:$0xff]
    %v4725 = vld [vmem:[#allocation9 + $0x98] sm:$0xff]
    %v4726 = vld [vmem:[#allocation9 + $0xa0] sm:$0xff]
    %v4727 = vld [vmem:[#allocation9 + $0xa8] sm:$0xff]
    %v4728 = vld [vmem:[#allocation9 + $0xb0] sm:$0xff]
    %v4729 = vld [vmem:[#allocation9 + $0xb8] sm:$0xff]
    %v4730 = vld [vmem:[#allocation9 + $0xc0] sm:$0xff]
    %v4731 = vld [vmem:[#allocation9 + $0xc8] sm:$0xff]
    %v4732 = vld [vmem:[#allocation9 + $0xd0] sm:$0xff]
    %v4733 = vld [vmem:[#allocation9 + $0xd8] sm:$0xff]
    %v4734 = vld [vmem:[#allocation9 + $0xe0] sm:$0xff]
    %v4735 = vld [vmem:[#allocation9 + $0xe8] sm:$0xff]
    %v4736 = vld [vmem:[#allocation9 + $0xf0] sm:$0xff]
    %v4737 = vld [vmem:[#allocation9 + $0xf8] sm:$0xff]
    %v4738 = vld [vmem:[#allocation9 + $0x100] sm:$0xff]
    %v4739 = vld [vmem:[#allocation9 + $0x108] sm:$0xff]
    %v4740 = vld [vmem:[#allocation9 + $0x110] sm:$0xff]
    %v4741 = vld [vmem:[#allocation9 + $0x118] sm:$0xff]
    %v4742 = vld [vmem:[#allocation9 + $0x120] sm:$0xff]
    %v4743 = vld [vmem:[#allocation9 + $0x128] sm:$0xff]
    %v4744 = vld [vmem:[#allocation9 + $0x130] sm:$0xff]
    %v4745 = vld [vmem:[#allocation9 + $0x138] sm:$0xff]
    %v4746 = vld [vmem:[#allocation9 + $0x140] sm:$0xff]
    %v4747 = vld [vmem:[#allocation9 + $0x148] sm:$0xff]
    %v4748 = vld [vmem:[#allocation9 + $0x150] sm:$0xff]
    %v4749 = vld [vmem:[#allocation9 + $0x158] sm:$0xff]
    %v4750 = vld [vmem:[#allocation9 + $0x160] sm:$0xff]
    %v4751 = vld [vmem:[#allocation9 + $0x168] sm:$0xff]
    %v4752 = vld [vmem:[#allocation9 + $0x170] sm:$0xff]
    %v4753 = vld [vmem:[#allocation9 + $0x178] sm:$0xff]
    %v4754 = vld [vmem:[#allocation9 + $0x180] sm:$0xff]
    %v4755 = vld [vmem:[#allocation9 + $0x188] sm:$0xff]
    %v4756 = vld [vmem:[#allocation9 + $0x190] sm:$0xff]
    %v4757 = vld [vmem:[#allocation9 + $0x198] sm:$0xff]
    %v4758 = vld [vmem:[#allocation9 + $0x1a0] sm:$0xff]
    %v4759 = vld [vmem:[#allocation9 + $0x1a8] sm:$0xff]
    %v4760 = vld [vmem:[#allocation9 + $0x1b0] sm:$0xff]
    %v4761 = vld [vmem:[#allocation9 + $0x1b8] sm:$0xff]
    %v4762 = vld [vmem:[#allocation9 + $0x1c0] sm:$0xff]
    %v4763 = vld [vmem:[#allocation9 + $0x1c8] sm:$0xff]
    %v4764 = vld [vmem:[#allocation9 + $0x1d0] sm:$0xff]
    %v4765 = vld [vmem:[#allocation9 + $0x1d8] sm:$0xff]
    %v4766 = vld [vmem:[#allocation9 + $0x1e0] sm:$0xff]
    %v4767 = vld [vmem:[#allocation9 + $0x1e8] sm:$0xff]
    %v4768 = vld [vmem:[#allocation9 + $0x1f0] sm:$0xff]
    %v4769 = vld [vmem:[#allocation9 + $0x1f8] sm:$0xff]
    %v4770 = vld [vmem:[%s19] sm:$0x3]
    %v4772 = vlaneseq
    %v4773 = vshrl.u32 %v4772, 7
    %v4774 = vsub.s32 0, %v4773
    %v4775 = vrot.slane %v4770, %v4774
    %v4776 = vlaneseq
    %v4777 = vshrl.u32 %v4776, 7
    %v4778 = vsub.s32 1, %v4777
    %v4779 = vrot.slane %v4770, %v4778
    %v4846 = vunpack.c.l.b16 %v4706
    %v4847 = vunpack.c.h.b16 %v4706
    %v4848 = vunpack.c.l.b16 %v4707
    %v4849 = vunpack.c.h.b16 %v4707
    %v4850 = vunpack.c.l.b16 %v4708
    %v4851 = vunpack.c.h.b16 %v4708
    %v4852 = vunpack.c.l.b16 %v4709
    %v4853 = vunpack.c.h.b16 %v4709
    %v4854 = vunpack.c.l.b16 %v4710
    %v4855 = vunpack.c.h.b16 %v4710
    %v4856 = vunpack.c.l.b16 %v4711
    %v4857 = vunpack.c.h.b16 %v4711
    %v4858 = vunpack.c.l.b16 %v4712
    %v4859 = vunpack.c.h.b16 %v4712
    %v4860 = vunpack.c.l.b16 %v4713
    %v4861 = vunpack.c.h.b16 %v4713
    %v4862 = vunpack.c.l.b16 %v4714
    %v4863 = vunpack.c.h.b16 %v4714
    %v4864 = vunpack.c.l.b16 %v4715
    %v4865 = vunpack.c.h.b16 %v4715
    %v4866 = vunpack.c.l.b16 %v4716
    %v4867 = vunpack.c.h.b16 %v4716
    %v4868 = vunpack.c.l.b16 %v4717
    %v4869 = vunpack.c.h.b16 %v4717
    %v4870 = vunpack.c.l.b16 %v4718
    %v4871 = vunpack.c.h.b16 %v4718
    %v4872 = vunpack.c.l.b16 %v4719
    %v4873 = vunpack.c.h.b16 %v4719
    %v4874 = vunpack.c.l.b16 %v4720
    %v4875 = vunpack.c.h.b16 %v4720
    %v4876 = vunpack.c.l.b16 %v4721
    %v4877 = vunpack.c.h.b16 %v4721
    %v4878 = vunpack.c.l.b16 %v4722
    %v4879 = vunpack.c.h.b16 %v4722
    %v4880 = vunpack.c.l.b16 %v4723
    %v4881 = vunpack.c.h.b16 %v4723
    %v4882 = vunpack.c.l.b16 %v4724
    %v4883 = vunpack.c.h.b16 %v4724
    %v4884 = vunpack.c.l.b16 %v4725
    %v4885 = vunpack.c.h.b16 %v4725
    %v4886 = vunpack.c.l.b16 %v4726
    %v4887 = vunpack.c.h.b16 %v4726
    %v4888 = vunpack.c.l.b16 %v4727
    %v4889 = vunpack.c.h.b16 %v4727
    %v4890 = vunpack.c.l.b16 %v4728
    %v4891 = vunpack.c.h.b16 %v4728
    %v4892 = vunpack.c.l.b16 %v4729
    %v4893 = vunpack.c.h.b16 %v4729
    %v4894 = vunpack.c.l.b16 %v4730
    %v4895 = vunpack.c.h.b16 %v4730
    %v4896 = vunpack.c.l.b16 %v4731
    %v4897 = vunpack.c.h.b16 %v4731
    %v4898 = vunpack.c.l.b16 %v4732
    %v4899 = vunpack.c.h.b16 %v4732
    %v4900 = vunpack.c.l.b16 %v4733
    %v4901 = vunpack.c.h.b16 %v4733
    %v4902 = vunpack.c.l.b16 %v4734
    %v4903 = vunpack.c.h.b16 %v4734
    %v4904 = vunpack.c.l.b16 %v4735
    %v4905 = vunpack.c.h.b16 %v4735
    %v4906 = vunpack.c.l.b16 %v4736
    %v4907 = vunpack.c.h.b16 %v4736
    %v4908 = vunpack.c.l.b16 %v4737
    %v4909 = vunpack.c.h.b16 %v4737
    %v4910 = vunpack.c.l.b16 %v4738
    %v4911 = vunpack.c.h.b16 %v4738
    %v4912 = vunpack.c.l.b16 %v4739
    %v4913 = vunpack.c.h.b16 %v4739
    %v4914 = vunpack.c.l.b16 %v4740
    %v4915 = vunpack.c.h.b16 %v4740
    %v4916 = vunpack.c.l.b16 %v4741
    %v4917 = vunpack.c.h.b16 %v4741
    %v4918 = vunpack.c.l.b16 %v4742
    %v4919 = vunpack.c.h.b16 %v4742
    %v4920 = vunpack.c.l.b16 %v4743
    %v4921 = vunpack.c.h.b16 %v4743
    %v4922 = vunpack.c.l.b16 %v4744
    %v4923 = vunpack.c.h.b16 %v4744
    %v4924 = vunpack.c.l.b16 %v4745
    %v4925 = vunpack.c.h.b16 %v4745
    %v4926 = vunpack.c.l.b16 %v4746
    %v4927 = vunpack.c.h.b16 %v4746
    %v4928 = vunpack.c.l.b16 %v4747
    %v4929 = vunpack.c.h.b16 %v4747
    %v4930 = vunpack.c.l.b16 %v4748
    %v4931 = vunpack.c.h.b16 %v4748
    %v4932 = vunpack.c.l.b16 %v4749
    %v4933 = vunpack.c.h.b16 %v4749
    %v4934 = vunpack.c.l.b16 %v4750
    %v4935 = vunpack.c.h.b16 %v4750
    %v4936 = vunpack.c.l.b16 %v4751
    %v4937 = vunpack.c.h.b16 %v4751
    %v4938 = vunpack.c.l.b16 %v4752
    %v4939 = vunpack.c.h.b16 %v4752
    %v4940 = vunpack.c.l.b16 %v4753
    %v4941 = vunpack.c.h.b16 %v4753
    %v4942 = vunpack.c.l.b16 %v4754
    %v4943 = vunpack.c.h.b16 %v4754
    %v4944 = vunpack.c.l.b16 %v4755
    %v4945 = vunpack.c.h.b16 %v4755
    %v4946 = vunpack.c.l.b16 %v4756
    %v4947 = vunpack.c.h.b16 %v4756
    %v4948 = vunpack.c.l.b16 %v4757
    %v4949 = vunpack.c.h.b16 %v4757
    %v4950 = vunpack.c.l.b16 %v4758
    %v4951 = vunpack.c.h.b16 %v4758
    %v4952 = vunpack.c.l.b16 %v4759
    %v4953 = vunpack.c.h.b16 %v4759
    %v4954 = vunpack.c.l.b16 %v4760
    %v4955 = vunpack.c.h.b16 %v4760
    %v4956 = vunpack.c.l.b16 %v4761
    %v4957 = vunpack.c.h.b16 %v4761
    %v4958 = vunpack.c.l.b16 %v4762
    %v4959 = vunpack.c.h.b16 %v4762
    %v4960 = vunpack.c.l.b16 %v4763
    %v4961 = vunpack.c.h.b16 %v4763
    %v4962 = vunpack.c.l.b16 %v4764
    %v4963 = vunpack.c.h.b16 %v4764
    %v4964 = vunpack.c.l.b16 %v4765
    %v4965 = vunpack.c.h.b16 %v4765
    %v4966 = vunpack.c.l.b16 %v4766
    %v4967 = vunpack.c.h.b16 %v4766
    %v4968 = vunpack.c.l.b16 %v4767
    %v4969 = vunpack.c.h.b16 %v4767
    %v4970 = vunpack.c.l.b16 %v4768
    %v4971 = vunpack.c.h.b16 %v4768
    %v4972 = vunpack.c.l.b16 %v4769
    %v4973 = vunpack.c.h.b16 %v4769
    %v4974 = vpack.c.b16 %v4848, %v4846
    %v4975 = vpack.c.b16 %v4849, %v4847
    %v4976 = vpack.c.b16 %v4852, %v4850
    %v4977 = vpack.c.b16 %v4853, %v4851
    %v4978 = vpack.c.b16 %v4856, %v4854
    %v4979 = vpack.c.b16 %v4857, %v4855
    %v4980 = vpack.c.b16 %v4860, %v4858
    %v4981 = vpack.c.b16 %v4861, %v4859
    %v4982 = vpack.c.b16 %v4864, %v4862
    %v4983 = vpack.c.b16 %v4865, %v4863
    %v4984 = vpack.c.b16 %v4868, %v4866
    %v4985 = vpack.c.b16 %v4869, %v4867
    %v4986 = vpack.c.b16 %v4872, %v4870
    %v4987 = vpack.c.b16 %v4873, %v4871
    %v4988 = vpack.c.b16 %v4876, %v4874
    %v4989 = vpack.c.b16 %v4877, %v4875
    %v4990 = vpack.c.b16 %v4880, %v4878
    %v4991 = vpack.c.b16 %v4881, %v4879
    %v4992 = vpack.c.b16 %v4884, %v4882
    %v4993 = vpack.c.b16 %v4885, %v4883
    %v4994 = vpack.c.b16 %v4888, %v4886
    %v4995 = vpack.c.b16 %v4889, %v4887
    %v4996 = vpack.c.b16 %v4892, %v4890
    %v4997 = vpack.c.b16 %v4893, %v4891
    %v4998 = vpack.c.b16 %v4896, %v4894
    %v4999 = vpack.c.b16 %v4897, %v4895
    %v5000 = vpack.c.b16 %v4900, %v4898
    %v5001 = vpack.c.b16 %v4901, %v4899
    %v5002 = vpack.c.b16 %v4904, %v4902
    %v5003 = vpack.c.b16 %v4905, %v4903
    %v5004 = vpack.c.b16 %v4908, %v4906
    %v5005 = vpack.c.b16 %v4909, %v4907
    %v5006 = vpack.c.b16 %v4912, %v4910
    %v5007 = vpack.c.b16 %v4913, %v4911
    %v5008 = vpack.c.b16 %v4916, %v4914
    %v5009 = vpack.c.b16 %v4917, %v4915
    %v5010 = vpack.c.b16 %v4920, %v4918
    %v5011 = vpack.c.b16 %v4921, %v4919
    %v5012 = vpack.c.b16 %v4924, %v4922
    %v5013 = vpack.c.b16 %v4925, %v4923
    %v5014 = vpack.c.b16 %v4928, %v4926
    %v5015 = vpack.c.b16 %v4929, %v4927
    %v5016 = vpack.c.b16 %v4932, %v4930
    %v5017 = vpack.c.b16 %v4933, %v4931
    %v5018 = vpack.c.b16 %v4936, %v4934
    %v5019 = vpack.c.b16 %v4937, %v4935
    %v5020 = vpack.c.b16 %v4940, %v4938
    %v5021 = vpack.c.b16 %v4941, %v4939
    %v5022 = vpack.c.b16 %v4944, %v4942
    %v5023 = vpack.c.b16 %v4945, %v4943
    %v5024 = vpack.c.b16 %v4948, %v4946
    %v5025 = vpack.c.b16 %v4949, %v4947
    %v5026 = vpack.c.b16 %v4952, %v4950
    %v5027 = vpack.c.b16 %v4953, %v4951
    %v5028 = vpack.c.b16 %v4956, %v4954
    %v5029 = vpack.c.b16 %v4957, %v4955
    %v5030 = vpack.c.b16 %v4960, %v4958
    %v5031 = vpack.c.b16 %v4961, %v4959
    %v5032 = vpack.c.b16 %v4964, %v4962
    %v5033 = vpack.c.b16 %v4965, %v4963
    %v5034 = vpack.c.b16 %v4968, %v4966
    %v5035 = vpack.c.b16 %v4969, %v4967
    %v5036 = vpack.c.b16 %v4972, %v4970
    %v5037 = vpack.c.b16 %v4973, %v4971
    %5102 = vmatprep.subr.bf16.mxu0 %v4975
    %5103 = vmatpush1.bf16.msra.mxu0 %v4974
    %5104 = vmatprep.subr.bf16.mxu0 %v4977
    %5105 = vmatpush1.bf16.msra.mxu0 %v4976
    %5106 = vmatprep.subr.bf16.mxu0 %v4979
    %5107 = vmatpush1.bf16.msra.mxu0 %v4978
    %5108 = vmatprep.subr.bf16.mxu0 %v4981
    %5109 = vmatpush1.bf16.msra.mxu0 %v4980
    %5110 = vmatprep.subr.bf16.mxu0 %v4983
    %5111 = vmatpush1.bf16.msra.mxu0 %v4982
    %5112 = vmatprep.subr.bf16.mxu0 %v4985
    %5113 = vmatpush1.bf16.msra.mxu0 %v4984
    %5114 = vmatprep.subr.bf16.mxu0 %v4987
    %5115 = vmatpush1.bf16.msra.mxu0 %v4986
    %5116 = vmatprep.subr.bf16.mxu0 %v4989
    %5117 = vmatpush1.bf16.msra.mxu0 %v4988
    %5118 = vmatprep.subr.bf16.mxu0 %v4991
    %5119 = vmatpush1.bf16.msra.mxu0 %v4990
    %5120 = vmatprep.subr.bf16.mxu0 %v4993
    %5121 = vmatpush1.bf16.msra.mxu0 %v4992
    %5122 = vmatprep.subr.bf16.mxu0 %v4995
    %5123 = vmatpush1.bf16.msra.mxu0 %v4994
    %5124 = vmatprep.subr.bf16.mxu0 %v4997
    %5125 = vmatpush1.bf16.msra.mxu0 %v4996
    %5126 = vmatprep.subr.bf16.mxu0 %v4999
    %5127 = vmatpush1.bf16.msra.mxu0 %v4998
    %5128 = vmatprep.subr.bf16.mxu0 %v5001
    %5129 = vmatpush1.bf16.msra.mxu0 %v5000
    %5130 = vmatprep.subr.bf16.mxu0 %v5003
    %5131 = vmatpush1.bf16.msra.mxu0 %v5002
    %5132 = vmatprep.subr.bf16.mxu0 %v5005
    %5133 = vmatpush1.bf16.msra.mxu0 %v5004
    %5134 = vmatprep.mubr.bf16.mxu0 %v4703
    %5135 = vmatmul.mubr.bf16.gmra.mrb[0].mxu0 %v4702
    %v5136 = vpop.f32.mrb[0].mxu0
    %v5137 = vadd.f32 %v4775, %v5136
    %v5138 = vpop.f32.mrb[0].mxu0
    %v5139 = vadd.f32 %v4779, %v5138
    %v5140 = vpop.f32.mrb[0].mxu0
    %v5141 = vpop.f32.mrb[0].mxu0
    %5142 = vdwg.mxu0
    %5143 = vmatprep.subr.bf16.mxu0 %v5007
    %5144 = vmatpush1.bf16.msra.mxu0 %v5006
    %5145 = vmatprep.subr.bf16.mxu0 %v5009
    %5146 = vmatpush1.bf16.msra.mxu0 %v5008
    %5147 = vmatprep.subr.bf16.mxu0 %v5011
    %5148 = vmatpush1.bf16.msra.mxu0 %v5010
    %5149 = vmatprep.subr.bf16.mxu0 %v5013
    %5150 = vmatpush1.bf16.msra.mxu0 %v5012
    %5151 = vmatprep.subr.bf16.mxu0 %v5015
    %5152 = vmatpush1.bf16.msra.mxu0 %v5014
    %5153 = vmatprep.subr.bf16.mxu0 %v5017
    %5154 = vmatpush1.bf16.msra.mxu0 %v5016
    %5155 = vmatprep.subr.bf16.mxu0 %v5019
    %5156 = vmatpush1.bf16.msra.mxu0 %v5018
    %5157 = vmatprep.subr.bf16.mxu0 %v5021
    %5158 = vmatpush1.bf16.msra.mxu0 %v5020
    %5159 = vmatprep.subr.bf16.mxu0 %v5023
    %5160 = vmatpush1.bf16.msra.mxu0 %v5022
    %5161 = vmatprep.subr.bf16.mxu0 %v5025
    %5162 = vmatpush1.bf16.msra.mxu0 %v5024
    %5163 = vmatprep.subr.bf16.mxu0 %v5027
    %5164 = vmatpush1.bf16.msra.mxu0 %v5026
    %5165 = vmatprep.subr.bf16.mxu0 %v5029
    %5166 = vmatpush1.bf16.msra.mxu0 %v5028
    %5167 = vmatprep.subr.bf16.mxu0 %v5031
    %5168 = vmatpush1.bf16.msra.mxu0 %v5030
    %5169 = vmatprep.subr.bf16.mxu0 %v5033
    %5170 = vmatpush1.bf16.msra.mxu0 %v5032
    %5171 = vmatprep.subr.bf16.mxu0 %v5035
    %5172 = vmatpush1.bf16.msra.mxu0 %v5034
    %5173 = vmatprep.subr.bf16.mxu0 %v5037
    %5174 = vmatpush1.bf16.msra.mxu0 %v5036
    %5175 = vmatprep.mubr.bf16.mxu0 %v4705
    %5176 = vmatmul.mubr.bf16.gmra.mrb[0].mxu0 %v4704
    %v5177 = vpop.f32.mrb[0].mxu0
    %v5178 = vadd.f32 %v5137, %v5177
    %v5179 = vpop.f32.mrb[0].mxu0
    %v5180 = vadd.f32 %v5139, %v5179
    %v5181 = vpop.f32.mrb[0].mxu0
    %v5182 = vpop.f32.mrb[0].mxu0
    %5183 = vdwg.mxu0
    %v5184 = vmax.f32 %v5178, 0.0
    %v5185 = vmax.f32 %v5180, 0.0
    %v5186 = vpack.c.bf16 %v5184, %v5184
    %v5187 = vpack.c.bf16 %v5185, %v5185
    %v5188 = vld [vmem:[#allocation10] sm:$0xf]
    %v5189 = vld [vmem:[#allocation10 + $0x4] sm:$0xf]
    %v5190 = vld [vmem:[#allocation10 + $0x8] sm:$0xf]
    %v5191 = vld [vmem:[#allocation10 + $0xc] sm:$0xf]
    %v5192 = vld [vmem:[#allocation10 + $0x10] sm:$0xf]
    %v5193 = vld [vmem:[#allocation10 + $0x14] sm:$0xf]
    %v5194 = vld [vmem:[#allocation10 + $0x18] sm:$0xf]
    %v5195 = vld [vmem:[#allocation10 + $0x1c] sm:$0xf]
    %v5196 = vld [vmem:[#allocation10 + $0x20] sm:$0xf]
    %v5197 = vld [vmem:[#allocation10 + $0x24] sm:$0xf]
    %v5198 = vld [vmem:[#allocation10 + $0x28] sm:$0xf]
    %v5199 = vld [vmem:[#allocation10 + $0x2c] sm:$0xf]
    %v5200 = vld [vmem:[#allocation10 + $0x30] sm:$0xf]
    %v5201 = vld [vmem:[#allocation10 + $0x34] sm:$0xf]
    %v5202 = vld [vmem:[#allocation10 + $0x38] sm:$0xf]
    %v5203 = vld [vmem:[#allocation10 + $0x3c] sm:$0xf]
    %v5204 = vld [vmem:[#allocation10 + $0x40] sm:$0xf]
    %v5205 = vld [vmem:[#allocation10 + $0x44] sm:$0xf]
    %v5206 = vld [vmem:[#allocation10 + $0x48] sm:$0xf]
    %v5207 = vld [vmem:[#allocation10 + $0x4c] sm:$0xf]
    %v5208 = vld [vmem:[#allocation10 + $0x50] sm:$0xf]
    %v5209 = vld [vmem:[#allocation10 + $0x54] sm:$0xf]
    %v5210 = vld [vmem:[#allocation10 + $0x58] sm:$0xf]
    %v5211 = vld [vmem:[#allocation10 + $0x5c] sm:$0xf]
    %v5212 = vld [vmem:[#allocation10 + $0x60] sm:$0xf]
    %v5213 = vld [vmem:[#allocation10 + $0x64] sm:$0xf]
    %v5214 = vld [vmem:[#allocation10 + $0x68] sm:$0xf]
    %v5215 = vld [vmem:[#allocation10 + $0x6c] sm:$0xf]
    %v5216 = vld [vmem:[#allocation10 + $0x70] sm:$0xf]
    %v5217 = vld [vmem:[#allocation10 + $0x74] sm:$0xf]
    %v5218 = vld [vmem:[#allocation10 + $0x78] sm:$0xf]
    %v5219 = vld [vmem:[#allocation10 + $0x7c] sm:$0xf]
    %v5220 = vld [vmem:[%s21] sm:$0x1]
    %v5222 = vlaneseq
    %v5223 = vshrl.u32 %v5222, 7
    %v5224 = vsub.s32 0, %v5223
    %v5225 = vrot.slane %v5220, %v5224
    %v5259 = vunpack.c.l.b16 %v5188
    %v5260 = vunpack.c.l.b16 %v5189
    %v5261 = vunpack.c.l.b16 %v5190
    %v5262 = vunpack.c.l.b16 %v5191
    %v5263 = vunpack.c.l.b16 %v5192
    %v5264 = vunpack.c.l.b16 %v5193
    %v5265 = vunpack.c.l.b16 %v5194
    %v5266 = vunpack.c.l.b16 %v5195
    %v5267 = vunpack.c.l.b16 %v5196
    %v5268 = vunpack.c.l.b16 %v5197
    %v5269 = vunpack.c.l.b16 %v5198
    %v5270 = vunpack.c.l.b16 %v5199
    %v5271 = vunpack.c.l.b16 %v5200
    %v5272 = vunpack.c.l.b16 %v5201
    %v5273 = vunpack.c.l.b16 %v5202
    %v5274 = vunpack.c.l.b16 %v5203
    %v5275 = vunpack.c.l.b16 %v5204
    %v5276 = vunpack.c.l.b16 %v5205
    %v5277 = vunpack.c.l.b16 %v5206
    %v5278 = vunpack.c.l.b16 %v5207
    %v5279 = vunpack.c.l.b16 %v5208
    %v5280 = vunpack.c.l.b16 %v5209
    %v5281 = vunpack.c.l.b16 %v5210
    %v5282 = vunpack.c.l.b16 %v5211
    %v5283 = vunpack.c.l.b16 %v5212
    %v5284 = vunpack.c.l.b16 %v5213
    %v5285 = vunpack.c.l.b16 %v5214
    %v5286 = vunpack.c.l.b16 %v5215
    %v5287 = vunpack.c.l.b16 %v5216
    %v5288 = vunpack.c.l.b16 %v5217
    %v5289 = vunpack.c.l.b16 %v5218
    %v5290 = vunpack.c.l.b16 %v5219
    %v5291 = vpack.c.b16 %v5260, %v5259
    %v5292 = vpack.c.b16 %v5262, %v5261
    %v5293 = vpack.c.b16 %v5264, %v5263
    %v5294 = vpack.c.b16 %v5266, %v5265
    %v5295 = vpack.c.b16 %v5268, %v5267
    %v5296 = vpack.c.b16 %v5270, %v5269
    %v5297 = vpack.c.b16 %v5272, %v5271
    %v5298 = vpack.c.b16 %v5274, %v5273
    %v5299 = vpack.c.b16 %v5276, %v5275
    %v5300 = vpack.c.b16 %v5278, %v5277
    %v5301 = vpack.c.b16 %v5280, %v5279
    %v5302 = vpack.c.b16 %v5282, %v5281
    %v5303 = vpack.c.b16 %v5284, %v5283
    %v5304 = vpack.c.b16 %v5286, %v5285
    %v5305 = vpack.c.b16 %v5288, %v5287
    %v5306 = vpack.c.b16 %v5290, %v5289
    %5323 = vmatprep.subr.bf16.mxu0 0
    %5324 = vmatpush1.bf16.msra.mxu0 %v5291
    %5325 = vmatprep.subr.bf16.mxu0 0
    %5326 = vmatpush1.bf16.msra.mxu0 %v5292
    %5327 = vmatprep.subr.bf16.mxu0 0
    %5328 = vmatpush1.bf16.msra.mxu0 %v5293
    %5329 = vmatprep.subr.bf16.mxu0 0
    %5330 = vmatpush1.bf16.msra.mxu0 %v5294
    %5331 = vmatprep.subr.bf16.mxu0 0
    %5332 = vmatpush1.bf16.msra.mxu0 %v5295
    %5333 = vmatprep.subr.bf16.mxu0 0
    %5334 = vmatpush1.bf16.msra.mxu0 %v5296
    %5335 = vmatprep.subr.bf16.mxu0 0
    %5336 = vmatpush1.bf16.msra.mxu0 %v5297
    %5337 = vmatprep.subr.bf16.mxu0 0
    %5338 = vmatpush1.bf16.msra.mxu0 %v5298
    %5339 = vmatprep.subr.bf16.mxu0 0
    %5340 = vmatpush1.bf16.msra.mxu0 %v5299
    %5341 = vmatprep.subr.bf16.mxu0 0
    %5342 = vmatpush1.bf16.msra.mxu0 %v5300
    %5343 = vmatprep.subr.bf16.mxu0 0
    %5344 = vmatpush1.bf16.msra.mxu0 %v5301
    %5345 = vmatprep.subr.bf16.mxu0 0
    %5346 = vmatpush1.bf16.msra.mxu0 %v5302
    %5347 = vmatprep.subr.bf16.mxu0 0
    %5348 = vmatpush1.bf16.msra.mxu0 %v5303
    %5349 = vmatprep.subr.bf16.mxu0 0
    %5350 = vmatpush1.bf16.msra.mxu0 %v5304
    %5351 = vmatprep.subr.bf16.mxu0 0
    %5352 = vmatpush1.bf16.msra.mxu0 %v5305
    %5353 = vmatprep.subr.bf16.mxu0 0
    %5354 = vmatpush1.bf16.msra.mxu0 %v5306
    %5355 = vmatprep.mubr.bf16.mxu0 %v5187
    %5356 = vmatmul.mubr.bf16.gmra.mrb[0].mxu0 %v5186
    %v5357 = vpop.f32.mrb[0].mxu0
    %v5358 = vadd.f32 %v5225, %v5357
    %v5359 = vpop.f32.mrb[0].mxu0
    %v5360 = vpop.f32.mrb[0].mxu0
    %v5361 = vpop.f32.mrb[0].mxu0
    %5362 = vdwg.mxu0
    %v5363 = vpack.c.bf16 %v5358, %v5358
    %v5366 = vunpack.c.l.s4 1966171168
    %v5367 = vunpack.c.0.s8 %v5366
    %v5368 = vlaneseq
    %v5369 = vshrl.u32 %v5368, 7
    %v5370 = vsub.s32 %v5367, %v5369
    %v5371 = vrot.slane %v5363, %v5370
    %v5372 = vcombine.high %v5371, %v5371
    %v5374 = vunpack.c.l.s4 1966171168
    %v5375 = vunpack.c.0.s8 %v5374
    %v5376 = vlaneseq
    %v5377 = vshrl.u32 %v5376, 7
    %v5378 = vsub.s32 %v5375, %v5377
    %v5379 = vrot.slane %v5371, %v5378
    %v5381 = vunpack.c.l.s4 1966171168
    %v5382 = vunpack.c.0.s8 %v5381
    %v5383 = vlaneseq
    %v5384 = vshrl.u32 %v5383, 7
    %v5385 = vsub.s32 %v5382, %v5384
    %v5386 = vrot.slane %v5372, %v5385
    %v5387 = vcombine.high %v5379, %v5379
    %v5388 = vcombine.high %v5386, %v5386
    %5393 = vst [vmem:[#allocation12] sm:$0x1] %v5379
    %5394 = vst [vmem:[#allocation12 + $0x1] sm:$0x1] %v5386
    %5395 = vst [vmem:[#allocation12 + $0x2] sm:$0x1] %v5387
    %5396 = vst [vmem:[#allocation12 + $0x3] sm:$0x1] %v5388
    // Predicated region
    $region114: #{colbert_head.1} parent=1 // pred_check
      _
    $region115: #{colbert_head.1} parent=1 // pred_check_branch
      %5398 = sbr.rel (0) target = $region117
    $region116: #{colbert_head.1} parent=1 // pred_region
      // Predicated region
      $region118: #{colbert_head.1} parent=116 // pred_check
        _
      $region119: #{colbert_head.1} parent=116 // pred_check_branch
        %5400 = sbr.rel (0) target = $region121
      $region120: #{colbert_head.1} parent=116 // pred_region
        // Predicated region
        $region122: #{colbert_head.1} parent=120 // pred_check
          _
        $region123: #{colbert_head.1} parent=120 // pred_check_branch
          %5402 = sbr.rel target = $region125
        $region124: #{colbert_head.1} parent=120 // pred_region
          // Predicated region
          $region137: #{colbert_head.1} parent=124 // pred_check
            _
          $region138: #{colbert_head.1} parent=124 // pred_check_branch
            %5417 = sbr.rel (0) target = $region140
          $region139: #{colbert_head.1} parent=124 // pred_region
            loop: start=0, step=1, limit=1
            $region141: #{colbert_head.1} parent=139 // loop_pre_header
              _
            $region142: #{colbert_head.1} parent=139 // loop_header
              %s5420 = sphi 0, %s5424
              %p5421 = scmp.ge.s32.totalorder %s5420, 1
              %s5425 = sphi [#allocation12], [#allocation12]
              %s5426 = sphi %s22, %s22
            $region143: #{colbert_head.1} parent=139 // loop_header_branch
              %5423 = sbr.rel (%p5421) target = $region147
            $region144: #{colbert_head.1} parent=139 // loop_body
              %v5427 = vld [vmem:[%s5425] sm:$0x1]
              %5428 = vst [vmem:[%s5426] sm:$0x1] %v5427
            $region145: #{colbert_head.1} parent=139 // loop_footer
              %s5424 = sadd.s32 1, %s5420
            $region146: #{colbert_head.1} parent=139 // loop_footer_branch
              %5419 = sbr.rel target = $region142
            $region147: #{colbert_head.1} parent=139 // loop_exit
              _
          $region140: #{colbert_head.1} parent=124 // pred_fallthru
            _
        $region125: #{colbert_head.1} parent=120 // pred_fallthru
          _
        // Predicated region
        $region126: #{colbert_head.1} parent=120 // pred_check
          _
        $region127: #{colbert_head.1} parent=120 // pred_check_branch
          %5404 = sbr.rel (0) target = $region129
        $region128: #{colbert_head.1} parent=120 // pred_region
          loop: start=0, step=1, limit=1
          $region130: #{colbert_head.1} parent=128 // loop_pre_header
            _
          $region131: #{colbert_head.1} parent=128 // loop_header
            %s5407 = sphi 0, %s5411
            %p5408 = scmp.ge.s32.totalorder %s5407, 1
            %s5412 = sphi [#allocation12], [#allocation12]
            %s5413 = sphi %s22, %s22
          $region132: #{colbert_head.1} parent=128 // loop_header_branch
            %5410 = sbr.rel (%p5408) target = $region136
          $region133: #{colbert_head.1} parent=128 // loop_body
            %v5414 = vld [vmem:[%s5412] sm:$0x1]
            %5415 = vst [vmem:[%s5413] sm:$0x1] %v5414
          $region134: #{colbert_head.1} parent=128 // loop_footer
            %s5411 = sadd.s32 1, %s5407
          $region135: #{colbert_head.1} parent=128 // loop_footer_branch
            %5406 = sbr.rel target = $region131
          $region136: #{colbert_head.1} parent=128 // loop_exit
            _
        $region129: #{colbert_head.1} parent=120 // pred_fallthru
          _
      $region121: #{colbert_head.1} parent=116 // pred_fallthru
        _
      %5429 = vnop
    $region117: #{colbert_head.1} parent=1 // pred_fallthru
      _
    // Predicated region
    $region148: #{colbert_head.1} parent=1 // pred_check
      _
    $region149: #{colbert_head.1} parent=1 // pred_check_branch
      %5431 = sbr.rel (0) target = $region151
    $region150: #{colbert_head.1} parent=1 // pred_region
      _
    $region151: #{colbert_head.1} parent=1 // pred_fallthru
      _
    %5432 = vsyncpa [#allocation3], 1
    %5433 = vsyncpa [#allocation5], 1
    %5434 = vsyncpa [#allocation8], 1
    %5435 = vsyncpa [#allocation11], 1

</llo_original>
